<compile_context>
chip_gen: v7x
topology: tpu7x:2x2x1
jax: 0.10.0
libtpu: 0.0.40
codegen_flags: <defaults>
</compile_context>

<pallas_src>
import functools
import numpy as np
import jax
import jax.numpy as jnp
from jax.experimental import pallas as pl
from jax.experimental.pallas import tpu as pltpu

_LN_EPS = 1e-5  # PyTorch nn.LayerNorm default


def _layer_norm(x, gamma, beta):
    mean = jnp.mean(x, axis=-1, keepdims=True)
    var = jnp.mean(jnp.square(x - mean), axis=-1, keepdims=True)
    return (x - mean) * jax.lax.rsqrt(var + _LN_EPS) * gamma + beta


def _mha(q_in, k_in, v_in, wq, bq, wk, bk, wv, bv, fcw, fcb, lng, lnb,
         attn_ref, *, n_head, d_k, d_v, compute_dtype):
    """Multi-head attention for one batch element, heads batched on the MXU.

    q_in: (Lq, D) f32; k_in / v_in: (Lk, D) f32.
    wq/wk/wv: (H, D, d_k|d_v) compute_dtype; bq/bk/bv: (H, 1, d_k|d_v) f32.
    fcw: (H, d_v, D) compute_dtype; fcb/lng/lnb: (1, D) f32.
    Writes softmax probs (H, Lq, Lk) f32 into attn_ref and returns the (Lq, D)
    f32 output (residual + LayerNorm applied, as in the PyTorch reference).
    """
    residual = q_in
    Lq, D = q_in.shape
    Lk = k_in.shape[0]
    cdt = compute_dtype

    # Broadcast the shared activations to a leading head dim once so every
    # contraction below is a plain leading-batch-dim matmul (no lane splitting).
    q_b = jnp.broadcast_to(q_in.astype(cdt), (n_head, Lq, D))
    k_b = q_b if k_in is q_in else jnp.broadcast_to(k_in.astype(cdt), (n_head, Lk, D))
    if v_in is k_in:
        v_b = k_b
    elif v_in is q_in:
        v_b = q_b
    else:
        v_b = jnp.broadcast_to(v_in.astype(cdt), (n_head, Lk, D))

    q = jnp.einsum('hld,hdk->hlk', q_b, wq,
                   preferred_element_type=jnp.float32) + bq    # (H, Lq, d_k) f32
    k = jnp.einsum('hld,hdk->hlk', k_b, wk,
                   preferred_element_type=jnp.float32) + bk    # (H, Lk, d_k) f32
    v = jnp.einsum('hld,hdk->hlk', v_b, wv,
                   preferred_element_type=jnp.float32) + bv    # (H, Lk, d_v) f32

    scale = 1.0 / float(np.sqrt(d_k))
    s = jnp.einsum('hqd,hkd->hqk', q.astype(cdt), k.astype(cdt),
                   preferred_element_type=jnp.float32) * scale  # (H, Lq, Lk) f32
    # TODO(synk): apply the attention mask here (masked_fill with -inf) when wired.
    s = s - jnp.max(s, axis=-1, keepdims=True)
    e = jnp.exp(s)
    denom = jnp.sum(e, axis=-1, keepdims=True)
    # approx=True routes the reciprocal to the EUP (nearly free) at ~1e-3 accuracy.
    attn = e * pl.reciprocal(denom, approx=False)               # f32 probs
    attn_ref[...] = attn

    ctx = jnp.einsum('hqk,hkd->hqd', attn.astype(cdt), v.astype(cdt),
                     preferred_element_type=jnp.float32)        # (H, Lq, d_v)
    # concat_h(ctx_h) @ fcw == sum_h (ctx_h @ fcw_h): batched matmul + head-sum,
    # so no in-kernel concatenation / relayout is needed.
    out = jnp.einsum('hqv,hvd->hqd', ctx.astype(cdt), fcw,
                     preferred_element_type=jnp.float32)        # (H, Lq, D)
    out = jnp.sum(out, axis=0) + fcb                            # (Lq, D)
    return _layer_norm(out + residual, lng, lnb)


def _decoder_layer_kernel(
    enc_ref, dec_ref,
    sa_wq, sa_bq, sa_wk, sa_bk, sa_wv, sa_bv, sa_fcw, sa_fcb, sa_lng, sa_lnb,
    ca_wq, ca_bq, ca_wk, ca_bk, ca_wv, ca_bv, ca_fcw, ca_fcb, ca_lng, ca_lnb,
    ff_w1, ff_b1, ff_w2, ff_b2, ff_lng, ff_lnb,
    out_ref, self_attn_ref, cross_attn_ref,
    *, n_head, d_k, d_v, compute_dtype):
    dec = dec_ref[...]      # (Lq, D) f32
    enc = enc_ref[...]      # (Lk, D) f32
    cdt = compute_dtype

    # Self attention: q = k = v = decoder_input.
    x = _mha(dec, dec, dec,
             sa_wq[...], sa_bq[...], sa_wk[...], sa_bk[...],
             sa_wv[...], sa_bv[...], sa_fcw[...], sa_fcb[...],
             sa_lng[...], sa_lnb[...], self_attn_ref,
             n_head=n_head, d_k=d_k, d_v=d_v, compute_dtype=cdt)

    # Encoder-decoder attention: q = self-attn output, k = v = encoder output.
    y = _mha(x, enc, enc,
             ca_wq[...], ca_bq[...], ca_wk[...], ca_bk[...],
             ca_wv[...], ca_bv[...], ca_fcw[...], ca_fcb[...],
             ca_lng[...], ca_lnb[...], cross_attn_ref,
             n_head=n_head, d_k=d_k, d_v=d_v, compute_dtype=cdt)

    # Position-wise FFN (Conv1d kernel_size=1 == per-position linear) + res + LN.
    hdn = jnp.maximum(
        jnp.dot(y.astype(cdt), ff_w1[...],
                preferred_element_type=jnp.float32) + ff_b1[...], 0.0)
    z = jnp.dot(hdn.astype(cdt), ff_w2[...],
                preferred_element_type=jnp.float32) + ff_b2[...]
    out_ref[...] = _layer_norm(z + y, ff_lng[...], ff_lnb[...])


def _split_head_weight(w, n_head):
    # (D, H*d) -> (H, D, d): one-time wrapper-side layout prep so the kernel
    # never has to split the lane axis.
    d_in, hd = w.shape
    return jnp.transpose(w.reshape(d_in, n_head, hd // n_head), (1, 0, 2))


def _split_head_bias(b, n_head):
    # (1, H*d) -> (H, 1, d)
    hd = b.shape[-1]
    return b.reshape(n_head, hd // n_head)[:, None, :]


def _prep_attn_params(p, n_head, compute_dtype):
    d_model = p["fcw"].shape[-1]
    return [
        _split_head_weight(p["wq"], n_head).astype(compute_dtype),
        _split_head_bias(p["bq"], n_head),
        _split_head_weight(p["wk"], n_head).astype(compute_dtype),
        _split_head_bias(p["bk"], n_head),
        _split_head_weight(p["wv"], n_head).astype(compute_dtype),
        _split_head_bias(p["bv"], n_head),
        p["fcw"].reshape(n_head, -1, d_model).astype(compute_dtype),  # (H, d_v, D)
        p["fcb"], p["lng"], p["lnb"],
    ]


def decoder_layer(encoder_output, decoder_input, params, *, n_head, d_k, d_v,
                  compute_dtype=jnp.float32):
    B, Lq, D = decoder_input.shape
    Lk = encoder_output.shape[1]
    ffn = params["ffn"]
    d_inner = ffn["w1"].shape[-1]

    weight_arrays = (
        _prep_attn_params(params["self"], n_head, compute_dtype)
        + _prep_attn_params(params["cross"], n_head, compute_dtype)
        + [ffn["w1"].astype(compute_dtype), ffn["b1"],
           ffn["w2"].astype(compute_dtype), ffn["b2"],
           ffn["lng"], ffn["lnb"]]
    )

    # Weights use a constant index_map so the same block is revisited across
    # grid steps (no re-DMA between consecutive steps).
    def _full_spec(a):
        nd = a.ndim
        return pl.BlockSpec(a.shape, lambda b, _nd=nd: (0,) * _nd)

    in_specs = (
        [pl.BlockSpec((None, Lk, D), lambda b: (b, 0, 0)),   # encoder_output
         pl.BlockSpec((None, Lq, D), lambda b: (b, 0, 0))]   # decoder_input
        + [_full_spec(a) for a in weight_arrays]
    )

    # Attention probs are emitted head-major so the PyTorch (n_head*B, Lq, Lk)
    # layout is a free contiguous reshape (no XLA transpose / HBM round trip).
    out_shape = (
        jax.ShapeDtypeStruct((B, Lq, D), jnp.float32),
        jax.ShapeDtypeStruct((n_head, B, Lq, Lq), jnp.float32),
        jax.ShapeDtypeStruct((n_head, B, Lq, Lk), jnp.float32),
    )
    out_specs = (
        pl.BlockSpec((None, Lq, D), lambda b: (b, 0, 0)),
        pl.BlockSpec((n_head, None, Lq, Lq), lambda b: (0, b, 0, 0)),
        pl.BlockSpec((n_head, None, Lq, Lk), lambda b: (0, b, 0, 0)),
    )

    kernel = functools.partial(_decoder_layer_kernel, n_head=n_head, d_k=d_k,
                               d_v=d_v, compute_dtype=compute_dtype)

    # Advisory cost estimate for XLA's scheduler.
    def _attn_flops(lq, lk):
        return (2 * lq * D * n_head * d_k + 2 * lk * D * n_head * d_k
                + 2 * lk * D * n_head * d_v
                + 2 * n_head * lq * lk * d_k + 2 * n_head * lq * lk * d_v
                + 2 * lq * n_head * d_v * D)
    flops = B * (_attn_flops(Lq, Lq) + _attn_flops(Lq, Lk) + 4 * Lq * D * d_inner)
    transcendentals = B * n_head * (Lq * Lq + Lq * Lk)
    bytes_accessed = int(
        sum(a.size * a.dtype.itemsize for a in weight_arrays)
        + encoder_output.size * 4 + decoder_input.size * 4
        + (B * Lq * D + n_head * B * Lq * Lq + n_head * B * Lq * Lk) * 4)

    out, self_attn, cross_attn = pl.pallas_call(
        kernel,
        grid=(B,),
        in_specs=in_specs,
        out_specs=out_specs,
        out_shape=out_shape,
        compiler_params=pltpu.CompilerParams(
            # Batch iterations are independent -> shard across TCs on v7x.
            dimension_semantics=("parallel",)),
        cost_estimate=pl.CostEstimate(
            flops=int(flops), transcendentals=int(transcendentals),
            bytes_accessed=bytes_accessed),
    )(encoder_output, decoder_input, *weight_arrays)

    # Head-major (n_head, B, ...) -> (n_head*B, ...) is a contiguous reshape.
    self_attn = self_attn.reshape(n_head * B, Lq, Lq)
    cross_attn = cross_attn.reshape(n_head * B, Lq, Lk)
    return out, self_attn, cross_attn


def decoder_layer_reference(encoder_output, decoder_input, params,
                            *, n_head, d_k, d_v):
    """Pure-JAX reference mirroring the PyTorch DecoderLayer (eval mode)."""
    def mha(q_in, k_in, v_in, p):
        B, Lq, _ = q_in.shape
        Lk = k_in.shape[1]
        q = (q_in @ p["wq"] + p["bq"]).reshape(B, Lq, n_head, d_k)
        k = (k_in @ p["wk"] + p["bk"]).reshape(B, Lk, n_head, d_k)
        v = (v_in @ p["wv"] + p["bv"]).reshape(B, Lk, n_head, d_v)
        s = jnp.einsum('bqhd,bkhd->bhqk', q, k) / np.sqrt(d_k)
        attn = jax.nn.softmax(s, axis=-1)                    # (B, H, Lq, Lk)
        ctx = jnp.einsum('bhqk,bkhd->bqhd', attn, v).reshape(B, Lq, n_head * d_v)
        out = _layer_norm(ctx @ p["fcw"] + p["fcb"] + q_in, p["lng"], p["lnb"])
        attn_hm = jnp.transpose(attn, (1, 0, 2, 3)).reshape(n_head * B, Lq, Lk)
        return out, attn_hm

    x, self_attn = mha(decoder_input, decoder_input, decoder_input, params["self"])
    y, cross_attn = mha(x, encoder_output, encoder_output, params["cross"])
    pf = params["ffn"]
    h = jnp.maximum(y @ pf["w1"] + pf["b1"], 0.0)
    z = h @ pf["w2"] + pf["b2"]
    out = _layer_norm(z + y, pf["lng"], pf["lnb"])
    return out, self_attn, cross_attn


def init_params(key, d_model, d_inner, n_head, d_k, d_v):
    ks = iter(jax.random.split(key, 32))

    def nrm(shape, std):
        return std * jax.random.normal(next(ks), shape, jnp.float32)

    def attn_params():
        return dict(
            wq=nrm((d_model, n_head * d_k), (2.0 / (d_model + d_k)) ** 0.5),
            bq=nrm((1, n_head * d_k), 0.02),
            wk=nrm((d_model, n_head * d_k), (2.0 / (d_model + d_k)) ** 0.5),
            bk=nrm((1, n_head * d_k), 0.02),
            wv=nrm((d_model, n_head * d_v), (2.0 / (d_model + d_v)) ** 0.5),
            bv=nrm((1, n_head * d_v), 0.02),
            fcw=nrm((n_head * d_v, d_model), (2.0 / (n_head * d_v + d_model)) ** 0.5),
            fcb=nrm((1, d_model), 0.02),
            lng=jnp.ones((1, d_model), jnp.float32),
            lnb=jnp.zeros((1, d_model), jnp.float32),
        )

    return dict(
        self=attn_params(),
        cross=attn_params(),
        ffn=dict(
            w1=nrm((d_model, d_inner), (2.0 / (d_model + d_inner)) ** 0.5),
            b1=nrm((1, d_inner), 0.02),
            w2=nrm((d_inner, d_model), (2.0 / (d_inner + d_model)) ** 0.5),
            b2=nrm((1, d_model), 0.02),
            lng=jnp.ones((1, d_model), jnp.float32),
            lnb=jnp.zeros((1, d_model), jnp.float32),
        ),
    )


if __name__ == "__main__":
    B, L_dec, L_enc = 2, 8, 8
    d_model, d_inner, n_head, d_k, d_v = 32, 64, 2, 16, 16

    key = jax.random.PRNGKey(0)
    k_enc, k_dec, k_par = jax.random.split(key, 3)
    encoder_output = jax.random.normal(k_enc, (B, L_enc, d_model), jnp.float32)
    decoder_input = jax.random.normal(k_dec, (B, L_dec, d_model), jnp.float32)
    params = init_params(k_par, d_model, d_inner, n_head, d_k, d_v)

    # f32 path: tolerance-checked against a pure-JAX reference.
    out, self_attn, cross_attn = decoder_layer(
        encoder_output, decoder_input, params,
        n_head=n_head, d_k=d_k, d_v=d_v, compute_dtype=jnp.float32)
    jax.block_until_ready((out, self_attn, cross_attn))

    assert out.shape == (B, L_dec, d_model)
    assert self_attn.shape == (n_head * B, L_dec, L_dec)
    assert cross_attn.shape == (n_head * B, L_dec, L_enc)

    ref_out, ref_sa, ref_ca = decoder_layer_reference(
        encoder_output, decoder_input, params, n_head=n_head, d_k=d_k, d_v=d_v)
    for got, want, name in ((out, ref_out, "out"),
                            (self_attn, ref_sa, "self_attn"),
                            (cross_attn, ref_ca, "cross_attn")):
        err = float(jnp.max(jnp.abs(got - want)))
        assert err < 5e-2, f"{name} mismatch vs reference: max abs err {err}"

    # bf16 MXU path (perf config): check it runs and stays finite.
    out_bf, sa_bf, ca_bf = decoder_layer(
        encoder_output, decoder_input, params,
        n_head=n_head, d_k=d_k, d_v=d_v, compute_dtype=jnp.bfloat16)
    jax.block_until_ready((out_bf, sa_bf, ca_bf))
    assert bool(jnp.all(jnp.isfinite(out_bf)))

    print("KERNEL_OK")
</pallas_src>

<mosaic_0001>
module attributes {stable_mosaic.version = 11 : i64} {
  func.func @_decoder_layer_kernel(%arg0: i32, %arg1: memref<1x8x32xf32, #tpu.memory_space<vmem>>, %arg2: memref<1x8x32xf32, #tpu.memory_space<vmem>>, %arg3: memref<2x32x16xf32, #tpu.memory_space<vmem>>, %arg4: memref<2x1x16xf32, #tpu.memory_space<vmem>>, %arg5: memref<2x32x16xf32, #tpu.memory_space<vmem>>, %arg6: memref<2x1x16xf32, #tpu.memory_space<vmem>>, %arg7: memref<2x32x16xf32, #tpu.memory_space<vmem>>, %arg8: memref<2x1x16xf32, #tpu.memory_space<vmem>>, %arg9: memref<2x16x32xf32, #tpu.memory_space<vmem>>, %arg10: memref<1x32xf32, #tpu.memory_space<vmem>>, %arg11: memref<1x32xf32, #tpu.memory_space<vmem>>, %arg12: memref<1x32xf32, #tpu.memory_space<vmem>>, %arg13: memref<2x32x16xf32, #tpu.memory_space<vmem>>, %arg14: memref<2x1x16xf32, #tpu.memory_space<vmem>>, %arg15: memref<2x32x16xf32, #tpu.memory_space<vmem>>, %arg16: memref<2x1x16xf32, #tpu.memory_space<vmem>>, %arg17: memref<2x32x16xf32, #tpu.memory_space<vmem>>, %arg18: memref<2x1x16xf32, #tpu.memory_space<vmem>>, %arg19: memref<2x16x32xf32, #tpu.memory_space<vmem>>, %arg20: memref<1x32xf32, #tpu.memory_space<vmem>>, %arg21: memref<1x32xf32, #tpu.memory_space<vmem>>, %arg22: memref<1x32xf32, #tpu.memory_space<vmem>>, %arg23: memref<32x64xf32, #tpu.memory_space<vmem>>, %arg24: memref<1x64xf32, #tpu.memory_space<vmem>>, %arg25: memref<64x32xf32, #tpu.memory_space<vmem>>, %arg26: memref<1x32xf32, #tpu.memory_space<vmem>>, %arg27: memref<1x32xf32, #tpu.memory_space<vmem>>, %arg28: memref<1x32xf32, #tpu.memory_space<vmem>>, %arg29: memref<1x8x32xf32, #tpu.memory_space<vmem>>, %arg30: memref<2x1x8x8xf32, #tpu.memory_space<vmem>>, %arg31: memref<2x1x8x8xf32, #tpu.memory_space<vmem>>) attributes {dimension_semantics = [#tpu.dimension_semantics<parallel>], iteration_bounds = array<i64: 2>, scalar_prefetch = 0 : i64, scratch_operands = 0 : i64, tpu.core_type = #tpu.core_type<tc>, window_params = [{transform_indices = @transform_0, window_bounds = array<i64: 1, 8, 32>}, {transform_indices = @transform_1, window_bounds = array<i64: 1, 8, 32>}, {pipeline_mode = #tpu.pipeline_mode<synchronous>, transform_indices = @transform_2, window_bounds = array<i64: 2, 32, 16>}, {pipeline_mode = #tpu.pipeline_mode<synchronous>, transform_indices = @transform_3, window_bounds = array<i64: 2, 1, 16>}, {pipeline_mode = #tpu.pipeline_mode<synchronous>, transform_indices = @transform_4, window_bounds = array<i64: 2, 32, 16>}, {pipeline_mode = #tpu.pipeline_mode<synchronous>, transform_indices = @transform_5, window_bounds = array<i64: 2, 1, 16>}, {pipeline_mode = #tpu.pipeline_mode<synchronous>, transform_indices = @transform_6, window_bounds = array<i64: 2, 32, 16>}, {pipeline_mode = #tpu.pipeline_mode<synchronous>, transform_indices = @transform_7, window_bounds = array<i64: 2, 1, 16>}, {pipeline_mode = #tpu.pipeline_mode<synchronous>, transform_indices = @transform_8, window_bounds = array<i64: 2, 16, 32>}, {pipeline_mode = #tpu.pipeline_mode<synchronous>, transform_indices = @transform_9, window_bounds = array<i64: 1, 32>}, {pipeline_mode = #tpu.pipeline_mode<synchronous>, transform_indices = @transform_10, window_bounds = array<i64: 1, 32>}, {pipeline_mode = #tpu.pipeline_mode<synchronous>, transform_indices = @transform_11, window_bounds = array<i64: 1, 32>}, {pipeline_mode = #tpu.pipeline_mode<synchronous>, transform_indices = @transform_12, window_bounds = array<i64: 2, 32, 16>}, {pipeline_mode = #tpu.pipeline_mode<synchronous>, transform_indices = @transform_13, window_bounds = array<i64: 2, 1, 16>}, {pipeline_mode = #tpu.pipeline_mode<synchronous>, transform_indices = @transform_14, window_bounds = array<i64: 2, 32, 16>}, {pipeline_mode = #tpu.pipeline_mode<synchronous>, transform_indices = @transform_15, window_bounds = array<i64: 2, 1, 16>}, {pipeline_mode = #tpu.pipeline_mode<synchronous>, transform_indices = @transform_16, window_bounds = array<i64: 2, 32, 16>}, {pipeline_mode = #tpu.pipeline_mode<synchronous>, transform_indices = @transform_17, window_bounds = array<i64: 2, 1, 16>}, {pipeline_mode = #tpu.pipeline_mode<synchronous>, transform_indices = @transform_18, window_bounds = array<i64: 2, 16, 32>}, {pipeline_mode = #tpu.pipeline_mode<synchronous>, transform_indices = @transform_19, window_bounds = array<i64: 1, 32>}, {pipeline_mode = #tpu.pipeline_mode<synchronous>, transform_indices = @transform_20, window_bounds = array<i64: 1, 32>}, {pipeline_mode = #tpu.pipeline_mode<synchronous>, transform_indices = @transform_21, window_bounds = array<i64: 1, 32>}, {pipeline_mode = #tpu.pipeline_mode<synchronous>, transform_indices = @transform_22, window_bounds = array<i64: 32, 64>}, {pipeline_mode = #tpu.pipeline_mode<synchronous>, transform_indices = @transform_23, window_bounds = array<i64: 1, 64>}, {pipeline_mode = #tpu.pipeline_mode<synchronous>, transform_indices = @transform_24, window_bounds = array<i64: 64, 32>}, {pipeline_mode = #tpu.pipeline_mode<synchronous>, transform_indices = @transform_25, window_bounds = array<i64: 1, 32>}, {pipeline_mode = #tpu.pipeline_mode<synchronous>, transform_indices = @transform_26, window_bounds = array<i64: 1, 32>}, {pipeline_mode = #tpu.pipeline_mode<synchronous>, transform_indices = @transform_27, window_bounds = array<i64: 1, 32>}, {transform_indices = @transform_28, window_bounds = array<i64: 1, 8, 32>}, {transform_indices = @transform_29, window_bounds = array<i64: 2, 1, 8, 8>}, {transform_indices = @transform_30, window_bounds = array<i64: 2, 1, 8, 8>}]} {
    %c0 = arith.constant 0 : index
    %c0_0 = arith.constant 0 : index
    %c0_1 = arith.constant 0 : index
    %0 = vector.load %arg2[%c0, %c0_0, %c0_1] : memref<1x8x32xf32, #tpu.memory_space<vmem>>, vector<1x8x32xf32>
    %1 = vector.shape_cast %0 : vector<1x8x32xf32> to vector<8x32xf32>
    %c0_2 = arith.constant 0 : index
    %c0_3 = arith.constant 0 : index
    %c0_4 = arith.constant 0 : index
    %2 = vector.load %arg1[%c0_2, %c0_3, %c0_4] : memref<1x8x32xf32, #tpu.memory_space<vmem>>, vector<1x8x32xf32>
    %3 = vector.shape_cast %2 : vector<1x8x32xf32> to vector<8x32xf32>
    %c0_5 = arith.constant 0 : index
    %c0_6 = arith.constant 0 : index
    %c0_7 = arith.constant 0 : index
    %4 = vector.load %arg3[%c0_5, %c0_6, %c0_7] : memref<2x32x16xf32, #tpu.memory_space<vmem>>, vector<2x32x16xf32>
    %c0_8 = arith.constant 0 : index
    %c0_9 = arith.constant 0 : index
    %c0_10 = arith.constant 0 : index
    %5 = vector.load %arg4[%c0_8, %c0_9, %c0_10] : memref<2x1x16xf32, #tpu.memory_space<vmem>>, vector<2x1x16xf32>
    %c0_11 = arith.constant 0 : index
    %c0_12 = arith.constant 0 : index
    %c0_13 = arith.constant 0 : index
    %6 = vector.load %arg5[%c0_11, %c0_12, %c0_13] : memref<2x32x16xf32, #tpu.memory_space<vmem>>, vector<2x32x16xf32>
    %c0_14 = arith.constant 0 : index
    %c0_15 = arith.constant 0 : index
    %c0_16 = arith.constant 0 : index
    %7 = vector.load %arg6[%c0_14, %c0_15, %c0_16] : memref<2x1x16xf32, #tpu.memory_space<vmem>>, vector<2x1x16xf32>
    %c0_17 = arith.constant 0 : index
    %c0_18 = arith.constant 0 : index
    %c0_19 = arith.constant 0 : index
    %8 = vector.load %arg7[%c0_17, %c0_18, %c0_19] : memref<2x32x16xf32, #tpu.memory_space<vmem>>, vector<2x32x16xf32>
    %c0_20 = arith.constant 0 : index
    %c0_21 = arith.constant 0 : index
    %c0_22 = arith.constant 0 : index
    %9 = vector.load %arg8[%c0_20, %c0_21, %c0_22] : memref<2x1x16xf32, #tpu.memory_space<vmem>>, vector<2x1x16xf32>
    %c0_23 = arith.constant 0 : index
    %c0_24 = arith.constant 0 : index
    %c0_25 = arith.constant 0 : index
    %10 = vector.load %arg9[%c0_23, %c0_24, %c0_25] : memref<2x16x32xf32, #tpu.memory_space<vmem>>, vector<2x16x32xf32>
    %c0_26 = arith.constant 0 : index
    %c0_27 = arith.constant 0 : index
    %11 = vector.load %arg10[%c0_26, %c0_27] : memref<1x32xf32, #tpu.memory_space<vmem>>, vector<1x32xf32>
    %c0_28 = arith.constant 0 : index
    %c0_29 = arith.constant 0 : index
    %12 = vector.load %arg11[%c0_28, %c0_29] : memref<1x32xf32, #tpu.memory_space<vmem>>, vector<1x32xf32>
    %c0_30 = arith.constant 0 : index
    %c0_31 = arith.constant 0 : index
    %13 = vector.load %arg12[%c0_30, %c0_31] : memref<1x32xf32, #tpu.memory_space<vmem>>, vector<1x32xf32>
    %14 = vector.shape_cast %1 : vector<8x32xf32> to vector<1x8x32xf32>
    %15 = vector.broadcast %14 : vector<1x8x32xf32> to vector<2x8x32xf32>
    "tpu.trace_start"() <{level = 10 : i32, message = "hld,hdk->hlk"}> : () -> ()
    %cst = arith.constant dense<0.000000e+00> : vector<2x8x16xf32>
    %16 = tpu.matmul %15, %4, %cst {dimension_numbers = #tpu.dot_dimension_numbers<[2], [1], [1], [2], [0, 0, 0, 1, 1, 2], [0], [0]>} : vector<2x8x32xf32>, vector<2x32x16xf32>, vector<2x8x16xf32> -> vector<2x8x16xf32>
    "tpu.trace_stop"() : () -> ()
    %17 = vector.broadcast %5 : vector<2x1x16xf32> to vector<2x8x16xf32>
    %18 = arith.addf %16, %17 : vector<2x8x16xf32>
    "tpu.trace_start"() <{level = 10 : i32, message = "hld,hdk->hlk"}> : () -> ()
    %cst_32 = arith.constant dense<0.000000e+00> : vector<2x8x16xf32>
    %19 = tpu.matmul %15, %6, %cst_32 {dimension_numbers = #tpu.dot_dimension_numbers<[2], [1], [1], [2], [0, 0, 0, 1, 1, 2], [0], [0]>} : vector<2x8x32xf32>, vector<2x32x16xf32>, vector<2x8x16xf32> -> vector<2x8x16xf32>
    "tpu.trace_stop"() : () -> ()
    %20 = vector.broadcast %7 : vector<2x1x16xf32> to vector<2x8x16xf32>
    %21 = arith.addf %19, %20 : vector<2x8x16xf32>
    "tpu.trace_start"() <{level = 10 : i32, message = "hld,hdk->hlk"}> : () -> ()
    %cst_33 = arith.constant dense<0.000000e+00> : vector<2x8x16xf32>
    %22 = tpu.matmul %15, %8, %cst_33 {dimension_numbers = #tpu.dot_dimension_numbers<[2], [1], [1], [2], [0, 0, 0, 1, 1, 2], [0], [0]>} : vector<2x8x32xf32>, vector<2x32x16xf32>, vector<2x8x16xf32> -> vector<2x8x16xf32>
    "tpu.trace_stop"() : () -> ()
    %23 = vector.broadcast %9 : vector<2x1x16xf32> to vector<2x8x16xf32>
    %24 = arith.addf %22, %23 : vector<2x8x16xf32>
    "tpu.trace_start"() <{level = 10 : i32, message = "hqd,hkd->hqk"}> : () -> ()
    %cst_34 = arith.constant dense<0.000000e+00> : vector<2x8x8xf32>
    %25 = tpu.matmul %18, %21, %cst_34 {dimension_numbers = #tpu.dot_dimension_numbers<[2], [2], [1], [1], [0, 0, 0, 1, 1, 1], [0], [0]>} : vector<2x8x16xf32>, vector<2x8x16xf32>, vector<2x8x8xf32> -> vector<2x8x8xf32>
    "tpu.trace_stop"() : () -> ()
    %cst_35 = arith.constant 2.500000e-01 : f32
    %26 = vector.broadcast %cst_35 : f32 to vector<2x8x8xf32>
    %27 = arith.mulf %25, %26 : vector<2x8x8xf32>
    %cst_36 = arith.constant dense<0xFF800000> : vector<2x8xf32>
    %28 = vector.multi_reduction <maximumf>, %27, %cst_36 [2] : vector<2x8x8xf32> to vector<2x8xf32>
    %29 = vector.shape_cast %28 : vector<2x8xf32> to vector<2x8x1xf32>
    %30 = vector.broadcast %29 : vector<2x8x1xf32> to vector<2x8x8xf32>
    %31 = arith.subf %27, %30 : vector<2x8x8xf32>
    %32 = math.exp %31 : vector<2x8x8xf32>
    %cst_37 = arith.constant dense<0.000000e+00> : vector<2x8xf32>
    %33 = vector.multi_reduction <add>, %32, %cst_37 [2] : vector<2x8x8xf32> to vector<2x8xf32>
    %34 = vector.shape_cast %33 : vector<2x8xf32> to vector<2x8x1xf32>
    %35 = tpu.reciprocal %34 : vector<2x8x1xf32> -> vector<2x8x1xf32>
    %36 = vector.broadcast %35 : vector<2x8x1xf32> to vector<2x8x8xf32>
    %37 = arith.mulf %32, %36 : vector<2x8x8xf32>
    %c0_38 = arith.constant 0 : index
    %c0_39 = arith.constant 0 : index
    %c0_40 = arith.constant 0 : index
    %c0_41 = arith.constant 0 : index
    %38 = vector.load %arg30[%c0_38, %c0_39, %c0_40, %c0_41] : memref<2x1x8x8xf32, #tpu.memory_space<vmem>>, vector<2x1x8x8xf32>
    %39 = vector.shape_cast %38 : vector<2x1x8x8xf32> to vector<2x8x8xf32>
    %40 = vector.shape_cast %37 : vector<2x8x8xf32> to vector<2x1x8x8xf32>
    tpu.vector_store %arg30[%c0_38, %c0_39, %c0_40, %c0_41], %40 {strides = array<i32>} : memref<2x1x8x8xf32, #tpu.memory_space<vmem>>, vector<2x1x8x8xf32>,
    "tpu.trace_start"() <{level = 10 : i32, message = "hqk,hkd->hqd"}> : () -> ()
    %cst_42 = arith.constant dense<0.000000e+00> : vector<2x8x16xf32>
    %41 = tpu.matmul %37, %24, %cst_42 {dimension_numbers = #tpu.dot_dimension_numbers<[2], [1], [1], [2], [0, 0, 0, 1, 1, 2], [0], [0]>} : vector<2x8x8xf32>, vector<2x8x16xf32>, vector<2x8x16xf32> -> vector<2x8x16xf32>
    "tpu.trace_stop"() : () -> ()
    "tpu.trace_start"() <{level = 10 : i32, message = "hqv,hvd->hqd"}> : () -> ()
    %cst_43 = arith.constant dense<0.000000e+00> : vector<2x8x32xf32>
    %42 = tpu.matmul %41, %10, %cst_43 {dimension_numbers = #tpu.dot_dimension_numbers<[2], [1], [1], [2], [0, 0, 0, 1, 1, 2], [0], [0]>} : vector<2x8x16xf32>, vector<2x16x32xf32>, vector<2x8x32xf32> -> vector<2x8x32xf32>
    "tpu.trace_stop"() : () -> ()
    %cst_44 = arith.constant dense<0.000000e+00> : vector<8x32xf32>
    %43 = vector.multi_reduction <add>, %42, %cst_44 [0] : vector<2x8x32xf32> to vector<8x32xf32>
    %44 = vector.broadcast %11 : vector<1x32xf32> to vector<8x32xf32>
    %45 = arith.addf %43, %44 : vector<8x32xf32>
    %46 = arith.addf %45, %1 : vector<8x32xf32>
    %cst_45 = arith.constant dense<0.000000e+00> : vector<8xf32>
    %47 = vector.multi_reduction <add>, %46, %cst_45 [1] : vector<8x32xf32> to vector<8xf32>
    %48 = vector.shape_cast %47 : vector<8xf32> to vector<8x1xf32>
    %cst_46 = arith.constant 3.200000e+01 : f32
    %49 = vector.broadcast %cst_46 : f32 to vector<8x1xf32>
    %50 = arith.divf %48, %49 : vector<8x1xf32>
    %51 = vector.broadcast %50 : vector<8x1xf32> to vector<8x32xf32>
    %52 = arith.subf %46, %51 : vector<8x32xf32>
    %53 = arith.mulf %52, %52 : vector<8x32xf32>
    %cst_47 = arith.constant dense<0.000000e+00> : vector<8xf32>
    %54 = vector.multi_reduction <add>, %53, %cst_47 [1] : vector<8x32xf32> to vector<8xf32>
    %55 = vector.shape_cast %54 : vector<8xf32> to vector<8x1xf32>
    %cst_48 = arith.constant 3.200000e+01 : f32
    %56 = vector.broadcast %cst_48 : f32 to vector<8x1xf32>
    %57 = arith.divf %55, %56 : vector<8x1xf32>
    %58 = vector.broadcast %50 : vector<8x1xf32> to vector<8x32xf32>
    %59 = arith.subf %46, %58 : vector<8x32xf32>
    %cst_49 = arith.constant 9.99999974E-6 : f32
    %60 = vector.broadcast %cst_49 : f32 to vector<8x1xf32>
    %61 = arith.addf %57, %60 : vector<8x1xf32>
    %62 = math.rsqrt %61 : vector<8x1xf32>
    %63 = vector.broadcast %62 : vector<8x1xf32> to vector<8x32xf32>
    %64 = arith.mulf %59, %63 : vector<8x32xf32>
    %65 = vector.broadcast %12 : vector<1x32xf32> to vector<8x32xf32>
    %66 = arith.mulf %64, %65 : vector<8x32xf32>
    %67 = vector.broadcast %13 : vector<1x32xf32> to vector<8x32xf32>
    %68 = arith.addf %66, %67 : vector<8x32xf32>
    %c0_50 = arith.constant 0 : index
    %c0_51 = arith.constant 0 : index
    %c0_52 = arith.constant 0 : index
    %69 = vector.load %arg13[%c0_50, %c0_51, %c0_52] : memref<2x32x16xf32, #tpu.memory_space<vmem>>, vector<2x32x16xf32>
    %c0_53 = arith.constant 0 : index
    %c0_54 = arith.constant 0 : index
    %c0_55 = arith.constant 0 : index
    %70 = vector.load %arg14[%c0_53, %c0_54, %c0_55] : memref<2x1x16xf32, #tpu.memory_space<vmem>>, vector<2x1x16xf32>
    %c0_56 = arith.constant 0 : index
    %c0_57 = arith.constant 0 : index
    %c0_58 = arith.constant 0 : index
    %71 = vector.load %arg15[%c0_56, %c0_57, %c0_58] : memref<2x32x16xf32, #tpu.memory_space<vmem>>, vector<2x32x16xf32>
    %c0_59 = arith.constant 0 : index
    %c0_60 = arith.constant 0 : index
    %c0_61 = arith.constant 0 : index
    %72 = vector.load %arg16[%c0_59, %c0_60, %c0_61] : memref<2x1x16xf32, #tpu.memory_space<vmem>>, vector<2x1x16xf32>
    %c0_62 = arith.constant 0 : index
    %c0_63 = arith.constant 0 : index
    %c0_64 = arith.constant 0 : index
    %73 = vector.load %arg17[%c0_62, %c0_63, %c0_64] : memref<2x32x16xf32, #tpu.memory_space<vmem>>, vector<2x32x16xf32>
    %c0_65 = arith.constant 0 : index
    %c0_66 = arith.constant 0 : index
    %c0_67 = arith.constant 0 : index
    %74 = vector.load %arg18[%c0_65, %c0_66, %c0_67] : memref<2x1x16xf32, #tpu.memory_space<vmem>>, vector<2x1x16xf32>
    %c0_68 = arith.constant 0 : index
    %c0_69 = arith.constant 0 : index
    %c0_70 = arith.constant 0 : index
    %75 = vector.load %arg19[%c0_68, %c0_69, %c0_70] : memref<2x16x32xf32, #tpu.memory_space<vmem>>, vector<2x16x32xf32>
    %c0_71 = arith.constant 0 : index
    %c0_72 = arith.constant 0 : index
    %76 = vector.load %arg20[%c0_71, %c0_72] : memref<1x32xf32, #tpu.memory_space<vmem>>, vector<1x32xf32>
    %c0_73 = arith.constant 0 : index
    %c0_74 = arith.constant 0 : index
    %77 = vector.load %arg21[%c0_73, %c0_74] : memref<1x32xf32, #tpu.memory_space<vmem>>, vector<1x32xf32>
    %c0_75 = arith.constant 0 : index
    %c0_76 = arith.constant 0 : index
    %78 = vector.load %arg22[%c0_75, %c0_76] : memref<1x32xf32, #tpu.memory_space<vmem>>, vector<1x32xf32>
    %79 = vector.shape_cast %68 : vector<8x32xf32> to vector<1x8x32xf32>
    %80 = vector.broadcast %79 : vector<1x8x32xf32> to vector<2x8x32xf32>
    %81 = vector.shape_cast %3 : vector<8x32xf32> to vector<1x8x32xf32>
    %82 = vector.broadcast %81 : vector<1x8x32xf32> to vector<2x8x32xf32>
    "tpu.trace_start"() <{level = 10 : i32, message = "hld,hdk->hlk"}> : () -> ()
    %cst_77 = arith.constant dense<0.000000e+00> : vector<2x8x16xf32>
    %83 = tpu.matmul %80, %69, %cst_77 {dimension_numbers = #tpu.dot_dimension_numbers<[2], [1], [1], [2], [0, 0, 0, 1, 1, 2], [0], [0]>} : vector<2x8x32xf32>, vector<2x32x16xf32>, vector<2x8x16xf32> -> vector<2x8x16xf32>
    "tpu.trace_stop"() : () -> ()
    %84 = vector.broadcast %70 : vector<2x1x16xf32> to vector<2x8x16xf32>
    %85 = arith.addf %83, %84 : vector<2x8x16xf32>
    "tpu.trace_start"() <{level = 10 : i32, message = "hld,hdk->hlk"}> : () -> ()
    %cst_78 = arith.constant dense<0.000000e+00> : vector<2x8x16xf32>
    %86 = tpu.matmul %82, %71, %cst_78 {dimension_numbers = #tpu.dot_dimension_numbers<[2], [1], [1], [2], [0, 0, 0, 1, 1, 2], [0], [0]>} : vector<2x8x32xf32>, vector<2x32x16xf32>, vector<2x8x16xf32> -> vector<2x8x16xf32>
    "tpu.trace_stop"() : () -> ()
    %87 = vector.broadcast %72 : vector<2x1x16xf32> to vector<2x8x16xf32>
    %88 = arith.addf %86, %87 : vector<2x8x16xf32>
    "tpu.trace_start"() <{level = 10 : i32, message = "hld,hdk->hlk"}> : () -> ()
    %cst_79 = arith.constant dense<0.000000e+00> : vector<2x8x16xf32>
    %89 = tpu.matmul %82, %73, %cst_79 {dimension_numbers = #tpu.dot_dimension_numbers<[2], [1], [1], [2], [0, 0, 0, 1, 1, 2], [0], [0]>} : vector<2x8x32xf32>, vector<2x32x16xf32>, vector<2x8x16xf32> -> vector<2x8x16xf32>
    "tpu.trace_stop"() : () -> ()
    %90 = vector.broadcast %74 : vector<2x1x16xf32> to vector<2x8x16xf32>
    %91 = arith.addf %89, %90 : vector<2x8x16xf32>
    "tpu.trace_start"() <{level = 10 : i32, message = "hqd,hkd->hqk"}> : () -> ()
    %cst_80 = arith.constant dense<0.000000e+00> : vector<2x8x8xf32>
    %92 = tpu.matmul %85, %88, %cst_80 {dimension_numbers = #tpu.dot_dimension_numbers<[2], [2], [1], [1], [0, 0, 0, 1, 1, 1], [0], [0]>} : vector<2x8x16xf32>, vector<2x8x16xf32>, vector<2x8x8xf32> -> vector<2x8x8xf32>
    "tpu.trace_stop"() : () -> ()
    %cst_81 = arith.constant 2.500000e-01 : f32
    %93 = vector.broadcast %cst_81 : f32 to vector<2x8x8xf32>
    %94 = arith.mulf %92, %93 : vector<2x8x8xf32>
    %cst_82 = arith.constant dense<0xFF800000> : vector<2x8xf32>
    %95 = vector.multi_reduction <maximumf>, %94, %cst_82 [2] : vector<2x8x8xf32> to vector<2x8xf32>
    %96 = vector.shape_cast %95 : vector<2x8xf32> to vector<2x8x1xf32>
    %97 = vector.broadcast %96 : vector<2x8x1xf32> to vector<2x8x8xf32>
    %98 = arith.subf %94, %97 : vector<2x8x8xf32>
    %99 = math.exp %98 : vector<2x8x8xf32>
    %cst_83 = arith.constant dense<0.000000e+00> : vector<2x8xf32>
    %100 = vector.multi_reduction <add>, %99, %cst_83 [2] : vector<2x8x8xf32> to vector<2x8xf32>
    %101 = vector.shape_cast %100 : vector<2x8xf32> to vector<2x8x1xf32>
    %102 = tpu.reciprocal %101 : vector<2x8x1xf32> -> vector<2x8x1xf32>
    %103 = vector.broadcast %102 : vector<2x8x1xf32> to vector<2x8x8xf32>
    %104 = arith.mulf %99, %103 : vector<2x8x8xf32>
    %c0_84 = arith.constant 0 : index
    %c0_85 = arith.constant 0 : index
    %c0_86 = arith.constant 0 : index
    %c0_87 = arith.constant 0 : index
    %105 = vector.load %arg31[%c0_84, %c0_85, %c0_86, %c0_87] : memref<2x1x8x8xf32, #tpu.memory_space<vmem>>, vector<2x1x8x8xf32>
    %106 = vector.shape_cast %105 : vector<2x1x8x8xf32> to vector<2x8x8xf32>
    %107 = vector.shape_cast %104 : vector<2x8x8xf32> to vector<2x1x8x8xf32>
    tpu.vector_store %arg31[%c0_84, %c0_85, %c0_86, %c0_87], %107 {strides = array<i32>} : memref<2x1x8x8xf32, #tpu.memory_space<vmem>>, vector<2x1x8x8xf32>,
    "tpu.trace_start"() <{level = 10 : i32, message = "hqk,hkd->hqd"}> : () -> ()
    %cst_88 = arith.constant dense<0.000000e+00> : vector<2x8x16xf32>
    %108 = tpu.matmul %104, %91, %cst_88 {dimension_numbers = #tpu.dot_dimension_numbers<[2], [1], [1], [2], [0, 0, 0, 1, 1, 2], [0], [0]>} : vector<2x8x8xf32>, vector<2x8x16xf32>, vector<2x8x16xf32> -> vector<2x8x16xf32>
    "tpu.trace_stop"() : () -> ()
    "tpu.trace_start"() <{level = 10 : i32, message = "hqv,hvd->hqd"}> : () -> ()
    %cst_89 = arith.constant dense<0.000000e+00> : vector<2x8x32xf32>
    %109 = tpu.matmul %108, %75, %cst_89 {dimension_numbers = #tpu.dot_dimension_numbers<[2], [1], [1], [2], [0, 0, 0, 1, 1, 2], [0], [0]>} : vector<2x8x16xf32>, vector<2x16x32xf32>, vector<2x8x32xf32> -> vector<2x8x32xf32>
    "tpu.trace_stop"() : () -> ()
    %cst_90 = arith.constant dense<0.000000e+00> : vector<8x32xf32>
    %110 = vector.multi_reduction <add>, %109, %cst_90 [0] : vector<2x8x32xf32> to vector<8x32xf32>
    %111 = vector.broadcast %76 : vector<1x32xf32> to vector<8x32xf32>
    %112 = arith.addf %110, %111 : vector<8x32xf32>
    %113 = arith.addf %112, %68 : vector<8x32xf32>
    %cst_91 = arith.constant dense<0.000000e+00> : vector<8xf32>
    %114 = vector.multi_reduction <add>, %113, %cst_91 [1] : vector<8x32xf32> to vector<8xf32>
    %115 = vector.shape_cast %114 : vector<8xf32> to vector<8x1xf32>
    %cst_92 = arith.constant 3.200000e+01 : f32
    %116 = vector.broadcast %cst_92 : f32 to vector<8x1xf32>
    %117 = arith.divf %115, %116 : vector<8x1xf32>
    %118 = vector.broadcast %117 : vector<8x1xf32> to vector<8x32xf32>
    %119 = arith.subf %113, %118 : vector<8x32xf32>
    %120 = arith.mulf %119, %119 : vector<8x32xf32>
    %cst_93 = arith.constant dense<0.000000e+00> : vector<8xf32>
    %121 = vector.multi_reduction <add>, %120, %cst_93 [1] : vector<8x32xf32> to vector<8xf32>
    %122 = vector.shape_cast %121 : vector<8xf32> to vector<8x1xf32>
    %cst_94 = arith.constant 3.200000e+01 : f32
    %123 = vector.broadcast %cst_94 : f32 to vector<8x1xf32>
    %124 = arith.divf %122, %123 : vector<8x1xf32>
    %125 = vector.broadcast %117 : vector<8x1xf32> to vector<8x32xf32>
    %126 = arith.subf %113, %125 : vector<8x32xf32>
    %cst_95 = arith.constant 9.99999974E-6 : f32
    %127 = vector.broadcast %cst_95 : f32 to vector<8x1xf32>
    %128 = arith.addf %124, %127 : vector<8x1xf32>
    %129 = math.rsqrt %128 : vector<8x1xf32>
    %130 = vector.broadcast %129 : vector<8x1xf32> to vector<8x32xf32>
    %131 = arith.mulf %126, %130 : vector<8x32xf32>
    %132 = vector.broadcast %77 : vector<1x32xf32> to vector<8x32xf32>
    %133 = arith.mulf %131, %132 : vector<8x32xf32>
    %134 = vector.broadcast %78 : vector<1x32xf32> to vector<8x32xf32>
    %135 = arith.addf %133, %134 : vector<8x32xf32>
    %c0_96 = arith.constant 0 : index
    %c0_97 = arith.constant 0 : index
    %136 = vector.load %arg23[%c0_96, %c0_97] : memref<32x64xf32, #tpu.memory_space<vmem>>, vector<32x64xf32>
    %cst_98 = arith.constant dense<0.000000e+00> : vector<8x64xf32>
    %137 = tpu.matmul %135, %136, %cst_98 {dimension_numbers = #tpu.dot_dimension_numbers<[1], [0], [0], [1], [0, 0, 1, 1], [], []>} : vector<8x32xf32>, vector<32x64xf32>, vector<8x64xf32> -> vector<8x64xf32>
    %c0_99 = arith.constant 0 : index
    %c0_100 = arith.constant 0 : index
    %138 = vector.load %arg24[%c0_99, %c0_100] : memref<1x64xf32, #tpu.memory_space<vmem>>, vector<1x64xf32>
    %139 = vector.broadcast %138 : vector<1x64xf32> to vector<8x64xf32>
    %140 = arith.addf %137, %139 : vector<8x64xf32>
    %cst_101 = arith.constant 0.000000e+00 : f32
    %141 = vector.broadcast %cst_101 : f32 to vector<8x64xf32>
    %142 = arith.maximumf %140, %141 : vector<8x64xf32>
    %c0_102 = arith.constant 0 : index
    %c0_103 = arith.constant 0 : index
    %143 = vector.load %arg25[%c0_102, %c0_103] : memref<64x32xf32, #tpu.memory_space<vmem>>, vector<64x32xf32>
    %cst_104 = arith.constant dense<0.000000e+00> : vector<8x32xf32>
    %144 = tpu.matmul %142, %143, %cst_104 {dimension_numbers = #tpu.dot_dimension_numbers<[1], [0], [0], [1], [0, 0, 1, 1], [], []>} : vector<8x64xf32>, vector<64x32xf32>, vector<8x32xf32> -> vector<8x32xf32>
    %c0_105 = arith.constant 0 : index
    %c0_106 = arith.constant 0 : index
    %145 = vector.load %arg26[%c0_105, %c0_106] : memref<1x32xf32, #tpu.memory_space<vmem>>, vector<1x32xf32>
    %146 = vector.broadcast %145 : vector<1x32xf32> to vector<8x32xf32>
    %147 = arith.addf %144, %146 : vector<8x32xf32>
    %148 = arith.addf %147, %135 : vector<8x32xf32>
    %c0_107 = arith.constant 0 : index
    %c0_108 = arith.constant 0 : index
    %149 = vector.load %arg27[%c0_107, %c0_108] : memref<1x32xf32, #tpu.memory_space<vmem>>, vector<1x32xf32>
    %c0_109 = arith.constant 0 : index
    %c0_110 = arith.constant 0 : index
    %150 = vector.load %arg28[%c0_109, %c0_110] : memref<1x32xf32, #tpu.memory_space<vmem>>, vector<1x32xf32>
    %cst_111 = arith.constant dense<0.000000e+00> : vector<8xf32>
    %151 = vector.multi_reduction <add>, %148, %cst_111 [1] : vector<8x32xf32> to vector<8xf32>
    %152 = vector.shape_cast %151 : vector<8xf32> to vector<8x1xf32>
    %cst_112 = arith.constant 3.200000e+01 : f32
    %153 = vector.broadcast %cst_112 : f32 to vector<8x1xf32>
    %154 = arith.divf %152, %153 : vector<8x1xf32>
    %155 = vector.broadcast %154 : vector<8x1xf32> to vector<8x32xf32>
    %156 = arith.subf %148, %155 : vector<8x32xf32>
    %157 = arith.mulf %156, %156 : vector<8x32xf32>
    %cst_113 = arith.constant dense<0.000000e+00> : vector<8xf32>
    %158 = vector.multi_reduction <add>, %157, %cst_113 [1] : vector<8x32xf32> to vector<8xf32>
    %159 = vector.shape_cast %158 : vector<8xf32> to vector<8x1xf32>
    %cst_114 = arith.constant 3.200000e+01 : f32
    %160 = vector.broadcast %cst_114 : f32 to vector<8x1xf32>
    %161 = arith.divf %159, %160 : vector<8x1xf32>
    %162 = vector.broadcast %154 : vector<8x1xf32> to vector<8x32xf32>
    %163 = arith.subf %148, %162 : vector<8x32xf32>
    %cst_115 = arith.constant 9.99999974E-6 : f32
    %164 = vector.broadcast %cst_115 : f32 to vector<8x1xf32>
    %165 = arith.addf %161, %164 : vector<8x1xf32>
    %166 = math.rsqrt %165 : vector<8x1xf32>
    %167 = vector.broadcast %166 : vector<8x1xf32> to vector<8x32xf32>
    %168 = arith.mulf %163, %167 : vector<8x32xf32>
    %169 = vector.broadcast %149 : vector<1x32xf32> to vector<8x32xf32>
    %170 = arith.mulf %168, %169 : vector<8x32xf32>
    %171 = vector.broadcast %150 : vector<1x32xf32> to vector<8x32xf32>
    %172 = arith.addf %170, %171 : vector<8x32xf32>
    %c0_116 = arith.constant 0 : index
    %c0_117 = arith.constant 0 : index
    %c0_118 = arith.constant 0 : index
    %173 = vector.load %arg29[%c0_116, %c0_117, %c0_118] : memref<1x8x32xf32, #tpu.memory_space<vmem>>, vector<1x8x32xf32>
    %174 = vector.shape_cast %173 : vector<1x8x32xf32> to vector<8x32xf32>
    %175 = vector.shape_cast %172 : vector<8x32xf32> to vector<1x8x32xf32>
    tpu.vector_store %arg29[%c0_116, %c0_117, %c0_118], %175 {strides = array<i32>} : memref<1x8x32xf32, #tpu.memory_space<vmem>>, vector<1x8x32xf32>,
    return
  }
  func.func @transform_0(%arg0: i32) -> (i32, i32, i32) {
    %c0_i32 = arith.constant 0 : i32
    %c0_i32_0 = arith.constant 0 : i32
    %c0_i32_1 = arith.constant 0 : i32
    return %arg0, %c0_i32, %c0_i32_0 : i32, i32, i32
  }
  func.func @transform_1(%arg0: i32) -> (i32, i32, i32) {
    %c0_i32 = arith.constant 0 : i32
    %c0_i32_0 = arith.constant 0 : i32
    %c0_i32_1 = arith.constant 0 : i32
    return %arg0, %c0_i32, %c0_i32_0 : i32, i32, i32
  }
  func.func @transform_2(%arg0: i32) -> (i32, i32, i32) {
    %c0_i32 = arith.constant 0 : i32
    %c0_i32_0 = arith.constant 0 : i32
    %c0_i32_1 = arith.constant 0 : i32
    %c0_i32_2 = arith.constant 0 : i32
    return %c0_i32, %c0_i32_0, %c0_i32_1 : i32, i32, i32
  }
  func.func @transform_3(%arg0: i32) -> (i32, i32, i32) {
    %c0_i32 = arith.constant 0 : i32
    %c0_i32_0 = arith.constant 0 : i32
    %c0_i32_1 = arith.constant 0 : i32
    %c0_i32_2 = arith.constant 0 : i32
    return %c0_i32, %c0_i32_0, %c0_i32_1 : i32, i32, i32
  }
  func.func @transform_4(%arg0: i32) -> (i32, i32, i32) {
    %c0_i32 = arith.constant 0 : i32
    %c0_i32_0 = arith.constant 0 : i32
    %c0_i32_1 = arith.constant 0 : i32
    %c0_i32_2 = arith.constant 0 : i32
    return %c0_i32, %c0_i32_0, %c0_i32_1 : i32, i32, i32
  }
  func.func @transform_5(%arg0: i32) -> (i32, i32, i32) {
    %c0_i32 = arith.constant 0 : i32
    %c0_i32_0 = arith.constant 0 : i32
    %c0_i32_1 = arith.constant 0 : i32
    %c0_i32_2 = arith.constant 0 : i32
    return %c0_i32, %c0_i32_0, %c0_i32_1 : i32, i32, i32
  }
  func.func @transform_6(%arg0: i32) -> (i32, i32, i32) {
    %c0_i32 = arith.constant 0 : i32
    %c0_i32_0 = arith.constant 0 : i32
    %c0_i32_1 = arith.constant 0 : i32
    %c0_i32_2 = arith.constant 0 : i32
    return %c0_i32, %c0_i32_0, %c0_i32_1 : i32, i32, i32
  }
  func.func @transform_7(%arg0: i32) -> (i32, i32, i32) {
    %c0_i32 = arith.constant 0 : i32
    %c0_i32_0 = arith.constant 0 : i32
    %c0_i32_1 = arith.constant 0 : i32
    %c0_i32_2 = arith.constant 0 : i32
    return %c0_i32, %c0_i32_0, %c0_i32_1 : i32, i32, i32
  }
  func.func @transform_8(%arg0: i32) -> (i32, i32, i32) {
    %c0_i32 = arith.constant 0 : i32
    %c0_i32_0 = arith.constant 0 : i32
    %c0_i32_1 = arith.constant 0 : i32
    %c0_i32_2 = arith.constant 0 : i32
    return %c0_i32, %c0_i32_0, %c0_i32_1 : i32, i32, i32
  }
  func.func @transform_9(%arg0: i32) -> (i32, i32) {
    %c0_i32 = arith.constant 0 : i32
    %c0_i32_0 = arith.constant 0 : i32
    %c0_i32_1 = arith.constant 0 : i32
    return %c0_i32, %c0_i32_0 : i32, i32
  }
  func.func @transform_10(%arg0: i32) -> (i32, i32) {
    %c0_i32 = arith.constant 0 : i32
    %c0_i32_0 = arith.constant 0 : i32
    %c0_i32_1 = arith.constant 0 : i32
    return %c0_i32, %c0_i32_0 : i32, i32
  }
  func.func @transform_11(%arg0: i32) -> (i32, i32) {
    %c0_i32 = arith.constant 0 : i32
    %c0_i32_0 = arith.constant 0 : i32
    %c0_i32_1 = arith.constant 0 : i32
    return %c0_i32, %c0_i32_0 : i32, i32
  }
  func.func @transform_12(%arg0: i32) -> (i32, i32, i32) {
    %c0_i32 = arith.constant 0 : i32
    %c0_i32_0 = arith.constant 0 : i32
    %c0_i32_1 = arith.constant 0 : i32
    %c0_i32_2 = arith.constant 0 : i32
    return %c0_i32, %c0_i32_0, %c0_i32_1 : i32, i32, i32
  }
  func.func @transform_13(%arg0: i32) -> (i32, i32, i32) {
    %c0_i32 = arith.constant 0 : i32
    %c0_i32_0 = arith.constant 0 : i32
    %c0_i32_1 = arith.constant 0 : i32
    %c0_i32_2 = arith.constant 0 : i32
    return %c0_i32, %c0_i32_0, %c0_i32_1 : i32, i32, i32
  }
  func.func @transform_14(%arg0: i32) -> (i32, i32, i32) {
    %c0_i32 = arith.constant 0 : i32
    %c0_i32_0 = arith.constant 0 : i32
    %c0_i32_1 = arith.constant 0 : i32
    %c0_i32_2 = arith.constant 0 : i32
    return %c0_i32, %c0_i32_0, %c0_i32_1 : i32, i32, i32
  }
  func.func @transform_15(%arg0: i32) -> (i32, i32, i32) {
    %c0_i32 = arith.constant 0 : i32
    %c0_i32_0 = arith.constant 0 : i32
    %c0_i32_1 = arith.constant 0 : i32
    %c0_i32_2 = arith.constant 0 : i32
    return %c0_i32, %c0_i32_0, %c0_i32_1 : i32, i32, i32
  }
  func.func @transform_16(%arg0: i32) -> (i32, i32, i32) {
    %c0_i32 = arith.constant 0 : i32
    %c0_i32_0 = arith.constant 0 : i32
    %c0_i32_1 = arith.constant 0 : i32
    %c0_i32_2 = arith.constant 0 : i32
    return %c0_i32, %c0_i32_0, %c0_i32_1 : i32, i32, i32
  }
  func.func @transform_17(%arg0: i32) -> (i32, i32, i32) {
    %c0_i32 = arith.constant 0 : i32
    %c0_i32_0 = arith.constant 0 : i32
    %c0_i32_1 = arith.constant 0 : i32
    %c0_i32_2 = arith.constant 0 : i32
    return %c0_i32, %c0_i32_0, %c0_i32_1 : i32, i32, i32
  }
  func.func @transform_18(%arg0: i32) -> (i32, i32, i32) {
    %c0_i32 = arith.constant 0 : i32
    %c0_i32_0 = arith.constant 0 : i32
    %c0_i32_1 = arith.constant 0 : i32
    %c0_i32_2 = arith.constant 0 : i32
    return %c0_i32, %c0_i32_0, %c0_i32_1 : i32, i32, i32
  }
  func.func @transform_19(%arg0: i32) -> (i32, i32) {
    %c0_i32 = arith.constant 0 : i32
    %c0_i32_0 = arith.constant 0 : i32
    %c0_i32_1 = arith.constant 0 : i32
    return %c0_i32, %c0_i32_0 : i32, i32
  }
  func.func @transform_20(%arg0: i32) -> (i32, i32) {
    %c0_i32 = arith.constant 0 : i32
    %c0_i32_0 = arith.constant 0 : i32
    %c0_i32_1 = arith.constant 0 : i32
    return %c0_i32, %c0_i32_0 : i32, i32
  }
  func.func @transform_21(%arg0: i32) -> (i32, i32) {
    %c0_i32 = arith.constant 0 : i32
    %c0_i32_0 = arith.constant 0 : i32
    %c0_i32_1 = arith.constant 0 : i32
    return %c0_i32, %c0_i32_0 : i32, i32
  }
  func.func @transform_22(%arg0: i32) -> (i32, i32) {
    %c0_i32 = arith.constant 0 : i32
    %c0_i32_0 = arith.constant 0 : i32
    %c0_i32_1 = arith.constant 0 : i32
    return %c0_i32, %c0_i32_0 : i32, i32
  }
  func.func @transform_23(%arg0: i32) -> (i32, i32) {
    %c0_i32 = arith.constant 0 : i32
    %c0_i32_0 = arith.constant 0 : i32
    %c0_i32_1 = arith.constant 0 : i32
    return %c0_i32, %c0_i32_0 : i32, i32
  }
  func.func @transform_24(%arg0: i32) -> (i32, i32) {
    %c0_i32 = arith.constant 0 : i32
    %c0_i32_0 = arith.constant 0 : i32
    %c0_i32_1 = arith.constant 0 : i32
    return %c0_i32, %c0_i32_0 : i32, i32
  }
  func.func @transform_25(%arg0: i32) -> (i32, i32) {
    %c0_i32 = arith.constant 0 : i32
    %c0_i32_0 = arith.constant 0 : i32
    %c0_i32_1 = arith.constant 0 : i32
    return %c0_i32, %c0_i32_0 : i32, i32
  }
  func.func @transform_26(%arg0: i32) -> (i32, i32) {
    %c0_i32 = arith.constant 0 : i32
    %c0_i32_0 = arith.constant 0 : i32
    %c0_i32_1 = arith.constant 0 : i32
    return %c0_i32, %c0_i32_0 : i32, i32
  }
  func.func @transform_27(%arg0: i32) -> (i32, i32) {
    %c0_i32 = arith.constant 0 : i32
    %c0_i32_0 = arith.constant 0 : i32
    %c0_i32_1 = arith.constant 0 : i32
    return %c0_i32, %c0_i32_0 : i32, i32
  }
  func.func @transform_28(%arg0: i32) -> (i32, i32, i32) {
    %c0_i32 = arith.constant 0 : i32
    %c0_i32_0 = arith.constant 0 : i32
    %c0_i32_1 = arith.constant 0 : i32
    return %arg0, %c0_i32, %c0_i32_0 : i32, i32, i32
  }
  func.func @transform_29(%arg0: i32) -> (i32, i32, i32, i32) {
    %c0_i32 = arith.constant 0 : i32
    %c0_i32_0 = arith.constant 0 : i32
    %c0_i32_1 = arith.constant 0 : i32
    %c0_i32_2 = arith.constant 0 : i32
    return %c0_i32, %arg0, %c0_i32_0, %c0_i32_1 : i32, i32, i32, i32
  }
  func.func @transform_30(%arg0: i32) -> (i32, i32, i32, i32) {
    %c0_i32 = arith.constant 0 : i32
    %c0_i32_0 = arith.constant 0 : i32
    %c0_i32_1 = arith.constant 0 : i32
    %c0_i32_2 = arith.constant 0 : i32
    return %c0_i32, %arg0, %c0_i32_0, %c0_i32_1 : i32, i32, i32, i32
  }
}

</mosaic_0001>

<llo_original>
// kernel: tpu_custom_call.1
$region0: #{tpu_custom_call.1}
  #allocation0 [shape = 'u32[]', space=smem, size = 0x4, offset = 0x4, fixed_abs, tag = 'smem constant byte address 0x4 - core index']
  #allocation1 [shape = 'u32[144,128]{1,0:T(1,128)}', space=vmem, size = 0x12000, scoped, tag = 'internal scratch']
  %s0 = inlined_call_operand.smem [shape: u32[31], index: -1, kind: input, shape index: {}]
  %s1 = sld [smem:[%s0]]
  %s2 = scalar_lea.smem %s0, 1
  %s3 = sld [smem:[%s2]]
  %s4 = scalar_lea.smem %s0, 2
  %s5 = sld [smem:[%s4]]
  %s6 = scalar_lea.smem %s0, 3
  %s7 = sld [smem:[%s6]]
  %s8 = scalar_lea.smem %s0, 4
  %s9 = sld [smem:[%s8]]
  %s10 = scalar_lea.smem %s0, 5
  %s11 = sld [smem:[%s10]]
  %s12 = scalar_lea.smem %s0, 6
  %s13 = sld [smem:[%s12]]
  %s14 = scalar_lea.smem %s0, 7
  %s15 = sld [smem:[%s14]]
  %s16 = scalar_lea.smem %s0, 8
  %s17 = sld [smem:[%s16]]
  %s18 = scalar_lea.smem %s0, 9
  %s19 = sld [smem:[%s18]]
  %s20 = scalar_lea.smem %s0, 10
  %s21 = sld [smem:[%s20]]
  %s22 = scalar_lea.smem %s0, 11
  %s23 = sld [smem:[%s22]]
  %s24 = scalar_lea.smem %s0, 12
  %s25 = sld [smem:[%s24]]
  %s26 = scalar_lea.smem %s0, 13
  %s27 = sld [smem:[%s26]]
  %s28 = scalar_lea.smem %s0, 14
  %s29 = sld [smem:[%s28]]
  %s30 = scalar_lea.smem %s0, 15
  %s31 = sld [smem:[%s30]]
  %s32 = scalar_lea.smem %s0, 16
  %s33 = sld [smem:[%s32]]
  %s34 = scalar_lea.smem %s0, 17
  %s35 = sld [smem:[%s34]]
  %s36 = scalar_lea.smem %s0, 18
  %s37 = sld [smem:[%s36]]
  %s38 = scalar_lea.smem %s0, 19
  %s39 = sld [smem:[%s38]]
  %s40 = scalar_lea.smem %s0, 20
  %s41 = sld [smem:[%s40]]
  %s42 = scalar_lea.smem %s0, 21
  %s43 = sld [smem:[%s42]]
  %s44 = scalar_lea.smem %s0, 22
  %s45 = sld [smem:[%s44]]
  %s46 = scalar_lea.smem %s0, 23
  %s47 = sld [smem:[%s46]]
  %s48 = scalar_lea.smem %s0, 24
  %s49 = sld [smem:[%s48]]
  %s50 = scalar_lea.smem %s0, 25
  %s51 = sld [smem:[%s50]]
  %s52 = scalar_lea.smem %s0, 26
  %s53 = sld [smem:[%s52]]
  %s54 = scalar_lea.smem %s0, 27
  %s55 = sld [smem:[%s54]]
  %s56 = scalar_lea.smem %s0, 28
  %s57 = sld [smem:[%s56]]
  %s58 = scalar_lea.smem %s0, 29
  %s59 = sld [smem:[%s58]]
  %s60 = scalar_lea.smem %s0, 30
  %s61 = sld [smem:[%s60]]
  %62 = xla_tuple %s57, %s59, %s61
  %s63 = sld [smem:[#allocation0]]
  $region161: #{tpu_custom_call.1} parent=0
    _
  %s65 = ssub.s32 1, %s63
  %s66 = scalar_select 0, %s65, %s63
  $region1: #{tpu_custom_call.1} parent=0
    #allocation2 [shape = 'u8[8192]{0}', space=vmem, size = 0x2000, scoped, tag = 'output window, operand 0']
    #allocation3 [shape = 's32[2]{0}', space=sflag, size = 0x8, scoped, tag = 'scoped memory for tpu_custom_call.1']
    #allocation4 [shape = 'u8[16384]{0}', space=vmem, size = 0x4000, scoped, tag = 'output window, operand 1']
    #allocation5 [shape = 's32[2]{0}', space=sflag, size = 0x8, scoped, tag = 'scoped memory for tpu_custom_call.1']
    #allocation6 [shape = 'u8[16384]{0}', space=vmem, size = 0x4000, scoped, tag = 'output window, operand 2']
    %67 = vsyncpa [#allocation3], 0
    %s68 = scalar_lea.sflag [#allocation3], 1
    %69 = vsyncpa %s68, 0
    %70 = vsyncpa [#allocation5], 0
    %s71 = scalar_lea.sflag [#allocation5], 1
    %72 = vsyncpa %s71, 0
    loop: start=0, step=1, limit=4
    $region2: #{tpu_custom_call.1} parent=1 // loop_pre_header
      _
    $region3: #{tpu_custom_call.1} parent=1 // loop_header
      %s74 = sphi 0, %s78
      %p75 = scmp.ge.s32.totalorder %s74, 4
      %s84 = sphi 0, %s86
      %s87 = sphi 0, %s84
      %s88 = sphi 0, %s87
      %s104 = sphi 0, %s88
      %s110 = sphi 0, %s112
      %s113 = sphi 0, %s110
      %s114 = sphi 0, %s113
      %s130 = sphi 0, %s114
      %s134 = sphi 0, %s134
      %s136 = sphi 0, %s134
      %s137 = sphi 0, %s136
      %s151 = sphi 0, %s137
      %s155 = sphi 0, %s155
      %s157 = sphi 0, %s155
      %s158 = sphi 0, %s157
      %s172 = sphi 0, %s158
      %s176 = sphi 0, %s176
      %s178 = sphi 0, %s176
      %s179 = sphi 0, %s178
      %s193 = sphi 0, %s179
      %s197 = sphi 0, %s197
      %s199 = sphi 0, %s197
      %s200 = sphi 0, %s199
      %s214 = sphi 0, %s200
      %s218 = sphi 0, %s218
      %s220 = sphi 0, %s218
      %s221 = sphi 0, %s220
      %s235 = sphi 0, %s221
      %s239 = sphi 0, %s239
      %s241 = sphi 0, %s239
      %s242 = sphi 0, %s241
      %s256 = sphi 0, %s242
      %s260 = sphi 0, %s260
      %s262 = sphi 0, %s260
      %s263 = sphi 0, %s262
      %s277 = sphi 0, %s263
      %s281 = sphi 0, %s281
      %s283 = sphi 0, %s281
      %s284 = sphi 0, %s283
      %s298 = sphi 0, %s284
      %s302 = sphi 0, %s302
      %s304 = sphi 0, %s302
      %s305 = sphi 0, %s304
      %s319 = sphi 0, %s305
      %s323 = sphi 0, %s323
      %s325 = sphi 0, %s323
      %s326 = sphi 0, %s325
      %s340 = sphi 0, %s326
      %s344 = sphi 0, %s344
      %s346 = sphi 0, %s344
      %s347 = sphi 0, %s346
      %s361 = sphi 0, %s347
      %s365 = sphi 0, %s365
      %s367 = sphi 0, %s365
      %s368 = sphi 0, %s367
      %s382 = sphi 0, %s368
      %s386 = sphi 0, %s386
      %s388 = sphi 0, %s386
      %s389 = sphi 0, %s388
      %s403 = sphi 0, %s389
      %s407 = sphi 0, %s407
      %s409 = sphi 0, %s407
      %s410 = sphi 0, %s409
      %s424 = sphi 0, %s410
      %s428 = sphi 0, %s428
      %s430 = sphi 0, %s428
      %s431 = sphi 0, %s430
      %s445 = sphi 0, %s431
      %s449 = sphi 0, %s449
      %s451 = sphi 0, %s449
      %s452 = sphi 0, %s451
      %s466 = sphi 0, %s452
      %s470 = sphi 0, %s470
      %s472 = sphi 0, %s470
      %s473 = sphi 0, %s472
      %s487 = sphi 0, %s473
      %s491 = sphi 0, %s491
      %s493 = sphi 0, %s491
      %s494 = sphi 0, %s493
      %s508 = sphi 0, %s494
      %s512 = sphi 0, %s512
      %s514 = sphi 0, %s512
      %s515 = sphi 0, %s514
      %s529 = sphi 0, %s515
      %s533 = sphi 0, %s533
      %s535 = sphi 0, %s533
      %s536 = sphi 0, %s535
      %s550 = sphi 0, %s536
      %s554 = sphi 0, %s554
      %s556 = sphi 0, %s554
      %s557 = sphi 0, %s556
      %s571 = sphi 0, %s557
      %s575 = sphi 0, %s575
      %s577 = sphi 0, %s575
      %s578 = sphi 0, %s577
      %s592 = sphi 0, %s578
      %s596 = sphi 0, %s596
      %s598 = sphi 0, %s596
      %s599 = sphi 0, %s598
      %s613 = sphi 0, %s599
      %s617 = sphi 0, %s617
      %s619 = sphi 0, %s617
      %s620 = sphi 0, %s619
      %s634 = sphi 0, %s620
      %s638 = sphi 0, %s638
      %s640 = sphi 0, %s638
      %s641 = sphi 0, %s640
      %s655 = sphi 0, %s641
      %s659 = sphi 0, %s659
      %s661 = sphi 0, %s659
      %s662 = sphi 0, %s661
      %s676 = sphi 0, %s662
      %s682 = sphi 0, %s684
      %s685 = sphi 0, %s682
      %s686 = sphi 0, %s685
      %s702 = sphi 0, %s686
      %s708 = sphi 0, %s710
      %s711 = sphi 0, %s708
      %s712 = sphi 0, %s711
      %s728 = sphi 0, %s712
      %s734 = sphi 0, %s736
      %s737 = sphi 0, %s734
      %s738 = sphi 0, %s737
      %s754 = sphi 0, %s738
    $region4: #{tpu_custom_call.1} parent=1 // loop_header_branch
      %77 = sbr.rel (%p75) target = $region8
    $region5: #{tpu_custom_call.1} parent=1 // loop_body
      %s79 = ssub.s32 %s74, 1
      %s80 = ssub.s32 %s74, 2
      %s81 = sadd.s32 %s74, 1
      %s82 = ssub.s32 %s74, %s81
      %p83 = scmp.eq.s32.totalorder %s82, 0
      %s85 = sadd.s32 %s84, 1
      %s86 = scalar_select %p83, %s84, %s85
      %p89 = pneg %p83
      %p90 = scmp.eq.s32.totalorder %s74, 1
      %p91 = por %p89, %p90
      %p92 = scmp.ne.s32.totalorder %s84, %s87
      %p93 = scmp.eq.s32.totalorder %s74, 0
      %p94 = por %p92, %p93
      %p95 = scmp.ne.s32.totalorder %s84, %s87
      %p96 = scmp.eq.s32.totalorder %s79, 1
      %p97 = por %p95, %p96
      %p98 = scmp.ne.s32.totalorder %s87, %s88
      %p99 = scmp.eq.s32.totalorder %s79, 0
      %p100 = por %p98, %p99
      %p101 = scmp.ne.s32.totalorder %s87, %s88
      %p102 = scmp.eq.s32.totalorder %s80, 1
      %p103 = por %p101, %p102
      %p105 = scmp.ne.s32.totalorder %s88, %s104
      %p106 = scmp.eq.s32.totalorder %s80, 0
      %p107 = por %p105, %p106
      %s108 = ssub.s32 %s74, %s81
      %p109 = scmp.eq.s32.totalorder %s108, 0
      %s111 = sadd.s32 %s110, 1
      %s112 = scalar_select %p109, %s110, %s111
      %p115 = pneg %p109
      %p116 = scmp.eq.s32.totalorder %s74, 1
      %p117 = por %p115, %p116
      %p118 = scmp.ne.s32.totalorder %s110, %s113
      %p119 = scmp.eq.s32.totalorder %s74, 0
      %p120 = por %p118, %p119
      %p121 = scmp.ne.s32.totalorder %s110, %s113
      %p122 = scmp.eq.s32.totalorder %s79, 1
      %p123 = por %p121, %p122
      %p124 = scmp.ne.s32.totalorder %s113, %s114
      %p125 = scmp.eq.s32.totalorder %s79, 0
      %p126 = por %p124, %p125
      %p127 = scmp.ne.s32.totalorder %s113, %s114
      %p128 = scmp.eq.s32.totalorder %s80, 1
      %p129 = por %p127, %p128
      %p131 = scmp.ne.s32.totalorder %s114, %s130
      %p132 = scmp.eq.s32.totalorder %s80, 0
      %p133 = por %p131, %p132
      %s135 = sadd.s32 %s134, 1
      %p138 = scmp.eq.s32.totalorder %s74, 1
      %p139 = scmp.ne.s32.totalorder %s134, %s136
      %p140 = scmp.eq.s32.totalorder %s74, 0
      %p141 = por %p139, %p140
      %p142 = scmp.ne.s32.totalorder %s134, %s136
      %p143 = scmp.eq.s32.totalorder %s79, 1
      %p144 = por %p142, %p143
      %p145 = scmp.ne.s32.totalorder %s136, %s137
      %p146 = scmp.eq.s32.totalorder %s79, 0
      %p147 = por %p145, %p146
      %p148 = scmp.ne.s32.totalorder %s136, %s137
      %p149 = scmp.eq.s32.totalorder %s80, 1
      %p150 = por %p148, %p149
      %p152 = scmp.ne.s32.totalorder %s137, %s151
      %p153 = scmp.eq.s32.totalorder %s80, 0
      %p154 = por %p152, %p153
      %s156 = sadd.s32 %s155, 1
      %p159 = scmp.eq.s32.totalorder %s74, 1
      %p160 = scmp.ne.s32.totalorder %s155, %s157
      %p161 = scmp.eq.s32.totalorder %s74, 0
      %p162 = por %p160, %p161
      %p163 = scmp.ne.s32.totalorder %s155, %s157
      %p164 = scmp.eq.s32.totalorder %s79, 1
      %p165 = por %p163, %p164
      %p166 = scmp.ne.s32.totalorder %s157, %s158
      %p167 = scmp.eq.s32.totalorder %s79, 0
      %p168 = por %p166, %p167
      %p169 = scmp.ne.s32.totalorder %s157, %s158
      %p170 = scmp.eq.s32.totalorder %s80, 1
      %p171 = por %p169, %p170
      %p173 = scmp.ne.s32.totalorder %s158, %s172
      %p174 = scmp.eq.s32.totalorder %s80, 0
      %p175 = por %p173, %p174
      %s177 = sadd.s32 %s176, 1
      %p180 = scmp.eq.s32.totalorder %s74, 1
      %p181 = scmp.ne.s32.totalorder %s176, %s178
      %p182 = scmp.eq.s32.totalorder %s74, 0
      %p183 = por %p181, %p182
      %p184 = scmp.ne.s32.totalorder %s176, %s178
      %p185 = scmp.eq.s32.totalorder %s79, 1
      %p186 = por %p184, %p185
      %p187 = scmp.ne.s32.totalorder %s178, %s179
      %p188 = scmp.eq.s32.totalorder %s79, 0
      %p189 = por %p187, %p188
      %p190 = scmp.ne.s32.totalorder %s178, %s179
      %p191 = scmp.eq.s32.totalorder %s80, 1
      %p192 = por %p190, %p191
      %p194 = scmp.ne.s32.totalorder %s179, %s193
      %p195 = scmp.eq.s32.totalorder %s80, 0
      %p196 = por %p194, %p195
      %s198 = sadd.s32 %s197, 1
      %p201 = scmp.eq.s32.totalorder %s74, 1
      %p202 = scmp.ne.s32.totalorder %s197, %s199
      %p203 = scmp.eq.s32.totalorder %s74, 0
      %p204 = por %p202, %p203
      %p205 = scmp.ne.s32.totalorder %s197, %s199
      %p206 = scmp.eq.s32.totalorder %s79, 1
      %p207 = por %p205, %p206
      %p208 = scmp.ne.s32.totalorder %s199, %s200
      %p209 = scmp.eq.s32.totalorder %s79, 0
      %p210 = por %p208, %p209
      %p211 = scmp.ne.s32.totalorder %s199, %s200
      %p212 = scmp.eq.s32.totalorder %s80, 1
      %p213 = por %p211, %p212
      %p215 = scmp.ne.s32.totalorder %s200, %s214
      %p216 = scmp.eq.s32.totalorder %s80, 0
      %p217 = por %p215, %p216
      %s219 = sadd.s32 %s218, 1
      %p222 = scmp.eq.s32.totalorder %s74, 1
      %p223 = scmp.ne.s32.totalorder %s218, %s220
      %p224 = scmp.eq.s32.totalorder %s74, 0
      %p225 = por %p223, %p224
      %p226 = scmp.ne.s32.totalorder %s218, %s220
      %p227 = scmp.eq.s32.totalorder %s79, 1
      %p228 = por %p226, %p227
      %p229 = scmp.ne.s32.totalorder %s220, %s221
      %p230 = scmp.eq.s32.totalorder %s79, 0
      %p231 = por %p229, %p230
      %p232 = scmp.ne.s32.totalorder %s220, %s221
      %p233 = scmp.eq.s32.totalorder %s80, 1
      %p234 = por %p232, %p233
      %p236 = scmp.ne.s32.totalorder %s221, %s235
      %p237 = scmp.eq.s32.totalorder %s80, 0
      %p238 = por %p236, %p237
      %s240 = sadd.s32 %s239, 1
      %p243 = scmp.eq.s32.totalorder %s74, 1
      %p244 = scmp.ne.s32.totalorder %s239, %s241
      %p245 = scmp.eq.s32.totalorder %s74, 0
      %p246 = por %p244, %p245
      %p247 = scmp.ne.s32.totalorder %s239, %s241
      %p248 = scmp.eq.s32.totalorder %s79, 1
      %p249 = por %p247, %p248
      %p250 = scmp.ne.s32.totalorder %s241, %s242
      %p251 = scmp.eq.s32.totalorder %s79, 0
      %p252 = por %p250, %p251
      %p253 = scmp.ne.s32.totalorder %s241, %s242
      %p254 = scmp.eq.s32.totalorder %s80, 1
      %p255 = por %p253, %p254
      %p257 = scmp.ne.s32.totalorder %s242, %s256
      %p258 = scmp.eq.s32.totalorder %s80, 0
      %p259 = por %p257, %p258
      %s261 = sadd.s32 %s260, 1
      %p264 = scmp.eq.s32.totalorder %s74, 1
      %p265 = scmp.ne.s32.totalorder %s260, %s262
      %p266 = scmp.eq.s32.totalorder %s74, 0
      %p267 = por %p265, %p266
      %p268 = scmp.ne.s32.totalorder %s260, %s262
      %p269 = scmp.eq.s32.totalorder %s79, 1
      %p270 = por %p268, %p269
      %p271 = scmp.ne.s32.totalorder %s262, %s263
      %p272 = scmp.eq.s32.totalorder %s79, 0
      %p273 = por %p271, %p272
      %p274 = scmp.ne.s32.totalorder %s262, %s263
      %p275 = scmp.eq.s32.totalorder %s80, 1
      %p276 = por %p274, %p275
      %p278 = scmp.ne.s32.totalorder %s263, %s277
      %p279 = scmp.eq.s32.totalorder %s80, 0
      %p280 = por %p278, %p279
      %s282 = sadd.s32 %s281, 1
      %p285 = scmp.eq.s32.totalorder %s74, 1
      %p286 = scmp.ne.s32.totalorder %s281, %s283
      %p287 = scmp.eq.s32.totalorder %s74, 0
      %p288 = por %p286, %p287
      %p289 = scmp.ne.s32.totalorder %s281, %s283
      %p290 = scmp.eq.s32.totalorder %s79, 1
      %p291 = por %p289, %p290
      %p292 = scmp.ne.s32.totalorder %s283, %s284
      %p293 = scmp.eq.s32.totalorder %s79, 0
      %p294 = por %p292, %p293
      %p295 = scmp.ne.s32.totalorder %s283, %s284
      %p296 = scmp.eq.s32.totalorder %s80, 1
      %p297 = por %p295, %p296
      %p299 = scmp.ne.s32.totalorder %s284, %s298
      %p300 = scmp.eq.s32.totalorder %s80, 0
      %p301 = por %p299, %p300
      %s303 = sadd.s32 %s302, 1
      %p306 = scmp.eq.s32.totalorder %s74, 1
      %p307 = scmp.ne.s32.totalorder %s302, %s304
      %p308 = scmp.eq.s32.totalorder %s74, 0
      %p309 = por %p307, %p308
      %p310 = scmp.ne.s32.totalorder %s302, %s304
      %p311 = scmp.eq.s32.totalorder %s79, 1
      %p312 = por %p310, %p311
      %p313 = scmp.ne.s32.totalorder %s304, %s305
      %p314 = scmp.eq.s32.totalorder %s79, 0
      %p315 = por %p313, %p314
      %p316 = scmp.ne.s32.totalorder %s304, %s305
      %p317 = scmp.eq.s32.totalorder %s80, 1
      %p318 = por %p316, %p317
      %p320 = scmp.ne.s32.totalorder %s305, %s319
      %p321 = scmp.eq.s32.totalorder %s80, 0
      %p322 = por %p320, %p321
      %s324 = sadd.s32 %s323, 1
      %p327 = scmp.eq.s32.totalorder %s74, 1
      %p328 = scmp.ne.s32.totalorder %s323, %s325
      %p329 = scmp.eq.s32.totalorder %s74, 0
      %p330 = por %p328, %p329
      %p331 = scmp.ne.s32.totalorder %s323, %s325
      %p332 = scmp.eq.s32.totalorder %s79, 1
      %p333 = por %p331, %p332
      %p334 = scmp.ne.s32.totalorder %s325, %s326
      %p335 = scmp.eq.s32.totalorder %s79, 0
      %p336 = por %p334, %p335
      %p337 = scmp.ne.s32.totalorder %s325, %s326
      %p338 = scmp.eq.s32.totalorder %s80, 1
      %p339 = por %p337, %p338
      %p341 = scmp.ne.s32.totalorder %s326, %s340
      %p342 = scmp.eq.s32.totalorder %s80, 0
      %p343 = por %p341, %p342
      %s345 = sadd.s32 %s344, 1
      %p348 = scmp.eq.s32.totalorder %s74, 1
      %p349 = scmp.ne.s32.totalorder %s344, %s346
      %p350 = scmp.eq.s32.totalorder %s74, 0
      %p351 = por %p349, %p350
      %p352 = scmp.ne.s32.totalorder %s344, %s346
      %p353 = scmp.eq.s32.totalorder %s79, 1
      %p354 = por %p352, %p353
      %p355 = scmp.ne.s32.totalorder %s346, %s347
      %p356 = scmp.eq.s32.totalorder %s79, 0
      %p357 = por %p355, %p356
      %p358 = scmp.ne.s32.totalorder %s346, %s347
      %p359 = scmp.eq.s32.totalorder %s80, 1
      %p360 = por %p358, %p359
      %p362 = scmp.ne.s32.totalorder %s347, %s361
      %p363 = scmp.eq.s32.totalorder %s80, 0
      %p364 = por %p362, %p363
      %s366 = sadd.s32 %s365, 1
      %p369 = scmp.eq.s32.totalorder %s74, 1
      %p370 = scmp.ne.s32.totalorder %s365, %s367
      %p371 = scmp.eq.s32.totalorder %s74, 0
      %p372 = por %p370, %p371
      %p373 = scmp.ne.s32.totalorder %s365, %s367
      %p374 = scmp.eq.s32.totalorder %s79, 1
      %p375 = por %p373, %p374
      %p376 = scmp.ne.s32.totalorder %s367, %s368
      %p377 = scmp.eq.s32.totalorder %s79, 0
      %p378 = por %p376, %p377
      %p379 = scmp.ne.s32.totalorder %s367, %s368
      %p380 = scmp.eq.s32.totalorder %s80, 1
      %p381 = por %p379, %p380
      %p383 = scmp.ne.s32.totalorder %s368, %s382
      %p384 = scmp.eq.s32.totalorder %s80, 0
      %p385 = por %p383, %p384
      %s387 = sadd.s32 %s386, 1
      %p390 = scmp.eq.s32.totalorder %s74, 1
      %p391 = scmp.ne.s32.totalorder %s386, %s388
      %p392 = scmp.eq.s32.totalorder %s74, 0
      %p393 = por %p391, %p392
      %p394 = scmp.ne.s32.totalorder %s386, %s388
      %p395 = scmp.eq.s32.totalorder %s79, 1
      %p396 = por %p394, %p395
      %p397 = scmp.ne.s32.totalorder %s388, %s389
      %p398 = scmp.eq.s32.totalorder %s79, 0
      %p399 = por %p397, %p398
      %p400 = scmp.ne.s32.totalorder %s388, %s389
      %p401 = scmp.eq.s32.totalorder %s80, 1
      %p402 = por %p400, %p401
      %p404 = scmp.ne.s32.totalorder %s389, %s403
      %p405 = scmp.eq.s32.totalorder %s80, 0
      %p406 = por %p404, %p405
      %s408 = sadd.s32 %s407, 1
      %p411 = scmp.eq.s32.totalorder %s74, 1
      %p412 = scmp.ne.s32.totalorder %s407, %s409
      %p413 = scmp.eq.s32.totalorder %s74, 0
      %p414 = por %p412, %p413
      %p415 = scmp.ne.s32.totalorder %s407, %s409
      %p416 = scmp.eq.s32.totalorder %s79, 1
      %p417 = por %p415, %p416
      %p418 = scmp.ne.s32.totalorder %s409, %s410
      %p419 = scmp.eq.s32.totalorder %s79, 0
      %p420 = por %p418, %p419
      %p421 = scmp.ne.s32.totalorder %s409, %s410
      %p422 = scmp.eq.s32.totalorder %s80, 1
      %p423 = por %p421, %p422
      %p425 = scmp.ne.s32.totalorder %s410, %s424
      %p426 = scmp.eq.s32.totalorder %s80, 0
      %p427 = por %p425, %p426
      %s429 = sadd.s32 %s428, 1
      %p432 = scmp.eq.s32.totalorder %s74, 1
      %p433 = scmp.ne.s32.totalorder %s428, %s430
      %p434 = scmp.eq.s32.totalorder %s74, 0
      %p435 = por %p433, %p434
      %p436 = scmp.ne.s32.totalorder %s428, %s430
      %p437 = scmp.eq.s32.totalorder %s79, 1
      %p438 = por %p436, %p437
      %p439 = scmp.ne.s32.totalorder %s430, %s431
      %p440 = scmp.eq.s32.totalorder %s79, 0
      %p441 = por %p439, %p440
      %p442 = scmp.ne.s32.totalorder %s430, %s431
      %p443 = scmp.eq.s32.totalorder %s80, 1
      %p444 = por %p442, %p443
      %p446 = scmp.ne.s32.totalorder %s431, %s445
      %p447 = scmp.eq.s32.totalorder %s80, 0
      %p448 = por %p446, %p447
      %s450 = sadd.s32 %s449, 1
      %p453 = scmp.eq.s32.totalorder %s74, 1
      %p454 = scmp.ne.s32.totalorder %s449, %s451
      %p455 = scmp.eq.s32.totalorder %s74, 0
      %p456 = por %p454, %p455
      %p457 = scmp.ne.s32.totalorder %s449, %s451
      %p458 = scmp.eq.s32.totalorder %s79, 1
      %p459 = por %p457, %p458
      %p460 = scmp.ne.s32.totalorder %s451, %s452
      %p461 = scmp.eq.s32.totalorder %s79, 0
      %p462 = por %p460, %p461
      %p463 = scmp.ne.s32.totalorder %s451, %s452
      %p464 = scmp.eq.s32.totalorder %s80, 1
      %p465 = por %p463, %p464
      %p467 = scmp.ne.s32.totalorder %s452, %s466
      %p468 = scmp.eq.s32.totalorder %s80, 0
      %p469 = por %p467, %p468
      %s471 = sadd.s32 %s470, 1
      %p474 = scmp.eq.s32.totalorder %s74, 1
      %p475 = scmp.ne.s32.totalorder %s470, %s472
      %p476 = scmp.eq.s32.totalorder %s74, 0
      %p477 = por %p475, %p476
      %p478 = scmp.ne.s32.totalorder %s470, %s472
      %p479 = scmp.eq.s32.totalorder %s79, 1
      %p480 = por %p478, %p479
      %p481 = scmp.ne.s32.totalorder %s472, %s473
      %p482 = scmp.eq.s32.totalorder %s79, 0
      %p483 = por %p481, %p482
      %p484 = scmp.ne.s32.totalorder %s472, %s473
      %p485 = scmp.eq.s32.totalorder %s80, 1
      %p486 = por %p484, %p485
      %p488 = scmp.ne.s32.totalorder %s473, %s487
      %p489 = scmp.eq.s32.totalorder %s80, 0
      %p490 = por %p488, %p489
      %s492 = sadd.s32 %s491, 1
      %p495 = scmp.eq.s32.totalorder %s74, 1
      %p496 = scmp.ne.s32.totalorder %s491, %s493
      %p497 = scmp.eq.s32.totalorder %s74, 0
      %p498 = por %p496, %p497
      %p499 = scmp.ne.s32.totalorder %s491, %s493
      %p500 = scmp.eq.s32.totalorder %s79, 1
      %p501 = por %p499, %p500
      %p502 = scmp.ne.s32.totalorder %s493, %s494
      %p503 = scmp.eq.s32.totalorder %s79, 0
      %p504 = por %p502, %p503
      %p505 = scmp.ne.s32.totalorder %s493, %s494
      %p506 = scmp.eq.s32.totalorder %s80, 1
      %p507 = por %p505, %p506
      %p509 = scmp.ne.s32.totalorder %s494, %s508
      %p510 = scmp.eq.s32.totalorder %s80, 0
      %p511 = por %p509, %p510
      %s513 = sadd.s32 %s512, 1
      %p516 = scmp.eq.s32.totalorder %s74, 1
      %p517 = scmp.ne.s32.totalorder %s512, %s514
      %p518 = scmp.eq.s32.totalorder %s74, 0
      %p519 = por %p517, %p518
      %p520 = scmp.ne.s32.totalorder %s512, %s514
      %p521 = scmp.eq.s32.totalorder %s79, 1
      %p522 = por %p520, %p521
      %p523 = scmp.ne.s32.totalorder %s514, %s515
      %p524 = scmp.eq.s32.totalorder %s79, 0
      %p525 = por %p523, %p524
      %p526 = scmp.ne.s32.totalorder %s514, %s515
      %p527 = scmp.eq.s32.totalorder %s80, 1
      %p528 = por %p526, %p527
      %p530 = scmp.ne.s32.totalorder %s515, %s529
      %p531 = scmp.eq.s32.totalorder %s80, 0
      %p532 = por %p530, %p531
      %s534 = sadd.s32 %s533, 1
      %p537 = scmp.eq.s32.totalorder %s74, 1
      %p538 = scmp.ne.s32.totalorder %s533, %s535
      %p539 = scmp.eq.s32.totalorder %s74, 0
      %p540 = por %p538, %p539
      %p541 = scmp.ne.s32.totalorder %s533, %s535
      %p542 = scmp.eq.s32.totalorder %s79, 1
      %p543 = por %p541, %p542
      %p544 = scmp.ne.s32.totalorder %s535, %s536
      %p545 = scmp.eq.s32.totalorder %s79, 0
      %p546 = por %p544, %p545
      %p547 = scmp.ne.s32.totalorder %s535, %s536
      %p548 = scmp.eq.s32.totalorder %s80, 1
      %p549 = por %p547, %p548
      %p551 = scmp.ne.s32.totalorder %s536, %s550
      %p552 = scmp.eq.s32.totalorder %s80, 0
      %p553 = por %p551, %p552
      %s555 = sadd.s32 %s554, 1
      %p558 = scmp.eq.s32.totalorder %s74, 1
      %p559 = scmp.ne.s32.totalorder %s554, %s556
      %p560 = scmp.eq.s32.totalorder %s74, 0
      %p561 = por %p559, %p560
      %p562 = scmp.ne.s32.totalorder %s554, %s556
      %p563 = scmp.eq.s32.totalorder %s79, 1
      %p564 = por %p562, %p563
      %p565 = scmp.ne.s32.totalorder %s556, %s557
      %p566 = scmp.eq.s32.totalorder %s79, 0
      %p567 = por %p565, %p566
      %p568 = scmp.ne.s32.totalorder %s556, %s557
      %p569 = scmp.eq.s32.totalorder %s80, 1
      %p570 = por %p568, %p569
      %p572 = scmp.ne.s32.totalorder %s557, %s571
      %p573 = scmp.eq.s32.totalorder %s80, 0
      %p574 = por %p572, %p573
      %s576 = sadd.s32 %s575, 1
      %p579 = scmp.eq.s32.totalorder %s74, 1
      %p580 = scmp.ne.s32.totalorder %s575, %s577
      %p581 = scmp.eq.s32.totalorder %s74, 0
      %p582 = por %p580, %p581
      %p583 = scmp.ne.s32.totalorder %s575, %s577
      %p584 = scmp.eq.s32.totalorder %s79, 1
      %p585 = por %p583, %p584
      %p586 = scmp.ne.s32.totalorder %s577, %s578
      %p587 = scmp.eq.s32.totalorder %s79, 0
      %p588 = por %p586, %p587
      %p589 = scmp.ne.s32.totalorder %s577, %s578
      %p590 = scmp.eq.s32.totalorder %s80, 1
      %p591 = por %p589, %p590
      %p593 = scmp.ne.s32.totalorder %s578, %s592
      %p594 = scmp.eq.s32.totalorder %s80, 0
      %p595 = por %p593, %p594
      %s597 = sadd.s32 %s596, 1
      %p600 = scmp.eq.s32.totalorder %s74, 1
      %p601 = scmp.ne.s32.totalorder %s596, %s598
      %p602 = scmp.eq.s32.totalorder %s74, 0
      %p603 = por %p601, %p602
      %p604 = scmp.ne.s32.totalorder %s596, %s598
      %p605 = scmp.eq.s32.totalorder %s79, 1
      %p606 = por %p604, %p605
      %p607 = scmp.ne.s32.totalorder %s598, %s599
      %p608 = scmp.eq.s32.totalorder %s79, 0
      %p609 = por %p607, %p608
      %p610 = scmp.ne.s32.totalorder %s598, %s599
      %p611 = scmp.eq.s32.totalorder %s80, 1
      %p612 = por %p610, %p611
      %p614 = scmp.ne.s32.totalorder %s599, %s613
      %p615 = scmp.eq.s32.totalorder %s80, 0
      %p616 = por %p614, %p615
      %s618 = sadd.s32 %s617, 1
      %p621 = scmp.eq.s32.totalorder %s74, 1
      %p622 = scmp.ne.s32.totalorder %s617, %s619
      %p623 = scmp.eq.s32.totalorder %s74, 0
      %p624 = por %p622, %p623
      %p625 = scmp.ne.s32.totalorder %s617, %s619
      %p626 = scmp.eq.s32.totalorder %s79, 1
      %p627 = por %p625, %p626
      %p628 = scmp.ne.s32.totalorder %s619, %s620
      %p629 = scmp.eq.s32.totalorder %s79, 0
      %p630 = por %p628, %p629
      %p631 = scmp.ne.s32.totalorder %s619, %s620
      %p632 = scmp.eq.s32.totalorder %s80, 1
      %p633 = por %p631, %p632
      %p635 = scmp.ne.s32.totalorder %s620, %s634
      %p636 = scmp.eq.s32.totalorder %s80, 0
      %p637 = por %p635, %p636
      %s639 = sadd.s32 %s638, 1
      %p642 = scmp.eq.s32.totalorder %s74, 1
      %p643 = scmp.ne.s32.totalorder %s638, %s640
      %p644 = scmp.eq.s32.totalorder %s74, 0
      %p645 = por %p643, %p644
      %p646 = scmp.ne.s32.totalorder %s638, %s640
      %p647 = scmp.eq.s32.totalorder %s79, 1
      %p648 = por %p646, %p647
      %p649 = scmp.ne.s32.totalorder %s640, %s641
      %p650 = scmp.eq.s32.totalorder %s79, 0
      %p651 = por %p649, %p650
      %p652 = scmp.ne.s32.totalorder %s640, %s641
      %p653 = scmp.eq.s32.totalorder %s80, 1
      %p654 = por %p652, %p653
      %p656 = scmp.ne.s32.totalorder %s641, %s655
      %p657 = scmp.eq.s32.totalorder %s80, 0
      %p658 = por %p656, %p657
      %s660 = sadd.s32 %s659, 1
      %p663 = scmp.eq.s32.totalorder %s74, 1
      %p664 = scmp.ne.s32.totalorder %s659, %s661
      %p665 = scmp.eq.s32.totalorder %s74, 0
      %p666 = por %p664, %p665
      %p667 = scmp.ne.s32.totalorder %s659, %s661
      %p668 = scmp.eq.s32.totalorder %s79, 1
      %p669 = por %p667, %p668
      %p670 = scmp.ne.s32.totalorder %s661, %s662
      %p671 = scmp.eq.s32.totalorder %s79, 0
      %p672 = por %p670, %p671
      %p673 = scmp.ne.s32.totalorder %s661, %s662
      %p674 = scmp.eq.s32.totalorder %s80, 1
      %p675 = por %p673, %p674
      %p677 = scmp.ne.s32.totalorder %s662, %s676
      %p678 = scmp.eq.s32.totalorder %s80, 0
      %p679 = por %p677, %p678
      %s680 = ssub.s32 %s74, %s81
      %p681 = scmp.eq.s32.totalorder %s680, 0
      %s683 = sadd.s32 %s682, 1
      %s684 = scalar_select %p681, %s682, %s683
      %p687 = pneg %p681
      %p688 = scmp.eq.s32.totalorder %s74, 1
      %p689 = por %p687, %p688
      %p690 = scmp.ne.s32.totalorder %s682, %s685
      %p691 = scmp.eq.s32.totalorder %s74, 0
      %p692 = por %p690, %p691
      %p693 = scmp.ne.s32.totalorder %s682, %s685
      %p694 = scmp.eq.s32.totalorder %s79, 1
      %p695 = por %p693, %p694
      %p696 = scmp.ne.s32.totalorder %s685, %s686
      %p697 = scmp.eq.s32.totalorder %s79, 0
      %p698 = por %p696, %p697
      %p699 = scmp.ne.s32.totalorder %s685, %s686
      %p700 = scmp.eq.s32.totalorder %s80, 1
      %p701 = por %p699, %p700
      %p703 = scmp.ne.s32.totalorder %s686, %s702
      %p704 = scmp.eq.s32.totalorder %s80, 0
      %p705 = por %p703, %p704
      %s706 = ssub.s32 %s74, %s81
      %p707 = scmp.eq.s32.totalorder %s706, 0
      %s709 = sadd.s32 %s708, 1
      %s710 = scalar_select %p707, %s708, %s709
      %p713 = pneg %p707
      %p714 = scmp.eq.s32.totalorder %s74, 1
      %p715 = por %p713, %p714
      %p716 = scmp.ne.s32.totalorder %s708, %s711
      %p717 = scmp.eq.s32.totalorder %s74, 0
      %p718 = por %p716, %p717
      %p719 = scmp.ne.s32.totalorder %s708, %s711
      %p720 = scmp.eq.s32.totalorder %s79, 1
      %p721 = por %p719, %p720
      %p722 = scmp.ne.s32.totalorder %s711, %s712
      %p723 = scmp.eq.s32.totalorder %s79, 0
      %p724 = por %p722, %p723
      %p725 = scmp.ne.s32.totalorder %s711, %s712
      %p726 = scmp.eq.s32.totalorder %s80, 1
      %p727 = por %p725, %p726
      %p729 = scmp.ne.s32.totalorder %s712, %s728
      %p730 = scmp.eq.s32.totalorder %s80, 0
      %p731 = por %p729, %p730
      %s732 = ssub.s32 %s74, %s81
      %p733 = scmp.eq.s32.totalorder %s732, 0
      %s735 = sadd.s32 %s734, 1
      %s736 = scalar_select %p733, %s734, %s735
      %p739 = pneg %p733
      %p740 = scmp.eq.s32.totalorder %s74, 1
      %p741 = por %p739, %p740
      %p742 = scmp.ne.s32.totalorder %s734, %s737
      %p743 = scmp.eq.s32.totalorder %s74, 0
      %p744 = por %p742, %p743
      %p745 = scmp.ne.s32.totalorder %s734, %s737
      %p746 = scmp.eq.s32.totalorder %s79, 1
      %p747 = por %p745, %p746
      %p748 = scmp.ne.s32.totalorder %s737, %s738
      %p749 = scmp.eq.s32.totalorder %s79, 0
      %p750 = por %p748, %p749
      %p751 = scmp.ne.s32.totalorder %s737, %s738
      %p752 = scmp.eq.s32.totalorder %s80, 1
      %p753 = por %p751, %p752
      %p755 = scmp.ne.s32.totalorder %s738, %s754
      %p756 = scmp.eq.s32.totalorder %s80, 0
      %p757 = por %p755, %p756
      %p758 = scmp.le.s32.totalorder 1, %s74
      %p759 = scmp.lt.s32.totalorder %s74, 3
      %p760 = pnand %p758, %p759
      %p761 = pneg %p760
      // Predicated region
      $region9: #{tpu_custom_call.1} parent=5 // pred_check
        _
      $region10: #{tpu_custom_call.1} parent=5 // pred_check_branch
        %763 = sbr.rel (%p760) target = $region12
      $region11: #{tpu_custom_call.1} parent=5 // pred_region
        %s764 = ssub.s32 %s74, 1
        // Predicated region
        $region13: #{tpu_custom_call.1} parent=11 // pred_check
          %p765 = pneg %p147
        $region14: #{tpu_custom_call.1} parent=11 // pred_check_branch
          %767 = sbr.rel (%p765) target = $region16
        $region15: #{tpu_custom_call.1} parent=11 // pred_region
          _
        $region16: #{tpu_custom_call.1} parent=11 // pred_fallthru
          _
        // Predicated region
        $region17: #{tpu_custom_call.1} parent=11 // pred_check
          %p768 = pneg %p168
        $region18: #{tpu_custom_call.1} parent=11 // pred_check_branch
          %770 = sbr.rel (%p768) target = $region20
        $region19: #{tpu_custom_call.1} parent=11 // pred_region
          _
        $region20: #{tpu_custom_call.1} parent=11 // pred_fallthru
          _
        // Predicated region
        $region21: #{tpu_custom_call.1} parent=11 // pred_check
          %p771 = pneg %p189
        $region22: #{tpu_custom_call.1} parent=11 // pred_check_branch
          %773 = sbr.rel (%p771) target = $region24
        $region23: #{tpu_custom_call.1} parent=11 // pred_region
          _
        $region24: #{tpu_custom_call.1} parent=11 // pred_fallthru
          _
        // Predicated region
        $region25: #{tpu_custom_call.1} parent=11 // pred_check
          %p774 = pneg %p210
        $region26: #{tpu_custom_call.1} parent=11 // pred_check_branch
          %776 = sbr.rel (%p774) target = $region28
        $region27: #{tpu_custom_call.1} parent=11 // pred_region
          _
        $region28: #{tpu_custom_call.1} parent=11 // pred_fallthru
          _
        // Predicated region
        $region29: #{tpu_custom_call.1} parent=11 // pred_check
          %p777 = pneg %p231
        $region30: #{tpu_custom_call.1} parent=11 // pred_check_branch
          %779 = sbr.rel (%p777) target = $region32
        $region31: #{tpu_custom_call.1} parent=11 // pred_region
          _
        $region32: #{tpu_custom_call.1} parent=11 // pred_fallthru
          _
        // Predicated region
        $region33: #{tpu_custom_call.1} parent=11 // pred_check
          %p780 = pneg %p252
        $region34: #{tpu_custom_call.1} parent=11 // pred_check_branch
          %782 = sbr.rel (%p780) target = $region36
        $region35: #{tpu_custom_call.1} parent=11 // pred_region
          _
        $region36: #{tpu_custom_call.1} parent=11 // pred_fallthru
          _
        // Predicated region
        $region37: #{tpu_custom_call.1} parent=11 // pred_check
          %p783 = pneg %p273
        $region38: #{tpu_custom_call.1} parent=11 // pred_check_branch
          %785 = sbr.rel (%p783) target = $region40
        $region39: #{tpu_custom_call.1} parent=11 // pred_region
          _
        $region40: #{tpu_custom_call.1} parent=11 // pred_fallthru
          _
        // Predicated region
        $region41: #{tpu_custom_call.1} parent=11 // pred_check
          %p786 = pneg %p294
        $region42: #{tpu_custom_call.1} parent=11 // pred_check_branch
          %788 = sbr.rel (%p786) target = $region44
        $region43: #{tpu_custom_call.1} parent=11 // pred_region
          _
        $region44: #{tpu_custom_call.1} parent=11 // pred_fallthru
          _
        // Predicated region
        $region45: #{tpu_custom_call.1} parent=11 // pred_check
          %p789 = pneg %p315
        $region46: #{tpu_custom_call.1} parent=11 // pred_check_branch
          %791 = sbr.rel (%p789) target = $region48
        $region47: #{tpu_custom_call.1} parent=11 // pred_region
          _
        $region48: #{tpu_custom_call.1} parent=11 // pred_fallthru
          _
        // Predicated region
        $region49: #{tpu_custom_call.1} parent=11 // pred_check
          %p792 = pneg %p336
        $region50: #{tpu_custom_call.1} parent=11 // pred_check_branch
          %794 = sbr.rel (%p792) target = $region52
        $region51: #{tpu_custom_call.1} parent=11 // pred_region
          _
        $region52: #{tpu_custom_call.1} parent=11 // pred_fallthru
          _
        // Predicated region
        $region53: #{tpu_custom_call.1} parent=11 // pred_check
          %p795 = pneg %p357
        $region54: #{tpu_custom_call.1} parent=11 // pred_check_branch
          %797 = sbr.rel (%p795) target = $region56
        $region55: #{tpu_custom_call.1} parent=11 // pred_region
          _
        $region56: #{tpu_custom_call.1} parent=11 // pred_fallthru
          _
        // Predicated region
        $region57: #{tpu_custom_call.1} parent=11 // pred_check
          %p798 = pneg %p378
        $region58: #{tpu_custom_call.1} parent=11 // pred_check_branch
          %800 = sbr.rel (%p798) target = $region60
        $region59: #{tpu_custom_call.1} parent=11 // pred_region
          _
        $region60: #{tpu_custom_call.1} parent=11 // pred_fallthru
          _
        // Predicated region
        $region61: #{tpu_custom_call.1} parent=11 // pred_check
          %p801 = pneg %p399
        $region62: #{tpu_custom_call.1} parent=11 // pred_check_branch
          %803 = sbr.rel (%p801) target = $region64
        $region63: #{tpu_custom_call.1} parent=11 // pred_region
          _
        $region64: #{tpu_custom_call.1} parent=11 // pred_fallthru
          _
        // Predicated region
        $region65: #{tpu_custom_call.1} parent=11 // pred_check
          %p804 = pneg %p420
        $region66: #{tpu_custom_call.1} parent=11 // pred_check_branch
          %806 = sbr.rel (%p804) target = $region68
        $region67: #{tpu_custom_call.1} parent=11 // pred_region
          _
        $region68: #{tpu_custom_call.1} parent=11 // pred_fallthru
          _
        // Predicated region
        $region69: #{tpu_custom_call.1} parent=11 // pred_check
          %p807 = pneg %p441
        $region70: #{tpu_custom_call.1} parent=11 // pred_check_branch
          %809 = sbr.rel (%p807) target = $region72
        $region71: #{tpu_custom_call.1} parent=11 // pred_region
          _
        $region72: #{tpu_custom_call.1} parent=11 // pred_fallthru
          _
        // Predicated region
        $region73: #{tpu_custom_call.1} parent=11 // pred_check
          %p810 = pneg %p462
        $region74: #{tpu_custom_call.1} parent=11 // pred_check_branch
          %812 = sbr.rel (%p810) target = $region76
        $region75: #{tpu_custom_call.1} parent=11 // pred_region
          _
        $region76: #{tpu_custom_call.1} parent=11 // pred_fallthru
          _
        // Predicated region
        $region77: #{tpu_custom_call.1} parent=11 // pred_check
          %p813 = pneg %p483
        $region78: #{tpu_custom_call.1} parent=11 // pred_check_branch
          %815 = sbr.rel (%p813) target = $region80
        $region79: #{tpu_custom_call.1} parent=11 // pred_region
          _
        $region80: #{tpu_custom_call.1} parent=11 // pred_fallthru
          _
        // Predicated region
        $region81: #{tpu_custom_call.1} parent=11 // pred_check
          %p816 = pneg %p504
        $region82: #{tpu_custom_call.1} parent=11 // pred_check_branch
          %818 = sbr.rel (%p816) target = $region84
        $region83: #{tpu_custom_call.1} parent=11 // pred_region
          _
        $region84: #{tpu_custom_call.1} parent=11 // pred_fallthru
          _
        // Predicated region
        $region85: #{tpu_custom_call.1} parent=11 // pred_check
          %p819 = pneg %p525
        $region86: #{tpu_custom_call.1} parent=11 // pred_check_branch
          %821 = sbr.rel (%p819) target = $region88
        $region87: #{tpu_custom_call.1} parent=11 // pred_region
          _
        $region88: #{tpu_custom_call.1} parent=11 // pred_fallthru
          _
        // Predicated region
        $region89: #{tpu_custom_call.1} parent=11 // pred_check
          %p822 = pneg %p546
        $region90: #{tpu_custom_call.1} parent=11 // pred_check_branch
          %824 = sbr.rel (%p822) target = $region92
        $region91: #{tpu_custom_call.1} parent=11 // pred_region
          _
        $region92: #{tpu_custom_call.1} parent=11 // pred_fallthru
          _
        // Predicated region
        $region93: #{tpu_custom_call.1} parent=11 // pred_check
          %p825 = pneg %p567
        $region94: #{tpu_custom_call.1} parent=11 // pred_check_branch
          %827 = sbr.rel (%p825) target = $region96
        $region95: #{tpu_custom_call.1} parent=11 // pred_region
          _
        $region96: #{tpu_custom_call.1} parent=11 // pred_fallthru
          _
        // Predicated region
        $region97: #{tpu_custom_call.1} parent=11 // pred_check
          %p828 = pneg %p588
        $region98: #{tpu_custom_call.1} parent=11 // pred_check_branch
          %830 = sbr.rel (%p828) target = $region100
        $region99: #{tpu_custom_call.1} parent=11 // pred_region
          _
        $region100: #{tpu_custom_call.1} parent=11 // pred_fallthru
          _
        // Predicated region
        $region101: #{tpu_custom_call.1} parent=11 // pred_check
          %p831 = pneg %p609
        $region102: #{tpu_custom_call.1} parent=11 // pred_check_branch
          %833 = sbr.rel (%p831) target = $region104
        $region103: #{tpu_custom_call.1} parent=11 // pred_region
          _
        $region104: #{tpu_custom_call.1} parent=11 // pred_fallthru
          _
        // Predicated region
        $region105: #{tpu_custom_call.1} parent=11 // pred_check
          %p834 = pneg %p630
        $region106: #{tpu_custom_call.1} parent=11 // pred_check_branch
          %836 = sbr.rel (%p834) target = $region108
        $region107: #{tpu_custom_call.1} parent=11 // pred_region
          _
        $region108: #{tpu_custom_call.1} parent=11 // pred_fallthru
          _
        // Predicated region
        $region109: #{tpu_custom_call.1} parent=11 // pred_check
          %p837 = pneg %p651
        $region110: #{tpu_custom_call.1} parent=11 // pred_check_branch
          %839 = sbr.rel (%p837) target = $region112
        $region111: #{tpu_custom_call.1} parent=11 // pred_region
          _
        $region112: #{tpu_custom_call.1} parent=11 // pred_fallthru
          _
        // Predicated region
        $region113: #{tpu_custom_call.1} parent=11 // pred_check
          %p840 = pneg %p672
        $region114: #{tpu_custom_call.1} parent=11 // pred_check_branch
          %842 = sbr.rel (%p840) target = $region116
        $region115: #{tpu_custom_call.1} parent=11 // pred_region
          _
        $region116: #{tpu_custom_call.1} parent=11 // pred_fallthru
          _
      $region12: #{tpu_custom_call.1} parent=5 // pred_fallthru
        _
      %p843 = scmp.lt.s32.totalorder %s74, 2
      // Predicated region
      $region117: #{tpu_custom_call.1} parent=5 // pred_check
        %p844 = pneg %p843
      $region118: #{tpu_custom_call.1} parent=5 // pred_check_branch
        %846 = sbr.rel (%p844) target = $region120
      $region119: #{tpu_custom_call.1} parent=5 // pred_region
        // Predicated region
        $region121: #{tpu_custom_call.1} parent=119 // pred_check
          %p847 = pneg %p94
        $region122: #{tpu_custom_call.1} parent=119 // pred_check_branch
          %849 = sbr.rel (%p847) target = $region124
        $region123: #{tpu_custom_call.1} parent=119 // pred_region
          %p850 = scmp.lt.s32.totalorder %s74, 1
          %s851 = scalar_select %p850, %s74, 1
          %s852 = smul.addr %s851, 8
          %s853 = scalar_lea.vmem %s1, %s852
        $region124: #{tpu_custom_call.1} parent=119 // pred_fallthru
          _
        // Predicated region
        $region125: #{tpu_custom_call.1} parent=119 // pred_check
          %p854 = pneg %p120
        $region126: #{tpu_custom_call.1} parent=119 // pred_check_branch
          %856 = sbr.rel (%p854) target = $region128
        $region127: #{tpu_custom_call.1} parent=119 // pred_region
          %p857 = scmp.lt.s32.totalorder %s74, 1
          %s858 = scalar_select %p857, %s74, 1
          %s859 = smul.addr %s858, 8
          %s860 = scalar_lea.vmem %s3, %s859
        $region128: #{tpu_custom_call.1} parent=119 // pred_fallthru
          _
      $region120: #{tpu_custom_call.1} parent=5 // pred_fallthru
        _
      %p861 = scmp.le.s32.totalorder 1, %s74
      %p862 = scmp.lt.s32.totalorder %s74, 3
      %p863 = pnand %p861, %p862
      %p864 = pneg %p863
      // Predicated region
      $region129: #{tpu_custom_call.1} parent=5 // pred_check
        _
      $region130: #{tpu_custom_call.1} parent=5 // pred_check_branch
        %866 = sbr.rel (%p863) target = $region132
      $region131: #{tpu_custom_call.1} parent=5 // pred_region
        %s867 = ssub.s32 %s74, 1
        %p868 = scmp.lt.s32.totalorder %s79, 1
        %s869 = scalar_select %p868, %s79, 1
        %s870 = smul.addr %s869, 8
        %s871 = scalar_lea.vmem %s1, %s870
        %p872 = pneg %p100
        %p873 = pneg %p97
        %p874 = scmp.lt.s32.totalorder %s79, 1
        %s875 = scalar_select %p874, %s79, 1
        %s876 = smul.addr %s875, 8
        %s877 = scalar_lea.vmem %s3, %s876
        %p878 = pneg %p126
        %p879 = pneg %p123
        %p880 = pneg %p147
        %p881 = pneg %p144
        %p882 = pneg %p168
        %p883 = pneg %p165
        %p884 = pneg %p189
        %p885 = pneg %p186
        %p886 = pneg %p210
        %p887 = pneg %p207
        %p888 = pneg %p231
        %p889 = pneg %p228
        %p890 = pneg %p252
        %p891 = pneg %p249
        %p892 = pneg %p273
        %p893 = pneg %p270
        %p894 = pneg %p294
        %p895 = pneg %p291
        %p896 = pneg %p315
        %p897 = pneg %p312
        %p898 = pneg %p336
        %p899 = pneg %p333
        %p900 = pneg %p357
        %p901 = pneg %p354
        %p902 = pneg %p378
        %p903 = pneg %p375
        %p904 = pneg %p399
        %p905 = pneg %p396
        %p906 = pneg %p420
        %p907 = pneg %p417
        %p908 = pneg %p441
        %p909 = pneg %p438
        %p910 = pneg %p462
        %p911 = pneg %p459
        %p912 = pneg %p483
        %p913 = pneg %p480
        %p914 = pneg %p504
        %p915 = pneg %p501
        %p916 = pneg %p525
        %p917 = pneg %p522
        %p918 = pneg %p546
        %p919 = pneg %p543
        %p920 = pneg %p567
        %p921 = pneg %p564
        %p922 = pneg %p588
        %p923 = pneg %p585
        %p924 = pneg %p609
        %p925 = pneg %p606
        %p926 = pneg %p630
        %p927 = pneg %p627
        %p928 = pneg %p651
        %p929 = pneg %p648
        %p930 = pneg %p672
        %p931 = pneg %p669
        %p932 = pneg %p698
        %p933 = pneg %p695
        %s934 = sand.u32 %s685, 1
        %s935 = scalar_lea.sflag [#allocation3], %s934
        %s936 = sand.u32 %s685, 1
        %s937 = smul.addr %s936, 8
        %s938 = scalar_lea.vmem [#allocation2], %s937
        %p939 = pneg %p724
        %p940 = pneg %p721
        %s941 = sand.u32 %s79, 1
        %s942 = scalar_lea.sflag [#allocation5], %s941
        %s943 = sand.u32 %s711, 1
        %s944 = smul.addr %s943, 16
        %s945 = scalar_lea.vmem [#allocation4], %s944
        %p946 = pneg %p750
        %p947 = pneg %p747
        %s948 = sand.u32 %s79, 1
        %s949 = scalar_lea.sflag [#allocation5], %s948
        %s950 = sand.u32 %s737, 1
        %s951 = smul.addr %s950, 16
        %s952 = scalar_lea.vmem [#allocation6], %s951
        %p953 = scmp.lt.s32.totalorder %s79, 1
        %s954 = scalar_select %p953, %s79, 1
        %s955 = smul.addr %s954, 8
        %s956 = scalar_lea.vmem %s1, %s955
        %p957 = scmp.lt.s32.totalorder %s79, 1
        %s958 = scalar_select %p957, %s79, 1
        %s959 = smul.addr %s958, 8
        %s960 = scalar_lea.vmem %s3, %s959
        %v961 = vld [vmem:[%s960] sm:$0xff]
        %v962 = vld [vmem:[%s956] sm:$0xff]
        %v963 = vld [vmem:[%s5] sm:$0xff]
        %v964 = vld [vmem:[%s5 + $0x8] sm:$0xff]
        %v965 = vld [vmem:[%s5 + $0x10] sm:$0xff]
        %v966 = vld [vmem:[%s5 + $0x18] sm:$0xff]
        %v967 = vld [vmem:[%s5 + $0x20] sm:$0xff]
        %v968 = vld [vmem:[%s5 + $0x28] sm:$0xff]
        %v969 = vld [vmem:[%s5 + $0x30] sm:$0xff]
        %v970 = vld [vmem:[%s5 + $0x38] sm:$0xff]
        %v971 = vld [vmem:[%s7] sm:$0x1]
        %v972 = vld [vmem:[%s7 + $0x1] sm:$0x1]
        %v973 = vld [vmem:[%s9] sm:$0xff]
        %v974 = vld [vmem:[%s9 + $0x8] sm:$0xff]
        %v975 = vld [vmem:[%s9 + $0x10] sm:$0xff]
        %v976 = vld [vmem:[%s9 + $0x18] sm:$0xff]
        %v977 = vld [vmem:[%s9 + $0x20] sm:$0xff]
        %v978 = vld [vmem:[%s9 + $0x28] sm:$0xff]
        %v979 = vld [vmem:[%s9 + $0x30] sm:$0xff]
        %v980 = vld [vmem:[%s9 + $0x38] sm:$0xff]
        %v981 = vld [vmem:[%s11] sm:$0x1]
        %v982 = vld [vmem:[%s11 + $0x1] sm:$0x1]
        %v983 = vld [vmem:[%s13] sm:$0xff]
        %v984 = vld [vmem:[%s13 + $0x8] sm:$0xff]
        %v985 = vld [vmem:[%s13 + $0x10] sm:$0xff]
        %v986 = vld [vmem:[%s13 + $0x18] sm:$0xff]
        %v987 = vld [vmem:[%s13 + $0x20] sm:$0xff]
        %v988 = vld [vmem:[%s13 + $0x28] sm:$0xff]
        %v989 = vld [vmem:[%s13 + $0x30] sm:$0xff]
        %v990 = vld [vmem:[%s13 + $0x38] sm:$0xff]
        %v991 = vld [vmem:[%s15] sm:$0x1]
        %v992 = vld [vmem:[%s15 + $0x1] sm:$0x1]
        %v993 = vld [vmem:[%s17] sm:$0xff]
        %v994 = vld [vmem:[%s17 + $0x8] sm:$0xff]
        %v995 = vld [vmem:[%s17 + $0x10] sm:$0xff]
        %v996 = vld [vmem:[%s17 + $0x18] sm:$0xff]
        %v997 = vld [vmem:[%s19] sm:$0x1]
        %v998 = vld [vmem:[%s21] sm:$0x1]
        %v999 = vld [vmem:[%s23] sm:$0x1]
        %v1002 = vlaneseq
        %v1003 = vshrl.u32 %v1002, 7
        %v1004 = vsub.s32 0, %v1003
        %v1005 = vrot.slane %v971, %v1004
        %v1006 = vlaneseq
        %v1007 = vshrl.u32 %v1006, 7
        %v1008 = vsub.s32 0, %v1007
        %v1009 = vrot.slane %v972, %v1008
        %vm1012 = vcmask 261120
        %v1014 = vsel %vm1012, %v961, 0
        %1016 = vmatprep.subr.mxu0 0.0
        %1017 = vmatpush1.msra.mxu0 %v963
        %1018 = vmatprep.subr.mxu0 0.0
        %1019 = vmatpush1.msra.mxu0 %v964
        %1020 = vmatprep.subr.mxu0 0.0
        %1021 = vmatpush1.msra.mxu0 %v965
        %1022 = vmatprep.subr.mxu0 0.0
        %1023 = vmatpush1.msra.mxu0 %v966
        %1024 = vmatprep.subr.mxu0 0.0
        %1025 = vmatpush1.msra.mxu0 0.0
        %1026 = vmatprep.subr.mxu0 0.0
        %1027 = vmatpush1.msra.mxu0 0.0
        %1028 = vmatprep.subr.mxu0 0.0
        %1029 = vmatpush1.msra.mxu0 0.0
        %1030 = vmatprep.subr.mxu0 0.0
        %1031 = vmatpush1.msra.mxu0 0.0
        %1032 = vmatprep.subr.mxu0 0.0
        %1033 = vmatpush1.msra.mxu0 0.0
        %1034 = vmatprep.subr.mxu0 0.0
        %1035 = vmatpush1.msra.mxu0 0.0
        %1036 = vmatprep.subr.mxu0 0.0
        %1037 = vmatpush1.msra.mxu0 0.0
        %1038 = vmatprep.subr.mxu0 0.0
        %1039 = vmatpush1.msra.mxu0 0.0
        %1040 = vmatprep.subr.mxu0 0.0
        %1041 = vmatpush1.msra.mxu0 0.0
        %1042 = vmatprep.subr.mxu0 0.0
        %1043 = vmatpush1.msra.mxu0 0.0
        %1044 = vmatprep.subr.mxu0 0.0
        %1045 = vmatpush1.msra.mxu0 0.0
        %1046 = vmatprep.subr.mxu0 0.0
        %1047 = vmatpush1.msra.mxu0 0.0
        %1048 = vmatprep.subr.mxu0 0.0
        %1049 = vmatpush1.msra.mxu0 0.0
        %1050 = vmatprep.subr.mxu0 0.0
        %1051 = vmatpush1.msra.mxu0 0.0
        %1052 = vmatprep.subr.mxu0 0.0
        %1053 = vmatpush1.msra.mxu0 0.0
        %1054 = vmatprep.subr.mxu0 0.0
        %1055 = vmatpush1.msra.mxu0 0.0
        %1056 = vmatprep.subr.mxu0 0.0
        %1057 = vmatpush1.msra.mxu0 0.0
        %1058 = vmatprep.subr.mxu0 0.0
        %1059 = vmatpush1.msra.mxu0 0.0
        %1060 = vmatprep.subr.mxu0 0.0
        %1061 = vmatpush1.msra.mxu0 0.0
        %1062 = vmatprep.subr.mxu0 0.0
        %1063 = vmatpush1.msra.mxu0 0.0
        %1064 = vmatprep.subr.mxu0 0.0
        %1065 = vmatpush1.msra.mxu0 0.0
        %1066 = vmatprep.subr.mxu0 0.0
        %1067 = vmatpush1.msra.mxu0 0.0
        %1068 = vmatprep.subr.mxu0 0.0
        %1069 = vmatpush1.msra.mxu0 0.0
        %1070 = vmatprep.subr.mxu0 0.0
        %1071 = vmatpush1.msra.mxu0 0.0
        %1072 = vmatprep.subr.mxu0 0.0
        %1073 = vmatpush1.msra.mxu0 0.0
        %1074 = vmatprep.subr.mxu0 0.0
        %1075 = vmatpush1.msra.mxu0 0.0
        %1076 = vmatprep.subr.mxu0 0.0
        %1077 = vmatpush1.msra.mxu0 0.0
        %1078 = vmatprep.subr.mxu0 0.0
        %1079 = vmatpush1.msra.mxu0 0.0
        %1080 = vmatprep.mubr.f32.mxu0 0.0
        %1081 = vmatmul.mubr.f32.gmra.mrb[0].mxu0 %v1014
        %v1082 = vpop.f32.mrb[0].mxu0
        %v1083 = vadd.f32 %v1005, %v1082
        %v1084 = vpop.f32.mrb[0].mxu0
        %1085 = vdwg.mxu0
        %1086 = vmatprep.subr.mxu0 0.0
        %1087 = vmatpush1.msra.mxu0 %v967
        %1088 = vmatprep.subr.mxu0 0.0
        %1089 = vmatpush1.msra.mxu0 %v968
        %1090 = vmatprep.subr.mxu0 0.0
        %1091 = vmatpush1.msra.mxu0 %v969
        %1092 = vmatprep.subr.mxu0 0.0
        %1093 = vmatpush1.msra.mxu0 %v970
        %1094 = vmatprep.subr.mxu0 0.0
        %1095 = vmatpush1.msra.mxu0 0.0
        %1096 = vmatprep.subr.mxu0 0.0
        %1097 = vmatpush1.msra.mxu0 0.0
        %1098 = vmatprep.subr.mxu0 0.0
        %1099 = vmatpush1.msra.mxu0 0.0
        %1100 = vmatprep.subr.mxu0 0.0
        %1101 = vmatpush1.msra.mxu0 0.0
        %1102 = vmatprep.subr.mxu0 0.0
        %1103 = vmatpush1.msra.mxu0 0.0
        %1104 = vmatprep.subr.mxu0 0.0
        %1105 = vmatpush1.msra.mxu0 0.0
        %1106 = vmatprep.subr.mxu0 0.0
        %1107 = vmatpush1.msra.mxu0 0.0
        %1108 = vmatprep.subr.mxu0 0.0
        %1109 = vmatpush1.msra.mxu0 0.0
        %1110 = vmatprep.subr.mxu0 0.0
        %1111 = vmatpush1.msra.mxu0 0.0
        %1112 = vmatprep.subr.mxu0 0.0
        %1113 = vmatpush1.msra.mxu0 0.0
        %1114 = vmatprep.subr.mxu0 0.0
        %1115 = vmatpush1.msra.mxu0 0.0
        %1116 = vmatprep.subr.mxu0 0.0
        %1117 = vmatpush1.msra.mxu0 0.0
        %1118 = vmatprep.subr.mxu0 0.0
        %1119 = vmatpush1.msra.mxu0 0.0
        %1120 = vmatprep.subr.mxu0 0.0
        %1121 = vmatpush1.msra.mxu0 0.0
        %1122 = vmatprep.subr.mxu0 0.0
        %1123 = vmatpush1.msra.mxu0 0.0
        %1124 = vmatprep.subr.mxu0 0.0
        %1125 = vmatpush1.msra.mxu0 0.0
        %1126 = vmatprep.subr.mxu0 0.0
        %1127 = vmatpush1.msra.mxu0 0.0
        %1128 = vmatprep.subr.mxu0 0.0
        %1129 = vmatpush1.msra.mxu0 0.0
        %1130 = vmatprep.subr.mxu0 0.0
        %1131 = vmatpush1.msra.mxu0 0.0
        %1132 = vmatprep.subr.mxu0 0.0
        %1133 = vmatpush1.msra.mxu0 0.0
        %1134 = vmatprep.subr.mxu0 0.0
        %1135 = vmatpush1.msra.mxu0 0.0
        %1136 = vmatprep.subr.mxu0 0.0
        %1137 = vmatpush1.msra.mxu0 0.0
        %1138 = vmatprep.subr.mxu0 0.0
        %1139 = vmatpush1.msra.mxu0 0.0
        %1140 = vmatprep.subr.mxu0 0.0
        %1141 = vmatpush1.msra.mxu0 0.0
        %1142 = vmatprep.subr.mxu0 0.0
        %1143 = vmatpush1.msra.mxu0 0.0
        %1144 = vmatprep.subr.mxu0 0.0
        %1145 = vmatpush1.msra.mxu0 0.0
        %1146 = vmatprep.subr.mxu0 0.0
        %1147 = vmatpush1.msra.mxu0 0.0
        %1148 = vmatprep.subr.mxu0 0.0
        %1149 = vmatpush1.msra.mxu0 0.0
        %1150 = vmatprep.mubr.f32.mxu0 0.0
        %1151 = vmatmul.mubr.f32.gmra.mrb[0].mxu0 %v1014
        %v1152 = vpop.f32.mrb[0].mxu0
        %v1153 = vadd.f32 %v1009, %v1152
        %v1154 = vpop.f32.mrb[0].mxu0
        %1155 = vdwg.mxu0
        %v1158 = vlaneseq
        %v1159 = vshrl.u32 %v1158, 7
        %v1160 = vsub.s32 0, %v1159
        %v1161 = vrot.slane %v981, %v1160
        %v1162 = vlaneseq
        %v1163 = vshrl.u32 %v1162, 7
        %v1164 = vsub.s32 0, %v1163
        %v1165 = vrot.slane %v982, %v1164
        %1168 = vmatprep.subr.mxu0 0.0
        %1169 = vmatpush1.msra.mxu0 %v973
        %1170 = vmatprep.subr.mxu0 0.0
        %1171 = vmatpush1.msra.mxu0 %v974
        %1172 = vmatprep.subr.mxu0 0.0
        %1173 = vmatpush1.msra.mxu0 %v975
        %1174 = vmatprep.subr.mxu0 0.0
        %1175 = vmatpush1.msra.mxu0 %v976
        %1176 = vmatprep.subr.mxu0 0.0
        %1177 = vmatpush1.msra.mxu0 0.0
        %1178 = vmatprep.subr.mxu0 0.0
        %1179 = vmatpush1.msra.mxu0 0.0
        %1180 = vmatprep.subr.mxu0 0.0
        %1181 = vmatpush1.msra.mxu0 0.0
        %1182 = vmatprep.subr.mxu0 0.0
        %1183 = vmatpush1.msra.mxu0 0.0
        %1184 = vmatprep.subr.mxu0 0.0
        %1185 = vmatpush1.msra.mxu0 0.0
        %1186 = vmatprep.subr.mxu0 0.0
        %1187 = vmatpush1.msra.mxu0 0.0
        %1188 = vmatprep.subr.mxu0 0.0
        %1189 = vmatpush1.msra.mxu0 0.0
        %1190 = vmatprep.subr.mxu0 0.0
        %1191 = vmatpush1.msra.mxu0 0.0
        %1192 = vmatprep.subr.mxu0 0.0
        %1193 = vmatpush1.msra.mxu0 0.0
        %1194 = vmatprep.subr.mxu0 0.0
        %1195 = vmatpush1.msra.mxu0 0.0
        %1196 = vmatprep.subr.mxu0 0.0
        %1197 = vmatpush1.msra.mxu0 0.0
        %1198 = vmatprep.subr.mxu0 0.0
        %1199 = vmatpush1.msra.mxu0 0.0
        %1200 = vmatprep.subr.mxu0 0.0
        %1201 = vmatpush1.msra.mxu0 0.0
        %1202 = vmatprep.subr.mxu0 0.0
        %1203 = vmatpush1.msra.mxu0 0.0
        %1204 = vmatprep.subr.mxu0 0.0
        %1205 = vmatpush1.msra.mxu0 0.0
        %1206 = vmatprep.subr.mxu0 0.0
        %1207 = vmatpush1.msra.mxu0 0.0
        %1208 = vmatprep.subr.mxu0 0.0
        %1209 = vmatpush1.msra.mxu0 0.0
        %1210 = vmatprep.subr.mxu0 0.0
        %1211 = vmatpush1.msra.mxu0 0.0
        %1212 = vmatprep.subr.mxu0 0.0
        %1213 = vmatpush1.msra.mxu0 0.0
        %1214 = vmatprep.subr.mxu0 0.0
        %1215 = vmatpush1.msra.mxu0 0.0
        %1216 = vmatprep.subr.mxu0 0.0
        %1217 = vmatpush1.msra.mxu0 0.0
        %1218 = vmatprep.subr.mxu0 0.0
        %1219 = vmatpush1.msra.mxu0 0.0
        %1220 = vmatprep.subr.mxu0 0.0
        %1221 = vmatpush1.msra.mxu0 0.0
        %1222 = vmatprep.subr.mxu0 0.0
        %1223 = vmatpush1.msra.mxu0 0.0
        %1224 = vmatprep.subr.mxu0 0.0
        %1225 = vmatpush1.msra.mxu0 0.0
        %1226 = vmatprep.subr.mxu0 0.0
        %1227 = vmatpush1.msra.mxu0 0.0
        %1228 = vmatprep.subr.mxu0 0.0
        %1229 = vmatpush1.msra.mxu0 0.0
        %1230 = vmatprep.subr.mxu0 0.0
        %1231 = vmatpush1.msra.mxu0 0.0
        %1232 = vmatprep.mubr.f32.mxu0 0.0
        %1233 = vmatmul.mubr.f32.gmra.mrb[0].mxu0 %v1014
        %v1234 = vpop.f32.mrb[0].mxu0
        %v1235 = vadd.f32 %v1161, %v1234
        %v1236 = vpop.f32.mrb[0].mxu0
        %1237 = vdwg.mxu0
        %1238 = vmatprep.subr.mxu0 0.0
        %1239 = vmatpush1.msra.mxu0 %v977
        %1240 = vmatprep.subr.mxu0 0.0
        %1241 = vmatpush1.msra.mxu0 %v978
        %1242 = vmatprep.subr.mxu0 0.0
        %1243 = vmatpush1.msra.mxu0 %v979
        %1244 = vmatprep.subr.mxu0 0.0
        %1245 = vmatpush1.msra.mxu0 %v980
        %1246 = vmatprep.subr.mxu0 0.0
        %1247 = vmatpush1.msra.mxu0 0.0
        %1248 = vmatprep.subr.mxu0 0.0
        %1249 = vmatpush1.msra.mxu0 0.0
        %1250 = vmatprep.subr.mxu0 0.0
        %1251 = vmatpush1.msra.mxu0 0.0
        %1252 = vmatprep.subr.mxu0 0.0
        %1253 = vmatpush1.msra.mxu0 0.0
        %1254 = vmatprep.subr.mxu0 0.0
        %1255 = vmatpush1.msra.mxu0 0.0
        %1256 = vmatprep.subr.mxu0 0.0
        %1257 = vmatpush1.msra.mxu0 0.0
        %1258 = vmatprep.subr.mxu0 0.0
        %1259 = vmatpush1.msra.mxu0 0.0
        %1260 = vmatprep.subr.mxu0 0.0
        %1261 = vmatpush1.msra.mxu0 0.0
        %1262 = vmatprep.subr.mxu0 0.0
        %1263 = vmatpush1.msra.mxu0 0.0
        %1264 = vmatprep.subr.mxu0 0.0
        %1265 = vmatpush1.msra.mxu0 0.0
        %1266 = vmatprep.subr.mxu0 0.0
        %1267 = vmatpush1.msra.mxu0 0.0
        %1268 = vmatprep.subr.mxu0 0.0
        %1269 = vmatpush1.msra.mxu0 0.0
        %1270 = vmatprep.subr.mxu0 0.0
        %1271 = vmatpush1.msra.mxu0 0.0
        %1272 = vmatprep.subr.mxu0 0.0
        %1273 = vmatpush1.msra.mxu0 0.0
        %1274 = vmatprep.subr.mxu0 0.0
        %1275 = vmatpush1.msra.mxu0 0.0
        %1276 = vmatprep.subr.mxu0 0.0
        %1277 = vmatpush1.msra.mxu0 0.0
        %1278 = vmatprep.subr.mxu0 0.0
        %1279 = vmatpush1.msra.mxu0 0.0
        %1280 = vmatprep.subr.mxu0 0.0
        %1281 = vmatpush1.msra.mxu0 0.0
        %1282 = vmatprep.subr.mxu0 0.0
        %1283 = vmatpush1.msra.mxu0 0.0
        %1284 = vmatprep.subr.mxu0 0.0
        %1285 = vmatpush1.msra.mxu0 0.0
        %1286 = vmatprep.subr.mxu0 0.0
        %1287 = vmatpush1.msra.mxu0 0.0
        %1288 = vmatprep.subr.mxu0 0.0
        %1289 = vmatpush1.msra.mxu0 0.0
        %1290 = vmatprep.subr.mxu0 0.0
        %1291 = vmatpush1.msra.mxu0 0.0
        %1292 = vmatprep.subr.mxu0 0.0
        %1293 = vmatpush1.msra.mxu0 0.0
        %1294 = vmatprep.subr.mxu0 0.0
        %1295 = vmatpush1.msra.mxu0 0.0
        %1296 = vmatprep.subr.mxu0 0.0
        %1297 = vmatpush1.msra.mxu0 0.0
        %1298 = vmatprep.subr.mxu0 0.0
        %1299 = vmatpush1.msra.mxu0 0.0
        %1300 = vmatprep.subr.mxu0 0.0
        %1301 = vmatpush1.msra.mxu0 0.0
        %1302 = vmatprep.mubr.f32.mxu0 0.0
        %1303 = vmatmul.mubr.f32.gmra.mrb[0].mxu0 %v1014
        %v1304 = vpop.f32.mrb[0].mxu0
        %v1305 = vadd.f32 %v1165, %v1304
        %v1306 = vpop.f32.mrb[0].mxu0
        %1307 = vdwg.mxu0
        %v1310 = vlaneseq
        %v1311 = vshrl.u32 %v1310, 7
        %v1312 = vsub.s32 0, %v1311
        %v1313 = vrot.slane %v991, %v1312
        %v1314 = vlaneseq
        %v1315 = vshrl.u32 %v1314, 7
        %v1316 = vsub.s32 0, %v1315
        %v1317 = vrot.slane %v992, %v1316
        %1320 = vmatprep.subr.mxu0 0.0
        %1321 = vmatpush1.msra.mxu0 %v983
        %1322 = vmatprep.subr.mxu0 0.0
        %1323 = vmatpush1.msra.mxu0 %v984
        %1324 = vmatprep.subr.mxu0 0.0
        %1325 = vmatpush1.msra.mxu0 %v985
        %1326 = vmatprep.subr.mxu0 0.0
        %1327 = vmatpush1.msra.mxu0 %v986
        %1328 = vmatprep.subr.mxu0 0.0
        %1329 = vmatpush1.msra.mxu0 0.0
        %1330 = vmatprep.subr.mxu0 0.0
        %1331 = vmatpush1.msra.mxu0 0.0
        %1332 = vmatprep.subr.mxu0 0.0
        %1333 = vmatpush1.msra.mxu0 0.0
        %1334 = vmatprep.subr.mxu0 0.0
        %1335 = vmatpush1.msra.mxu0 0.0
        %1336 = vmatprep.subr.mxu0 0.0
        %1337 = vmatpush1.msra.mxu0 0.0
        %1338 = vmatprep.subr.mxu0 0.0
        %1339 = vmatpush1.msra.mxu0 0.0
        %1340 = vmatprep.subr.mxu0 0.0
        %1341 = vmatpush1.msra.mxu0 0.0
        %1342 = vmatprep.subr.mxu0 0.0
        %1343 = vmatpush1.msra.mxu0 0.0
        %1344 = vmatprep.subr.mxu0 0.0
        %1345 = vmatpush1.msra.mxu0 0.0
        %1346 = vmatprep.subr.mxu0 0.0
        %1347 = vmatpush1.msra.mxu0 0.0
        %1348 = vmatprep.subr.mxu0 0.0
        %1349 = vmatpush1.msra.mxu0 0.0
        %1350 = vmatprep.subr.mxu0 0.0
        %1351 = vmatpush1.msra.mxu0 0.0
        %1352 = vmatprep.subr.mxu0 0.0
        %1353 = vmatpush1.msra.mxu0 0.0
        %1354 = vmatprep.subr.mxu0 0.0
        %1355 = vmatpush1.msra.mxu0 0.0
        %1356 = vmatprep.subr.mxu0 0.0
        %1357 = vmatpush1.msra.mxu0 0.0
        %1358 = vmatprep.subr.mxu0 0.0
        %1359 = vmatpush1.msra.mxu0 0.0
        %1360 = vmatprep.subr.mxu0 0.0
        %1361 = vmatpush1.msra.mxu0 0.0
        %1362 = vmatprep.subr.mxu0 0.0
        %1363 = vmatpush1.msra.mxu0 0.0
        %1364 = vmatprep.subr.mxu0 0.0
        %1365 = vmatpush1.msra.mxu0 0.0
        %1366 = vmatprep.subr.mxu0 0.0
        %1367 = vmatpush1.msra.mxu0 0.0
        %1368 = vmatprep.subr.mxu0 0.0
        %1369 = vmatpush1.msra.mxu0 0.0
        %1370 = vmatprep.subr.mxu0 0.0
        %1371 = vmatpush1.msra.mxu0 0.0
        %1372 = vmatprep.subr.mxu0 0.0
        %1373 = vmatpush1.msra.mxu0 0.0
        %1374 = vmatprep.subr.mxu0 0.0
        %1375 = vmatpush1.msra.mxu0 0.0
        %1376 = vmatprep.subr.mxu0 0.0
        %1377 = vmatpush1.msra.mxu0 0.0
        %1378 = vmatprep.subr.mxu0 0.0
        %1379 = vmatpush1.msra.mxu0 0.0
        %1380 = vmatprep.subr.mxu0 0.0
        %1381 = vmatpush1.msra.mxu0 0.0
        %1382 = vmatprep.subr.mxu0 0.0
        %1383 = vmatpush1.msra.mxu0 0.0
        %1384 = vmatprep.mubr.f32.mxu0 0.0
        %1385 = vmatmul.mubr.f32.gmra.mrb[0].mxu0 %v1014
        %v1386 = vpop.f32.mrb[0].mxu0
        %v1387 = vadd.f32 %v1313, %v1386
        %v1388 = vpop.f32.mrb[0].mxu0
        %1389 = vdwg.mxu0
        %1390 = vmatprep.subr.mxu0 0.0
        %1391 = vmatpush1.msra.mxu0 %v987
        %1392 = vmatprep.subr.mxu0 0.0
        %1393 = vmatpush1.msra.mxu0 %v988
        %1394 = vmatprep.subr.mxu0 0.0
        %1395 = vmatpush1.msra.mxu0 %v989
        %1396 = vmatprep.subr.mxu0 0.0
        %1397 = vmatpush1.msra.mxu0 %v990
        %1398 = vmatprep.subr.mxu0 0.0
        %1399 = vmatpush1.msra.mxu0 0.0
        %1400 = vmatprep.subr.mxu0 0.0
        %1401 = vmatpush1.msra.mxu0 0.0
        %1402 = vmatprep.subr.mxu0 0.0
        %1403 = vmatpush1.msra.mxu0 0.0
        %1404 = vmatprep.subr.mxu0 0.0
        %1405 = vmatpush1.msra.mxu0 0.0
        %1406 = vmatprep.subr.mxu0 0.0
        %1407 = vmatpush1.msra.mxu0 0.0
        %1408 = vmatprep.subr.mxu0 0.0
        %1409 = vmatpush1.msra.mxu0 0.0
        %1410 = vmatprep.subr.mxu0 0.0
        %1411 = vmatpush1.msra.mxu0 0.0
        %1412 = vmatprep.subr.mxu0 0.0
        %1413 = vmatpush1.msra.mxu0 0.0
        %1414 = vmatprep.subr.mxu0 0.0
        %1415 = vmatpush1.msra.mxu0 0.0
        %1416 = vmatprep.subr.mxu0 0.0
        %1417 = vmatpush1.msra.mxu0 0.0
        %1418 = vmatprep.subr.mxu0 0.0
        %1419 = vmatpush1.msra.mxu0 0.0
        %1420 = vmatprep.subr.mxu0 0.0
        %1421 = vmatpush1.msra.mxu0 0.0
        %1422 = vmatprep.subr.mxu0 0.0
        %1423 = vmatpush1.msra.mxu0 0.0
        %1424 = vmatprep.subr.mxu0 0.0
        %1425 = vmatpush1.msra.mxu0 0.0
        %1426 = vmatprep.subr.mxu0 0.0
        %1427 = vmatpush1.msra.mxu0 0.0
        %1428 = vmatprep.subr.mxu0 0.0
        %1429 = vmatpush1.msra.mxu0 0.0
        %1430 = vmatprep.subr.mxu0 0.0
        %1431 = vmatpush1.msra.mxu0 0.0
        %1432 = vmatprep.subr.mxu0 0.0
        %1433 = vmatpush1.msra.mxu0 0.0
        %1434 = vmatprep.subr.mxu0 0.0
        %1435 = vmatpush1.msra.mxu0 0.0
        %1436 = vmatprep.subr.mxu0 0.0
        %1437 = vmatpush1.msra.mxu0 0.0
        %1438 = vmatprep.subr.mxu0 0.0
        %1439 = vmatpush1.msra.mxu0 0.0
        %1440 = vmatprep.subr.mxu0 0.0
        %1441 = vmatpush1.msra.mxu0 0.0
        %1442 = vmatprep.subr.mxu0 0.0
        %1443 = vmatpush1.msra.mxu0 0.0
        %1444 = vmatprep.subr.mxu0 0.0
        %1445 = vmatpush1.msra.mxu0 0.0
        %1446 = vmatprep.subr.mxu0 0.0
        %1447 = vmatpush1.msra.mxu0 0.0
        %1448 = vmatprep.subr.mxu0 0.0
        %1449 = vmatpush1.msra.mxu0 0.0
        %1450 = vmatprep.subr.mxu0 0.0
        %1451 = vmatpush1.msra.mxu0 0.0
        %1452 = vmatprep.subr.mxu0 0.0
        %1453 = vmatpush1.msra.mxu0 0.0
        %1454 = vmatprep.mubr.f32.mxu0 0.0
        %1455 = vmatmul.mubr.f32.gmra.mrb[0].mxu0 %v1014
        %v1456 = vpop.f32.mrb[0].mxu0
        %v1457 = vadd.f32 %v1317, %v1456
        %v1458 = vpop.f32.mrb[0].mxu0
        %1459 = vdwg.mxu0
        %vm1460 = vcmask 130048
        %v1462 = vsel %vm1460, %v1083, 0
        %v1465 = vsel %vm1460, %v1235, 0
        %1467 = vmatprep.subr.mxu0 0.0
        %1468 = vmatpush1.xpose.msra.mxu0 %v1465
        %1469 = vmatprep.subr.mxu0 0.0
        %1470 = vmatpush1.xpose.msra.mxu0 0.0
        %1471 = vmatprep.subr.mxu0 0.0
        %1472 = vmatpush1.xpose.msra.mxu0 0.0
        %1473 = vmatprep.subr.mxu0 0.0
        %1474 = vmatpush1.xpose.msra.mxu0 0.0
        %1475 = vmatprep.subr.mxu0 0.0
        %1476 = vmatpush1.xpose.msra.mxu0 0.0
        %1477 = vmatprep.subr.mxu0 0.0
        %1478 = vmatpush1.xpose.msra.mxu0 0.0
        %1479 = vmatprep.subr.mxu0 0.0
        %1480 = vmatpush1.xpose.msra.mxu0 0.0
        %1481 = vmatprep.subr.mxu0 0.0
        %1482 = vmatpush1.xpose.msra.mxu0 0.0
        %1483 = vmatprep.subr.mxu0 0.0
        %1484 = vmatpush1.xpose.msra.mxu0 0.0
        %1485 = vmatprep.subr.mxu0 0.0
        %1486 = vmatpush1.xpose.msra.mxu0 0.0
        %1487 = vmatprep.subr.mxu0 0.0
        %1488 = vmatpush1.xpose.msra.mxu0 0.0
        %1489 = vmatprep.subr.mxu0 0.0
        %1490 = vmatpush1.xpose.msra.mxu0 0.0
        %1491 = vmatprep.subr.mxu0 0.0
        %1492 = vmatpush1.xpose.msra.mxu0 0.0
        %1493 = vmatprep.subr.mxu0 0.0
        %1494 = vmatpush1.xpose.msra.mxu0 0.0
        %1495 = vmatprep.subr.mxu0 0.0
        %1496 = vmatpush1.xpose.msra.mxu0 0.0
        %1497 = vmatprep.subr.mxu0 0.0
        %1498 = vmatpush1.xpose.msra.mxu0 0.0
        %1499 = vmatprep.subr.mxu0 0.0
        %1500 = vmatpush1.xpose.msra.mxu0 0.0
        %1501 = vmatprep.subr.mxu0 0.0
        %1502 = vmatpush1.xpose.msra.mxu0 0.0
        %1503 = vmatprep.subr.mxu0 0.0
        %1504 = vmatpush1.xpose.msra.mxu0 0.0
        %1505 = vmatprep.subr.mxu0 0.0
        %1506 = vmatpush1.xpose.msra.mxu0 0.0
        %1507 = vmatprep.subr.mxu0 0.0
        %1508 = vmatpush1.xpose.msra.mxu0 0.0
        %1509 = vmatprep.subr.mxu0 0.0
        %1510 = vmatpush1.xpose.msra.mxu0 0.0
        %1511 = vmatprep.subr.mxu0 0.0
        %1512 = vmatpush1.xpose.msra.mxu0 0.0
        %1513 = vmatprep.subr.mxu0 0.0
        %1514 = vmatpush1.xpose.msra.mxu0 0.0
        %1515 = vmatprep.subr.mxu0 0.0
        %1516 = vmatpush1.xpose.msra.mxu0 0.0
        %1517 = vmatprep.subr.mxu0 0.0
        %1518 = vmatpush1.xpose.msra.mxu0 0.0
        %1519 = vmatprep.subr.mxu0 0.0
        %1520 = vmatpush1.xpose.msra.mxu0 0.0
        %1521 = vmatprep.subr.mxu0 0.0
        %1522 = vmatpush1.xpose.msra.mxu0 0.0
        %1523 = vmatprep.subr.mxu0 0.0
        %1524 = vmatpush1.xpose.msra.mxu0 0.0
        %1525 = vmatprep.subr.mxu0 0.0
        %1526 = vmatpush1.xpose.msra.mxu0 0.0
        %1527 = vmatprep.subr.mxu0 0.0
        %1528 = vmatpush1.xpose.msra.mxu0 0.0
        %1529 = vmatprep.subr.mxu0 0.0
        %1530 = vmatpush1.xpose.msra.mxu0 0.0
        %1531 = vmatprep.mubr.f32.mxu0 0.0
        %1532 = vmatmul.mubr.f32.gmra.mrb[0].mxu0 %v1462
        %v1533 = vpop.f32.mrb[0].mxu0
        %v1534 = vadd.f32 0.0, %v1533
        %v1535 = vpop.f32.mrb[0].mxu0
        %1536 = vdwg.mxu0
        %v1538 = vsel %vm1460, %v1153, 0
        %v1541 = vsel %vm1460, %v1305, 0
        %1543 = vmatprep.subr.mxu0 0.0
        %1544 = vmatpush1.xpose.msra.mxu0 %v1541
        %1545 = vmatprep.subr.mxu0 0.0
        %1546 = vmatpush1.xpose.msra.mxu0 0.0
        %1547 = vmatprep.subr.mxu0 0.0
        %1548 = vmatpush1.xpose.msra.mxu0 0.0
        %1549 = vmatprep.subr.mxu0 0.0
        %1550 = vmatpush1.xpose.msra.mxu0 0.0
        %1551 = vmatprep.subr.mxu0 0.0
        %1552 = vmatpush1.xpose.msra.mxu0 0.0
        %1553 = vmatprep.subr.mxu0 0.0
        %1554 = vmatpush1.xpose.msra.mxu0 0.0
        %1555 = vmatprep.subr.mxu0 0.0
        %1556 = vmatpush1.xpose.msra.mxu0 0.0
        %1557 = vmatprep.subr.mxu0 0.0
        %1558 = vmatpush1.xpose.msra.mxu0 0.0
        %1559 = vmatprep.subr.mxu0 0.0
        %1560 = vmatpush1.xpose.msra.mxu0 0.0
        %1561 = vmatprep.subr.mxu0 0.0
        %1562 = vmatpush1.xpose.msra.mxu0 0.0
        %1563 = vmatprep.subr.mxu0 0.0
        %1564 = vmatpush1.xpose.msra.mxu0 0.0
        %1565 = vmatprep.subr.mxu0 0.0
        %1566 = vmatpush1.xpose.msra.mxu0 0.0
        %1567 = vmatprep.subr.mxu0 0.0
        %1568 = vmatpush1.xpose.msra.mxu0 0.0
        %1569 = vmatprep.subr.mxu0 0.0
        %1570 = vmatpush1.xpose.msra.mxu0 0.0
        %1571 = vmatprep.subr.mxu0 0.0
        %1572 = vmatpush1.xpose.msra.mxu0 0.0
        %1573 = vmatprep.subr.mxu0 0.0
        %1574 = vmatpush1.xpose.msra.mxu0 0.0
        %1575 = vmatprep.subr.mxu0 0.0
        %1576 = vmatpush1.xpose.msra.mxu0 0.0
        %1577 = vmatprep.subr.mxu0 0.0
        %1578 = vmatpush1.xpose.msra.mxu0 0.0
        %1579 = vmatprep.subr.mxu0 0.0
        %1580 = vmatpush1.xpose.msra.mxu0 0.0
        %1581 = vmatprep.subr.mxu0 0.0
        %1582 = vmatpush1.xpose.msra.mxu0 0.0
        %1583 = vmatprep.subr.mxu0 0.0
        %1584 = vmatpush1.xpose.msra.mxu0 0.0
        %1585 = vmatprep.subr.mxu0 0.0
        %1586 = vmatpush1.xpose.msra.mxu0 0.0
        %1587 = vmatprep.subr.mxu0 0.0
        %1588 = vmatpush1.xpose.msra.mxu0 0.0
        %1589 = vmatprep.subr.mxu0 0.0
        %1590 = vmatpush1.xpose.msra.mxu0 0.0
        %1591 = vmatprep.subr.mxu0 0.0
        %1592 = vmatpush1.xpose.msra.mxu0 0.0
        %1593 = vmatprep.subr.mxu0 0.0
        %1594 = vmatpush1.xpose.msra.mxu0 0.0
        %1595 = vmatprep.subr.mxu0 0.0
        %1596 = vmatpush1.xpose.msra.mxu0 0.0
        %1597 = vmatprep.subr.mxu0 0.0
        %1598 = vmatpush1.xpose.msra.mxu0 0.0
        %1599 = vmatprep.subr.mxu0 0.0
        %1600 = vmatpush1.xpose.msra.mxu0 0.0
        %1601 = vmatprep.subr.mxu0 0.0
        %1602 = vmatpush1.xpose.msra.mxu0 0.0
        %1603 = vmatprep.subr.mxu0 0.0
        %1604 = vmatpush1.xpose.msra.mxu0 0.0
        %1605 = vmatprep.subr.mxu0 0.0
        %1606 = vmatpush1.xpose.msra.mxu0 0.0
        %1607 = vmatprep.mubr.f32.mxu0 0.0
        %1608 = vmatmul.mubr.f32.gmra.mrb[0].mxu0 %v1538
        %v1609 = vpop.f32.mrb[0].mxu0
        %v1610 = vadd.f32 0.0, %v1609
        %v1611 = vpop.f32.mrb[0].mxu0
        %1612 = vdwg.mxu0
        %v1613 = vmul.f32 %v1534, 0.25
        %v1614 = vmul.f32 %v1610, 0.25
        %vm1615 = vcmask 64512
        %v1616 = vsel %vm1615, %v1613, -inf
        %1617 = vmax.xlane.f32.xlu0 %v1616
        %v1618 = vpop.xlane.xlu0 %1617
        %v1619 = vsel %vm1615, %v1614, -inf
        %1620 = vmax.xlane.f32.xlu0 %v1619
        %v1621 = vpop.xlane.xlu0 %1620
        %v1622 = vsub.f32 %v1613, %v1618
        %v1623 = vsub.f32 %v1614, %v1621
        %v1624 = vmul.f32 %v1622, 1.442695
        %v1625 = vpow.pop %v1624
        %v1626 = vmul.f32 %v1623, 1.442695
        %v1627 = vpow.pop %v1626
        %v1628 = vsel %vm1615, %v1625, 0.0
        %1629 = vadd.xlane.f32.xlu0 %v1628
        %v1630 = vpop.xlane.xlu0 %1629
        %v1631 = vsel %vm1615, %v1627, 0.0
        %1632 = vadd.xlane.f32.xlu0 %v1631
        %v1633 = vpop.xlane.xlu0 %1632
        %v1634 = vrcp.pop %v1630
        %v1635 = vrcp.pop %v1633
        %v1636 = vmul.f32 %v1625, %v1634
        %v1637 = vmul.f32 %v1627, %v1635
        %1638 = vst.msk [vmem:[%s945] sm:$0xff] %vm1615, %v1636
        %1639 = vst.msk [vmem:[%s945 + $0x8] sm:$0xff] %vm1615, %v1637
        %v1641 = vsel %vm1615, %v1636, 0
        %1643 = vmatprep.subr.mxu0 0.0
        %1644 = vmatpush1.msra.mxu0 %v1387
        %1645 = vmatprep.subr.mxu0 0.0
        %1646 = vmatpush1.msra.mxu0 0.0
        %1647 = vmatprep.subr.mxu0 0.0
        %1648 = vmatpush1.msra.mxu0 0.0
        %1649 = vmatprep.subr.mxu0 0.0
        %1650 = vmatpush1.msra.mxu0 0.0
        %1651 = vmatprep.subr.mxu0 0.0
        %1652 = vmatpush1.msra.mxu0 0.0
        %1653 = vmatprep.subr.mxu0 0.0
        %1654 = vmatpush1.msra.mxu0 0.0
        %1655 = vmatprep.subr.mxu0 0.0
        %1656 = vmatpush1.msra.mxu0 0.0
        %1657 = vmatprep.subr.mxu0 0.0
        %1658 = vmatpush1.msra.mxu0 0.0
        %1659 = vmatprep.subr.mxu0 0.0
        %1660 = vmatpush1.msra.mxu0 0.0
        %1661 = vmatprep.subr.mxu0 0.0
        %1662 = vmatpush1.msra.mxu0 0.0
        %1663 = vmatprep.subr.mxu0 0.0
        %1664 = vmatpush1.msra.mxu0 0.0
        %1665 = vmatprep.subr.mxu0 0.0
        %1666 = vmatpush1.msra.mxu0 0.0
        %1667 = vmatprep.subr.mxu0 0.0
        %1668 = vmatpush1.msra.mxu0 0.0
        %1669 = vmatprep.subr.mxu0 0.0
        %1670 = vmatpush1.msra.mxu0 0.0
        %1671 = vmatprep.subr.mxu0 0.0
        %1672 = vmatpush1.msra.mxu0 0.0
        %1673 = vmatprep.subr.mxu0 0.0
        %1674 = vmatpush1.msra.mxu0 0.0
        %1675 = vmatprep.subr.mxu0 0.0
        %1676 = vmatpush1.msra.mxu0 0.0
        %1677 = vmatprep.subr.mxu0 0.0
        %1678 = vmatpush1.msra.mxu0 0.0
        %1679 = vmatprep.subr.mxu0 0.0
        %1680 = vmatpush1.msra.mxu0 0.0
        %1681 = vmatprep.subr.mxu0 0.0
        %1682 = vmatpush1.msra.mxu0 0.0
        %1683 = vmatprep.subr.mxu0 0.0
        %1684 = vmatpush1.msra.mxu0 0.0
        %1685 = vmatprep.subr.mxu0 0.0
        %1686 = vmatpush1.msra.mxu0 0.0
        %1687 = vmatprep.subr.mxu0 0.0
        %1688 = vmatpush1.msra.mxu0 0.0
        %1689 = vmatprep.subr.mxu0 0.0
        %1690 = vmatpush1.msra.mxu0 0.0
        %1691 = vmatprep.subr.mxu0 0.0
        %1692 = vmatpush1.msra.mxu0 0.0
        %1693 = vmatprep.subr.mxu0 0.0
        %1694 = vmatpush1.msra.mxu0 0.0
        %1695 = vmatprep.subr.mxu0 0.0
        %1696 = vmatpush1.msra.mxu0 0.0
        %1697 = vmatprep.subr.mxu0 0.0
        %1698 = vmatpush1.msra.mxu0 0.0
        %1699 = vmatprep.subr.mxu0 0.0
        %1700 = vmatpush1.msra.mxu0 0.0
        %1701 = vmatprep.subr.mxu0 0.0
        %1702 = vmatpush1.msra.mxu0 0.0
        %1703 = vmatprep.subr.mxu0 0.0
        %1704 = vmatpush1.msra.mxu0 0.0
        %1705 = vmatprep.subr.mxu0 0.0
        %1706 = vmatpush1.msra.mxu0 0.0
        %1707 = vmatprep.mubr.f32.mxu0 0.0
        %1708 = vmatmul.mubr.f32.gmra.mrb[0].mxu0 %v1641
        %v1709 = vpop.f32.mrb[0].mxu0
        %v1710 = vadd.f32 0.0, %v1709
        %v1711 = vpop.f32.mrb[0].mxu0
        %1712 = vdwg.mxu0
        %v1714 = vsel %vm1615, %v1637, 0
        %1716 = vmatprep.subr.mxu0 0.0
        %1717 = vmatpush1.msra.mxu0 %v1457
        %1718 = vmatprep.subr.mxu0 0.0
        %1719 = vmatpush1.msra.mxu0 0.0
        %1720 = vmatprep.subr.mxu0 0.0
        %1721 = vmatpush1.msra.mxu0 0.0
        %1722 = vmatprep.subr.mxu0 0.0
        %1723 = vmatpush1.msra.mxu0 0.0
        %1724 = vmatprep.subr.mxu0 0.0
        %1725 = vmatpush1.msra.mxu0 0.0
        %1726 = vmatprep.subr.mxu0 0.0
        %1727 = vmatpush1.msra.mxu0 0.0
        %1728 = vmatprep.subr.mxu0 0.0
        %1729 = vmatpush1.msra.mxu0 0.0
        %1730 = vmatprep.subr.mxu0 0.0
        %1731 = vmatpush1.msra.mxu0 0.0
        %1732 = vmatprep.subr.mxu0 0.0
        %1733 = vmatpush1.msra.mxu0 0.0
        %1734 = vmatprep.subr.mxu0 0.0
        %1735 = vmatpush1.msra.mxu0 0.0
        %1736 = vmatprep.subr.mxu0 0.0
        %1737 = vmatpush1.msra.mxu0 0.0
        %1738 = vmatprep.subr.mxu0 0.0
        %1739 = vmatpush1.msra.mxu0 0.0
        %1740 = vmatprep.subr.mxu0 0.0
        %1741 = vmatpush1.msra.mxu0 0.0
        %1742 = vmatprep.subr.mxu0 0.0
        %1743 = vmatpush1.msra.mxu0 0.0
        %1744 = vmatprep.subr.mxu0 0.0
        %1745 = vmatpush1.msra.mxu0 0.0
        %1746 = vmatprep.subr.mxu0 0.0
        %1747 = vmatpush1.msra.mxu0 0.0
        %1748 = vmatprep.subr.mxu0 0.0
        %1749 = vmatpush1.msra.mxu0 0.0
        %1750 = vmatprep.subr.mxu0 0.0
        %1751 = vmatpush1.msra.mxu0 0.0
        %1752 = vmatprep.subr.mxu0 0.0
        %1753 = vmatpush1.msra.mxu0 0.0
        %1754 = vmatprep.subr.mxu0 0.0
        %1755 = vmatpush1.msra.mxu0 0.0
        %1756 = vmatprep.subr.mxu0 0.0
        %1757 = vmatpush1.msra.mxu0 0.0
        %1758 = vmatprep.subr.mxu0 0.0
        %1759 = vmatpush1.msra.mxu0 0.0
        %1760 = vmatprep.subr.mxu0 0.0
        %1761 = vmatpush1.msra.mxu0 0.0
        %1762 = vmatprep.subr.mxu0 0.0
        %1763 = vmatpush1.msra.mxu0 0.0
        %1764 = vmatprep.subr.mxu0 0.0
        %1765 = vmatpush1.msra.mxu0 0.0
        %1766 = vmatprep.subr.mxu0 0.0
        %1767 = vmatpush1.msra.mxu0 0.0
        %1768 = vmatprep.subr.mxu0 0.0
        %1769 = vmatpush1.msra.mxu0 0.0
        %1770 = vmatprep.subr.mxu0 0.0
        %1771 = vmatpush1.msra.mxu0 0.0
        %1772 = vmatprep.subr.mxu0 0.0
        %1773 = vmatpush1.msra.mxu0 0.0
        %1774 = vmatprep.subr.mxu0 0.0
        %1775 = vmatpush1.msra.mxu0 0.0
        %1776 = vmatprep.subr.mxu0 0.0
        %1777 = vmatpush1.msra.mxu0 0.0
        %1778 = vmatprep.subr.mxu0 0.0
        %1779 = vmatpush1.msra.mxu0 0.0
        %1780 = vmatprep.mubr.f32.mxu0 0.0
        %1781 = vmatmul.mubr.f32.gmra.mrb[0].mxu0 %v1714
        %v1782 = vpop.f32.mrb[0].mxu0
        %v1783 = vadd.f32 0.0, %v1782
        %v1784 = vpop.f32.mrb[0].mxu0
        %1785 = vdwg.mxu0
        %v1787 = vsel %vm1460, %v1710, 0
        %1789 = vmatprep.subr.mxu0 0.0
        %1790 = vmatpush1.msra.mxu0 %v993
        %1791 = vmatprep.subr.mxu0 0.0
        %1792 = vmatpush1.msra.mxu0 %v994
        %1793 = vmatprep.subr.mxu0 0.0
        %1794 = vmatpush1.msra.mxu0 0.0
        %1795 = vmatprep.subr.mxu0 0.0
        %1796 = vmatpush1.msra.mxu0 0.0
        %1797 = vmatprep.subr.mxu0 0.0
        %1798 = vmatpush1.msra.mxu0 0.0
        %1799 = vmatprep.subr.mxu0 0.0
        %1800 = vmatpush1.msra.mxu0 0.0
        %1801 = vmatprep.subr.mxu0 0.0
        %1802 = vmatpush1.msra.mxu0 0.0
        %1803 = vmatprep.subr.mxu0 0.0
        %1804 = vmatpush1.msra.mxu0 0.0
        %1805 = vmatprep.subr.mxu0 0.0
        %1806 = vmatpush1.msra.mxu0 0.0
        %1807 = vmatprep.subr.mxu0 0.0
        %1808 = vmatpush1.msra.mxu0 0.0
        %1809 = vmatprep.subr.mxu0 0.0
        %1810 = vmatpush1.msra.mxu0 0.0
        %1811 = vmatprep.subr.mxu0 0.0
        %1812 = vmatpush1.msra.mxu0 0.0
        %1813 = vmatprep.subr.mxu0 0.0
        %1814 = vmatpush1.msra.mxu0 0.0
        %1815 = vmatprep.subr.mxu0 0.0
        %1816 = vmatpush1.msra.mxu0 0.0
        %1817 = vmatprep.subr.mxu0 0.0
        %1818 = vmatpush1.msra.mxu0 0.0
        %1819 = vmatprep.subr.mxu0 0.0
        %1820 = vmatpush1.msra.mxu0 0.0
        %1821 = vmatprep.subr.mxu0 0.0
        %1822 = vmatpush1.msra.mxu0 0.0
        %1823 = vmatprep.subr.mxu0 0.0
        %1824 = vmatpush1.msra.mxu0 0.0
        %1825 = vmatprep.subr.mxu0 0.0
        %1826 = vmatpush1.msra.mxu0 0.0
        %1827 = vmatprep.subr.mxu0 0.0
        %1828 = vmatpush1.msra.mxu0 0.0
        %1829 = vmatprep.subr.mxu0 0.0
        %1830 = vmatpush1.msra.mxu0 0.0
        %1831 = vmatprep.subr.mxu0 0.0
        %1832 = vmatpush1.msra.mxu0 0.0
        %1833 = vmatprep.subr.mxu0 0.0
        %1834 = vmatpush1.msra.mxu0 0.0
        %1835 = vmatprep.subr.mxu0 0.0
        %1836 = vmatpush1.msra.mxu0 0.0
        %1837 = vmatprep.subr.mxu0 0.0
        %1838 = vmatpush1.msra.mxu0 0.0
        %1839 = vmatprep.subr.mxu0 0.0
        %1840 = vmatpush1.msra.mxu0 0.0
        %1841 = vmatprep.subr.mxu0 0.0
        %1842 = vmatpush1.msra.mxu0 0.0
        %1843 = vmatprep.subr.mxu0 0.0
        %1844 = vmatpush1.msra.mxu0 0.0
        %1845 = vmatprep.subr.mxu0 0.0
        %1846 = vmatpush1.msra.mxu0 0.0
        %1847 = vmatprep.subr.mxu0 0.0
        %1848 = vmatpush1.msra.mxu0 0.0
        %1849 = vmatprep.subr.mxu0 0.0
        %1850 = vmatpush1.msra.mxu0 0.0
        %1851 = vmatprep.subr.mxu0 0.0
        %1852 = vmatpush1.msra.mxu0 0.0
        %1853 = vmatprep.mubr.f32.mxu0 0.0
        %1854 = vmatmul.mubr.f32.gmra.mrb[0].mxu0 %v1787
        %v1855 = vpop.f32.mrb[0].mxu0
        %v1856 = vadd.f32 0.0, %v1855
        %v1857 = vpop.f32.mrb[0].mxu0
        %1858 = vdwg.mxu0
        %v1860 = vsel %vm1460, %v1783, 0
        %1862 = vmatprep.subr.mxu0 0.0
        %1863 = vmatpush1.msra.mxu0 %v995
        %1864 = vmatprep.subr.mxu0 0.0
        %1865 = vmatpush1.msra.mxu0 %v996
        %1866 = vmatprep.subr.mxu0 0.0
        %1867 = vmatpush1.msra.mxu0 0.0
        %1868 = vmatprep.subr.mxu0 0.0
        %1869 = vmatpush1.msra.mxu0 0.0
        %1870 = vmatprep.subr.mxu0 0.0
        %1871 = vmatpush1.msra.mxu0 0.0
        %1872 = vmatprep.subr.mxu0 0.0
        %1873 = vmatpush1.msra.mxu0 0.0
        %1874 = vmatprep.subr.mxu0 0.0
        %1875 = vmatpush1.msra.mxu0 0.0
        %1876 = vmatprep.subr.mxu0 0.0
        %1877 = vmatpush1.msra.mxu0 0.0
        %1878 = vmatprep.subr.mxu0 0.0
        %1879 = vmatpush1.msra.mxu0 0.0
        %1880 = vmatprep.subr.mxu0 0.0
        %1881 = vmatpush1.msra.mxu0 0.0
        %1882 = vmatprep.subr.mxu0 0.0
        %1883 = vmatpush1.msra.mxu0 0.0
        %1884 = vmatprep.subr.mxu0 0.0
        %1885 = vmatpush1.msra.mxu0 0.0
        %1886 = vmatprep.subr.mxu0 0.0
        %1887 = vmatpush1.msra.mxu0 0.0
        %1888 = vmatprep.subr.mxu0 0.0
        %1889 = vmatpush1.msra.mxu0 0.0
        %1890 = vmatprep.subr.mxu0 0.0
        %1891 = vmatpush1.msra.mxu0 0.0
        %1892 = vmatprep.subr.mxu0 0.0
        %1893 = vmatpush1.msra.mxu0 0.0
        %1894 = vmatprep.subr.mxu0 0.0
        %1895 = vmatpush1.msra.mxu0 0.0
        %1896 = vmatprep.subr.mxu0 0.0
        %1897 = vmatpush1.msra.mxu0 0.0
        %1898 = vmatprep.subr.mxu0 0.0
        %1899 = vmatpush1.msra.mxu0 0.0
        %1900 = vmatprep.subr.mxu0 0.0
        %1901 = vmatpush1.msra.mxu0 0.0
        %1902 = vmatprep.subr.mxu0 0.0
        %1903 = vmatpush1.msra.mxu0 0.0
        %1904 = vmatprep.subr.mxu0 0.0
        %1905 = vmatpush1.msra.mxu0 0.0
        %1906 = vmatprep.subr.mxu0 0.0
        %1907 = vmatpush1.msra.mxu0 0.0
        %1908 = vmatprep.subr.mxu0 0.0
        %1909 = vmatpush1.msra.mxu0 0.0
        %1910 = vmatprep.subr.mxu0 0.0
        %1911 = vmatpush1.msra.mxu0 0.0
        %1912 = vmatprep.subr.mxu0 0.0
        %1913 = vmatpush1.msra.mxu0 0.0
        %1914 = vmatprep.subr.mxu0 0.0
        %1915 = vmatpush1.msra.mxu0 0.0
        %1916 = vmatprep.subr.mxu0 0.0
        %1917 = vmatpush1.msra.mxu0 0.0
        %1918 = vmatprep.subr.mxu0 0.0
        %1919 = vmatpush1.msra.mxu0 0.0
        %1920 = vmatprep.subr.mxu0 0.0
        %1921 = vmatpush1.msra.mxu0 0.0
        %1922 = vmatprep.subr.mxu0 0.0
        %1923 = vmatpush1.msra.mxu0 0.0
        %1924 = vmatprep.subr.mxu0 0.0
        %1925 = vmatpush1.msra.mxu0 0.0
        %1926 = vmatprep.mubr.f32.mxu0 0.0
        %1927 = vmatmul.mubr.f32.gmra.mrb[0].mxu0 %v1860
        %v1928 = vpop.f32.mrb[0].mxu0
        %v1929 = vadd.f32 0.0, %v1928
        %v1930 = vpop.f32.mrb[0].mxu0
        %1931 = vdwg.mxu0
        %v1932 = vsel %vm1012, %v1856, 0.0
        %v1933 = vsel %vm1012, %v1929, 0.0
        %v1934 = vadd.f32 %v1932, %v1933
        %v1936 = vlaneseq
        %v1937 = vshrl.u32 %v1936, 7
        %v1938 = vsub.s32 0, %v1937
        %v1939 = vrot.slane %v997, %v1938
        %v1941 = vadd.f32 %v1934, %v1939
        %v1942 = vadd.f32 %v1941, %v961
        %v1943 = vsel %vm1012, %v1942, 0.0
        %1944 = vadd.xlane.f32.xlu0 %v1943
        %v1945 = vpop.xlane.xlu0 %1944
        %v1946 = vrcp.pop 32.0
        %v1947 = vmul.f32 %v1945, %v1946
        %v1948 = vsub.f32 %v1942, %v1947
        %v1949 = vmul.f32 %v1948, %v1948
        %v1950 = vsel %vm1012, %v1949, 0.0
        %1951 = vadd.xlane.f32.xlu0 %v1950
        %v1952 = vpop.xlane.xlu0 %1951
        %v1953 = vmul.f32 %v1952, %v1946
        %v1954 = vadd.f32 %v1953, 1e-05
        %v1955 = vrsqrt.pop %v1954
        %v1956 = vmul.f32 %v1948, %v1955
        %v1958 = vlaneseq
        %v1959 = vshrl.u32 %v1958, 7
        %v1960 = vsub.s32 0, %v1959
        %v1961 = vrot.slane %v998, %v1960
        %v1963 = vmul.f32 %v1956, %v1961
        %v1965 = vlaneseq
        %v1966 = vshrl.u32 %v1965, 7
        %v1967 = vsub.s32 0, %v1966
        %v1968 = vrot.slane %v999, %v1967
        %v1970 = vadd.f32 %v1963, %v1968
        %v1971 = vld [vmem:[%s25] sm:$0xff]
        %v1972 = vld [vmem:[%s25 + $0x8] sm:$0xff]
        %v1973 = vld [vmem:[%s25 + $0x10] sm:$0xff]
        %v1974 = vld [vmem:[%s25 + $0x18] sm:$0xff]
        %v1975 = vld [vmem:[%s25 + $0x20] sm:$0xff]
        %v1976 = vld [vmem:[%s25 + $0x28] sm:$0xff]
        %v1977 = vld [vmem:[%s25 + $0x30] sm:$0xff]
        %v1978 = vld [vmem:[%s25 + $0x38] sm:$0xff]
        %v1979 = vld [vmem:[%s27] sm:$0x1]
        %v1980 = vld [vmem:[%s27 + $0x1] sm:$0x1]
        %v1981 = vld [vmem:[%s29] sm:$0xff]
        %v1982 = vld [vmem:[%s29 + $0x8] sm:$0xff]
        %v1983 = vld [vmem:[%s29 + $0x10] sm:$0xff]
        %v1984 = vld [vmem:[%s29 + $0x18] sm:$0xff]
        %v1985 = vld [vmem:[%s29 + $0x20] sm:$0xff]
        %v1986 = vld [vmem:[%s29 + $0x28] sm:$0xff]
        %v1987 = vld [vmem:[%s29 + $0x30] sm:$0xff]
        %v1988 = vld [vmem:[%s29 + $0x38] sm:$0xff]
        %v1989 = vld [vmem:[%s31] sm:$0x1]
        %v1990 = vld [vmem:[%s31 + $0x1] sm:$0x1]
        %v1991 = vld [vmem:[%s33] sm:$0xff]
        %v1992 = vld [vmem:[%s33 + $0x8] sm:$0xff]
        %v1993 = vld [vmem:[%s33 + $0x10] sm:$0xff]
        %v1994 = vld [vmem:[%s33 + $0x18] sm:$0xff]
        %v1995 = vld [vmem:[%s33 + $0x20] sm:$0xff]
        %v1996 = vld [vmem:[%s33 + $0x28] sm:$0xff]
        %v1997 = vld [vmem:[%s33 + $0x30] sm:$0xff]
        %v1998 = vld [vmem:[%s33 + $0x38] sm:$0xff]
        %v1999 = vld [vmem:[%s35] sm:$0x1]
        %v2000 = vld [vmem:[%s35 + $0x1] sm:$0x1]
        %v2001 = vld [vmem:[%s37] sm:$0xff]
        %v2002 = vld [vmem:[%s37 + $0x8] sm:$0xff]
        %v2003 = vld [vmem:[%s37 + $0x10] sm:$0xff]
        %v2004 = vld [vmem:[%s37 + $0x18] sm:$0xff]
        %v2005 = vld [vmem:[%s39] sm:$0x1]
        %v2006 = vld [vmem:[%s41] sm:$0x1]
        %v2007 = vld [vmem:[%s43] sm:$0x1]
        %v2010 = vlaneseq
        %v2011 = vshrl.u32 %v2010, 7
        %v2012 = vsub.s32 0, %v2011
        %v2013 = vrot.slane %v1979, %v2012
        %v2014 = vlaneseq
        %v2015 = vshrl.u32 %v2014, 7
        %v2016 = vsub.s32 0, %v2015
        %v2017 = vrot.slane %v1980, %v2016
        %v2021 = vsel %vm1012, %v1970, 0
        %2023 = vmatprep.subr.mxu0 0.0
        %2024 = vmatpush1.msra.mxu0 %v1971
        %2025 = vmatprep.subr.mxu0 0.0
        %2026 = vmatpush1.msra.mxu0 %v1972
        %2027 = vmatprep.subr.mxu0 0.0
        %2028 = vmatpush1.msra.mxu0 %v1973
        %2029 = vmatprep.subr.mxu0 0.0
        %2030 = vmatpush1.msra.mxu0 %v1974
        %2031 = vmatprep.subr.mxu0 0.0
        %2032 = vmatpush1.msra.mxu0 0.0
        %2033 = vmatprep.subr.mxu0 0.0
        %2034 = vmatpush1.msra.mxu0 0.0
        %2035 = vmatprep.subr.mxu0 0.0
        %2036 = vmatpush1.msra.mxu0 0.0
        %2037 = vmatprep.subr.mxu0 0.0
        %2038 = vmatpush1.msra.mxu0 0.0
        %2039 = vmatprep.subr.mxu0 0.0
        %2040 = vmatpush1.msra.mxu0 0.0
        %2041 = vmatprep.subr.mxu0 0.0
        %2042 = vmatpush1.msra.mxu0 0.0
        %2043 = vmatprep.subr.mxu0 0.0
        %2044 = vmatpush1.msra.mxu0 0.0
        %2045 = vmatprep.subr.mxu0 0.0
        %2046 = vmatpush1.msra.mxu0 0.0
        %2047 = vmatprep.subr.mxu0 0.0
        %2048 = vmatpush1.msra.mxu0 0.0
        %2049 = vmatprep.subr.mxu0 0.0
        %2050 = vmatpush1.msra.mxu0 0.0
        %2051 = vmatprep.subr.mxu0 0.0
        %2052 = vmatpush1.msra.mxu0 0.0
        %2053 = vmatprep.subr.mxu0 0.0
        %2054 = vmatpush1.msra.mxu0 0.0
        %2055 = vmatprep.subr.mxu0 0.0
        %2056 = vmatpush1.msra.mxu0 0.0
        %2057 = vmatprep.subr.mxu0 0.0
        %2058 = vmatpush1.msra.mxu0 0.0
        %2059 = vmatprep.subr.mxu0 0.0
        %2060 = vmatpush1.msra.mxu0 0.0
        %2061 = vmatprep.subr.mxu0 0.0
        %2062 = vmatpush1.msra.mxu0 0.0
        %2063 = vmatprep.subr.mxu0 0.0
        %2064 = vmatpush1.msra.mxu0 0.0
        %2065 = vmatprep.subr.mxu0 0.0
        %2066 = vmatpush1.msra.mxu0 0.0
        %2067 = vmatprep.subr.mxu0 0.0
        %2068 = vmatpush1.msra.mxu0 0.0
        %2069 = vmatprep.subr.mxu0 0.0
        %2070 = vmatpush1.msra.mxu0 0.0
        %2071 = vmatprep.subr.mxu0 0.0
        %2072 = vmatpush1.msra.mxu0 0.0
        %2073 = vmatprep.subr.mxu0 0.0
        %2074 = vmatpush1.msra.mxu0 0.0
        %2075 = vmatprep.subr.mxu0 0.0
        %2076 = vmatpush1.msra.mxu0 0.0
        %2077 = vmatprep.subr.mxu0 0.0
        %2078 = vmatpush1.msra.mxu0 0.0
        %2079 = vmatprep.subr.mxu0 0.0
        %2080 = vmatpush1.msra.mxu0 0.0
        %2081 = vmatprep.subr.mxu0 0.0
        %2082 = vmatpush1.msra.mxu0 0.0
        %2083 = vmatprep.subr.mxu0 0.0
        %2084 = vmatpush1.msra.mxu0 0.0
        %2085 = vmatprep.subr.mxu0 0.0
        %2086 = vmatpush1.msra.mxu0 0.0
        %2087 = vmatprep.mubr.f32.mxu0 0.0
        %2088 = vmatmul.mubr.f32.gmra.mrb[0].mxu0 %v2021
        %v2089 = vpop.f32.mrb[0].mxu0
        %v2090 = vadd.f32 %v2013, %v2089
        %v2091 = vpop.f32.mrb[0].mxu0
        %2092 = vdwg.mxu0
        %2093 = vmatprep.subr.mxu0 0.0
        %2094 = vmatpush1.msra.mxu0 %v1975
        %2095 = vmatprep.subr.mxu0 0.0
        %2096 = vmatpush1.msra.mxu0 %v1976
        %2097 = vmatprep.subr.mxu0 0.0
        %2098 = vmatpush1.msra.mxu0 %v1977
        %2099 = vmatprep.subr.mxu0 0.0
        %2100 = vmatpush1.msra.mxu0 %v1978
        %2101 = vmatprep.subr.mxu0 0.0
        %2102 = vmatpush1.msra.mxu0 0.0
        %2103 = vmatprep.subr.mxu0 0.0
        %2104 = vmatpush1.msra.mxu0 0.0
        %2105 = vmatprep.subr.mxu0 0.0
        %2106 = vmatpush1.msra.mxu0 0.0
        %2107 = vmatprep.subr.mxu0 0.0
        %2108 = vmatpush1.msra.mxu0 0.0
        %2109 = vmatprep.subr.mxu0 0.0
        %2110 = vmatpush1.msra.mxu0 0.0
        %2111 = vmatprep.subr.mxu0 0.0
        %2112 = vmatpush1.msra.mxu0 0.0
        %2113 = vmatprep.subr.mxu0 0.0
        %2114 = vmatpush1.msra.mxu0 0.0
        %2115 = vmatprep.subr.mxu0 0.0
        %2116 = vmatpush1.msra.mxu0 0.0
        %2117 = vmatprep.subr.mxu0 0.0
        %2118 = vmatpush1.msra.mxu0 0.0
        %2119 = vmatprep.subr.mxu0 0.0
        %2120 = vmatpush1.msra.mxu0 0.0
        %2121 = vmatprep.subr.mxu0 0.0
        %2122 = vmatpush1.msra.mxu0 0.0
        %2123 = vmatprep.subr.mxu0 0.0
        %2124 = vmatpush1.msra.mxu0 0.0
        %2125 = vmatprep.subr.mxu0 0.0
        %2126 = vmatpush1.msra.mxu0 0.0
        %2127 = vmatprep.subr.mxu0 0.0
        %2128 = vmatpush1.msra.mxu0 0.0
        %2129 = vmatprep.subr.mxu0 0.0
        %2130 = vmatpush1.msra.mxu0 0.0
        %2131 = vmatprep.subr.mxu0 0.0
        %2132 = vmatpush1.msra.mxu0 0.0
        %2133 = vmatprep.subr.mxu0 0.0
        %2134 = vmatpush1.msra.mxu0 0.0
        %2135 = vmatprep.subr.mxu0 0.0
        %2136 = vmatpush1.msra.mxu0 0.0
        %2137 = vmatprep.subr.mxu0 0.0
        %2138 = vmatpush1.msra.mxu0 0.0
        %2139 = vmatprep.subr.mxu0 0.0
        %2140 = vmatpush1.msra.mxu0 0.0
        %2141 = vmatprep.subr.mxu0 0.0
        %2142 = vmatpush1.msra.mxu0 0.0
        %2143 = vmatprep.subr.mxu0 0.0
        %2144 = vmatpush1.msra.mxu0 0.0
        %2145 = vmatprep.subr.mxu0 0.0
        %2146 = vmatpush1.msra.mxu0 0.0
        %2147 = vmatprep.subr.mxu0 0.0
        %2148 = vmatpush1.msra.mxu0 0.0
        %2149 = vmatprep.subr.mxu0 0.0
        %2150 = vmatpush1.msra.mxu0 0.0
        %2151 = vmatprep.subr.mxu0 0.0
        %2152 = vmatpush1.msra.mxu0 0.0
        %2153 = vmatprep.subr.mxu0 0.0
        %2154 = vmatpush1.msra.mxu0 0.0
        %2155 = vmatprep.subr.mxu0 0.0
        %2156 = vmatpush1.msra.mxu0 0.0
        %2157 = vmatprep.mubr.f32.mxu0 0.0
        %2158 = vmatmul.mubr.f32.gmra.mrb[0].mxu0 %v2021
        %v2159 = vpop.f32.mrb[0].mxu0
        %v2160 = vadd.f32 %v2017, %v2159
        %v2161 = vpop.f32.mrb[0].mxu0
        %2162 = vdwg.mxu0
        %v2165 = vlaneseq
        %v2166 = vshrl.u32 %v2165, 7
        %v2167 = vsub.s32 0, %v2166
        %v2168 = vrot.slane %v1989, %v2167
        %v2169 = vlaneseq
        %v2170 = vshrl.u32 %v2169, 7
        %v2171 = vsub.s32 0, %v2170
        %v2172 = vrot.slane %v1990, %v2171
        %v2176 = vsel %vm1012, %v962, 0
        %2178 = vmatprep.subr.mxu0 0.0
        %2179 = vmatpush1.msra.mxu0 %v1981
        %2180 = vmatprep.subr.mxu0 0.0
        %2181 = vmatpush1.msra.mxu0 %v1982
        %2182 = vmatprep.subr.mxu0 0.0
        %2183 = vmatpush1.msra.mxu0 %v1983
        %2184 = vmatprep.subr.mxu0 0.0
        %2185 = vmatpush1.msra.mxu0 %v1984
        %2186 = vmatprep.subr.mxu0 0.0
        %2187 = vmatpush1.msra.mxu0 0.0
        %2188 = vmatprep.subr.mxu0 0.0
        %2189 = vmatpush1.msra.mxu0 0.0
        %2190 = vmatprep.subr.mxu0 0.0
        %2191 = vmatpush1.msra.mxu0 0.0
        %2192 = vmatprep.subr.mxu0 0.0
        %2193 = vmatpush1.msra.mxu0 0.0
        %2194 = vmatprep.subr.mxu0 0.0
        %2195 = vmatpush1.msra.mxu0 0.0
        %2196 = vmatprep.subr.mxu0 0.0
        %2197 = vmatpush1.msra.mxu0 0.0
        %2198 = vmatprep.subr.mxu0 0.0
        %2199 = vmatpush1.msra.mxu0 0.0
        %2200 = vmatprep.subr.mxu0 0.0
        %2201 = vmatpush1.msra.mxu0 0.0
        %2202 = vmatprep.subr.mxu0 0.0
        %2203 = vmatpush1.msra.mxu0 0.0
        %2204 = vmatprep.subr.mxu0 0.0
        %2205 = vmatpush1.msra.mxu0 0.0
        %2206 = vmatprep.subr.mxu0 0.0
        %2207 = vmatpush1.msra.mxu0 0.0
        %2208 = vmatprep.subr.mxu0 0.0
        %2209 = vmatpush1.msra.mxu0 0.0
        %2210 = vmatprep.subr.mxu0 0.0
        %2211 = vmatpush1.msra.mxu0 0.0
        %2212 = vmatprep.subr.mxu0 0.0
        %2213 = vmatpush1.msra.mxu0 0.0
        %2214 = vmatprep.subr.mxu0 0.0
        %2215 = vmatpush1.msra.mxu0 0.0
        %2216 = vmatprep.subr.mxu0 0.0
        %2217 = vmatpush1.msra.mxu0 0.0
        %2218 = vmatprep.subr.mxu0 0.0
        %2219 = vmatpush1.msra.mxu0 0.0
        %2220 = vmatprep.subr.mxu0 0.0
        %2221 = vmatpush1.msra.mxu0 0.0
        %2222 = vmatprep.subr.mxu0 0.0
        %2223 = vmatpush1.msra.mxu0 0.0
        %2224 = vmatprep.subr.mxu0 0.0
        %2225 = vmatpush1.msra.mxu0 0.0
        %2226 = vmatprep.subr.mxu0 0.0
        %2227 = vmatpush1.msra.mxu0 0.0
        %2228 = vmatprep.subr.mxu0 0.0
        %2229 = vmatpush1.msra.mxu0 0.0
        %2230 = vmatprep.subr.mxu0 0.0
        %2231 = vmatpush1.msra.mxu0 0.0
        %2232 = vmatprep.subr.mxu0 0.0
        %2233 = vmatpush1.msra.mxu0 0.0
        %2234 = vmatprep.subr.mxu0 0.0
        %2235 = vmatpush1.msra.mxu0 0.0
        %2236 = vmatprep.subr.mxu0 0.0
        %2237 = vmatpush1.msra.mxu0 0.0
        %2238 = vmatprep.subr.mxu0 0.0
        %2239 = vmatpush1.msra.mxu0 0.0
        %2240 = vmatprep.subr.mxu0 0.0
        %2241 = vmatpush1.msra.mxu0 0.0
        %2242 = vmatprep.mubr.f32.mxu0 0.0
        %2243 = vmatmul.mubr.f32.gmra.mrb[0].mxu0 %v2176
        %v2244 = vpop.f32.mrb[0].mxu0
        %v2245 = vadd.f32 %v2168, %v2244
        %v2246 = vpop.f32.mrb[0].mxu0
        %2247 = vdwg.mxu0
        %2248 = vmatprep.subr.mxu0 0.0
        %2249 = vmatpush1.msra.mxu0 %v1985
        %2250 = vmatprep.subr.mxu0 0.0
        %2251 = vmatpush1.msra.mxu0 %v1986
        %2252 = vmatprep.subr.mxu0 0.0
        %2253 = vmatpush1.msra.mxu0 %v1987
        %2254 = vmatprep.subr.mxu0 0.0
        %2255 = vmatpush1.msra.mxu0 %v1988
        %2256 = vmatprep.subr.mxu0 0.0
        %2257 = vmatpush1.msra.mxu0 0.0
        %2258 = vmatprep.subr.mxu0 0.0
        %2259 = vmatpush1.msra.mxu0 0.0
        %2260 = vmatprep.subr.mxu0 0.0
        %2261 = vmatpush1.msra.mxu0 0.0
        %2262 = vmatprep.subr.mxu0 0.0
        %2263 = vmatpush1.msra.mxu0 0.0
        %2264 = vmatprep.subr.mxu0 0.0
        %2265 = vmatpush1.msra.mxu0 0.0
        %2266 = vmatprep.subr.mxu0 0.0
        %2267 = vmatpush1.msra.mxu0 0.0
        %2268 = vmatprep.subr.mxu0 0.0
        %2269 = vmatpush1.msra.mxu0 0.0
        %2270 = vmatprep.subr.mxu0 0.0
        %2271 = vmatpush1.msra.mxu0 0.0
        %2272 = vmatprep.subr.mxu0 0.0
        %2273 = vmatpush1.msra.mxu0 0.0
        %2274 = vmatprep.subr.mxu0 0.0
        %2275 = vmatpush1.msra.mxu0 0.0
        %2276 = vmatprep.subr.mxu0 0.0
        %2277 = vmatpush1.msra.mxu0 0.0
        %2278 = vmatprep.subr.mxu0 0.0
        %2279 = vmatpush1.msra.mxu0 0.0
        %2280 = vmatprep.subr.mxu0 0.0
        %2281 = vmatpush1.msra.mxu0 0.0
        %2282 = vmatprep.subr.mxu0 0.0
        %2283 = vmatpush1.msra.mxu0 0.0
        %2284 = vmatprep.subr.mxu0 0.0
        %2285 = vmatpush1.msra.mxu0 0.0
        %2286 = vmatprep.subr.mxu0 0.0
        %2287 = vmatpush1.msra.mxu0 0.0
        %2288 = vmatprep.subr.mxu0 0.0
        %2289 = vmatpush1.msra.mxu0 0.0
        %2290 = vmatprep.subr.mxu0 0.0
        %2291 = vmatpush1.msra.mxu0 0.0
        %2292 = vmatprep.subr.mxu0 0.0
        %2293 = vmatpush1.msra.mxu0 0.0
        %2294 = vmatprep.subr.mxu0 0.0
        %2295 = vmatpush1.msra.mxu0 0.0
        %2296 = vmatprep.subr.mxu0 0.0
        %2297 = vmatpush1.msra.mxu0 0.0
        %2298 = vmatprep.subr.mxu0 0.0
        %2299 = vmatpush1.msra.mxu0 0.0
        %2300 = vmatprep.subr.mxu0 0.0
        %2301 = vmatpush1.msra.mxu0 0.0
        %2302 = vmatprep.subr.mxu0 0.0
        %2303 = vmatpush1.msra.mxu0 0.0
        %2304 = vmatprep.subr.mxu0 0.0
        %2305 = vmatpush1.msra.mxu0 0.0
        %2306 = vmatprep.subr.mxu0 0.0
        %2307 = vmatpush1.msra.mxu0 0.0
        %2308 = vmatprep.subr.mxu0 0.0
        %2309 = vmatpush1.msra.mxu0 0.0
        %2310 = vmatprep.subr.mxu0 0.0
        %2311 = vmatpush1.msra.mxu0 0.0
        %2312 = vmatprep.mubr.f32.mxu0 0.0
        %2313 = vmatmul.mubr.f32.gmra.mrb[0].mxu0 %v2176
        %v2314 = vpop.f32.mrb[0].mxu0
        %v2315 = vadd.f32 %v2172, %v2314
        %v2316 = vpop.f32.mrb[0].mxu0
        %2317 = vdwg.mxu0
        %v2320 = vlaneseq
        %v2321 = vshrl.u32 %v2320, 7
        %v2322 = vsub.s32 0, %v2321
        %v2323 = vrot.slane %v1999, %v2322
        %v2324 = vlaneseq
        %v2325 = vshrl.u32 %v2324, 7
        %v2326 = vsub.s32 0, %v2325
        %v2327 = vrot.slane %v2000, %v2326
        %2330 = vmatprep.subr.mxu0 0.0
        %2331 = vmatpush1.msra.mxu0 %v1991
        %2332 = vmatprep.subr.mxu0 0.0
        %2333 = vmatpush1.msra.mxu0 %v1992
        %2334 = vmatprep.subr.mxu0 0.0
        %2335 = vmatpush1.msra.mxu0 %v1993
        %2336 = vmatprep.subr.mxu0 0.0
        %2337 = vmatpush1.msra.mxu0 %v1994
        %2338 = vmatprep.subr.mxu0 0.0
        %2339 = vmatpush1.msra.mxu0 0.0
        %2340 = vmatprep.subr.mxu0 0.0
        %2341 = vmatpush1.msra.mxu0 0.0
        %2342 = vmatprep.subr.mxu0 0.0
        %2343 = vmatpush1.msra.mxu0 0.0
        %2344 = vmatprep.subr.mxu0 0.0
        %2345 = vmatpush1.msra.mxu0 0.0
        %2346 = vmatprep.subr.mxu0 0.0
        %2347 = vmatpush1.msra.mxu0 0.0
        %2348 = vmatprep.subr.mxu0 0.0
        %2349 = vmatpush1.msra.mxu0 0.0
        %2350 = vmatprep.subr.mxu0 0.0
        %2351 = vmatpush1.msra.mxu0 0.0
        %2352 = vmatprep.subr.mxu0 0.0
        %2353 = vmatpush1.msra.mxu0 0.0
        %2354 = vmatprep.subr.mxu0 0.0
        %2355 = vmatpush1.msra.mxu0 0.0
        %2356 = vmatprep.subr.mxu0 0.0
        %2357 = vmatpush1.msra.mxu0 0.0
        %2358 = vmatprep.subr.mxu0 0.0
        %2359 = vmatpush1.msra.mxu0 0.0
        %2360 = vmatprep.subr.mxu0 0.0
        %2361 = vmatpush1.msra.mxu0 0.0
        %2362 = vmatprep.subr.mxu0 0.0
        %2363 = vmatpush1.msra.mxu0 0.0
        %2364 = vmatprep.subr.mxu0 0.0
        %2365 = vmatpush1.msra.mxu0 0.0
        %2366 = vmatprep.subr.mxu0 0.0
        %2367 = vmatpush1.msra.mxu0 0.0
        %2368 = vmatprep.subr.mxu0 0.0
        %2369 = vmatpush1.msra.mxu0 0.0
        %2370 = vmatprep.subr.mxu0 0.0
        %2371 = vmatpush1.msra.mxu0 0.0
        %2372 = vmatprep.subr.mxu0 0.0
        %2373 = vmatpush1.msra.mxu0 0.0
        %2374 = vmatprep.subr.mxu0 0.0
        %2375 = vmatpush1.msra.mxu0 0.0
        %2376 = vmatprep.subr.mxu0 0.0
        %2377 = vmatpush1.msra.mxu0 0.0
        %2378 = vmatprep.subr.mxu0 0.0
        %2379 = vmatpush1.msra.mxu0 0.0
        %2380 = vmatprep.subr.mxu0 0.0
        %2381 = vmatpush1.msra.mxu0 0.0
        %2382 = vmatprep.subr.mxu0 0.0
        %2383 = vmatpush1.msra.mxu0 0.0
        %2384 = vmatprep.subr.mxu0 0.0
        %2385 = vmatpush1.msra.mxu0 0.0
        %2386 = vmatprep.subr.mxu0 0.0
        %2387 = vmatpush1.msra.mxu0 0.0
        %2388 = vmatprep.subr.mxu0 0.0
        %2389 = vmatpush1.msra.mxu0 0.0
        %2390 = vmatprep.subr.mxu0 0.0
        %2391 = vmatpush1.msra.mxu0 0.0
        %2392 = vmatprep.subr.mxu0 0.0
        %2393 = vmatpush1.msra.mxu0 0.0
        %2394 = vmatprep.mubr.f32.mxu0 0.0
        %2395 = vmatmul.mubr.f32.gmra.mrb[0].mxu0 %v2176
        %v2396 = vpop.f32.mrb[0].mxu0
        %v2397 = vadd.f32 %v2323, %v2396
        %v2398 = vpop.f32.mrb[0].mxu0
        %2399 = vdwg.mxu0
        %2400 = vmatprep.subr.mxu0 0.0
        %2401 = vmatpush1.msra.mxu0 %v1995
        %2402 = vmatprep.subr.mxu0 0.0
        %2403 = vmatpush1.msra.mxu0 %v1996
        %2404 = vmatprep.subr.mxu0 0.0
        %2405 = vmatpush1.msra.mxu0 %v1997
        %2406 = vmatprep.subr.mxu0 0.0
        %2407 = vmatpush1.msra.mxu0 %v1998
        %2408 = vmatprep.subr.mxu0 0.0
        %2409 = vmatpush1.msra.mxu0 0.0
        %2410 = vmatprep.subr.mxu0 0.0
        %2411 = vmatpush1.msra.mxu0 0.0
        %2412 = vmatprep.subr.mxu0 0.0
        %2413 = vmatpush1.msra.mxu0 0.0
        %2414 = vmatprep.subr.mxu0 0.0
        %2415 = vmatpush1.msra.mxu0 0.0
        %2416 = vmatprep.subr.mxu0 0.0
        %2417 = vmatpush1.msra.mxu0 0.0
        %2418 = vmatprep.subr.mxu0 0.0
        %2419 = vmatpush1.msra.mxu0 0.0
        %2420 = vmatprep.subr.mxu0 0.0
        %2421 = vmatpush1.msra.mxu0 0.0
        %2422 = vmatprep.subr.mxu0 0.0
        %2423 = vmatpush1.msra.mxu0 0.0
        %2424 = vmatprep.subr.mxu0 0.0
        %2425 = vmatpush1.msra.mxu0 0.0
        %2426 = vmatprep.subr.mxu0 0.0
        %2427 = vmatpush1.msra.mxu0 0.0
        %2428 = vmatprep.subr.mxu0 0.0
        %2429 = vmatpush1.msra.mxu0 0.0
        %2430 = vmatprep.subr.mxu0 0.0
        %2431 = vmatpush1.msra.mxu0 0.0
        %2432 = vmatprep.subr.mxu0 0.0
        %2433 = vmatpush1.msra.mxu0 0.0
        %2434 = vmatprep.subr.mxu0 0.0
        %2435 = vmatpush1.msra.mxu0 0.0
        %2436 = vmatprep.subr.mxu0 0.0
        %2437 = vmatpush1.msra.mxu0 0.0
        %2438 = vmatprep.subr.mxu0 0.0
        %2439 = vmatpush1.msra.mxu0 0.0
        %2440 = vmatprep.subr.mxu0 0.0
        %2441 = vmatpush1.msra.mxu0 0.0
        %2442 = vmatprep.subr.mxu0 0.0
        %2443 = vmatpush1.msra.mxu0 0.0
        %2444 = vmatprep.subr.mxu0 0.0
        %2445 = vmatpush1.msra.mxu0 0.0
        %2446 = vmatprep.subr.mxu0 0.0
        %2447 = vmatpush1.msra.mxu0 0.0
        %2448 = vmatprep.subr.mxu0 0.0
        %2449 = vmatpush1.msra.mxu0 0.0
        %2450 = vmatprep.subr.mxu0 0.0
        %2451 = vmatpush1.msra.mxu0 0.0
        %2452 = vmatprep.subr.mxu0 0.0
        %2453 = vmatpush1.msra.mxu0 0.0
        %2454 = vmatprep.subr.mxu0 0.0
        %2455 = vmatpush1.msra.mxu0 0.0
        %2456 = vmatprep.subr.mxu0 0.0
        %2457 = vmatpush1.msra.mxu0 0.0
        %2458 = vmatprep.subr.mxu0 0.0
        %2459 = vmatpush1.msra.mxu0 0.0
        %2460 = vmatprep.subr.mxu0 0.0
        %2461 = vmatpush1.msra.mxu0 0.0
        %2462 = vmatprep.subr.mxu0 0.0
        %2463 = vmatpush1.msra.mxu0 0.0
        %2464 = vmatprep.mubr.f32.mxu0 0.0
        %2465 = vmatmul.mubr.f32.gmra.mrb[0].mxu0 %v2176
        %v2466 = vpop.f32.mrb[0].mxu0
        %v2467 = vadd.f32 %v2327, %v2466
        %v2468 = vpop.f32.mrb[0].mxu0
        %2469 = vdwg.mxu0
        %v2471 = vsel %vm1460, %v2090, 0
        %v2474 = vsel %vm1460, %v2245, 0
        %2476 = vmatprep.subr.mxu0 0.0
        %2477 = vmatpush1.xpose.msra.mxu0 %v2474
        %2478 = vmatprep.subr.mxu0 0.0
        %2479 = vmatpush1.xpose.msra.mxu0 0.0
        %2480 = vmatprep.subr.mxu0 0.0
        %2481 = vmatpush1.xpose.msra.mxu0 0.0
        %2482 = vmatprep.subr.mxu0 0.0
        %2483 = vmatpush1.xpose.msra.mxu0 0.0
        %2484 = vmatprep.subr.mxu0 0.0
        %2485 = vmatpush1.xpose.msra.mxu0 0.0
        %2486 = vmatprep.subr.mxu0 0.0
        %2487 = vmatpush1.xpose.msra.mxu0 0.0
        %2488 = vmatprep.subr.mxu0 0.0
        %2489 = vmatpush1.xpose.msra.mxu0 0.0
        %2490 = vmatprep.subr.mxu0 0.0
        %2491 = vmatpush1.xpose.msra.mxu0 0.0
        %2492 = vmatprep.subr.mxu0 0.0
        %2493 = vmatpush1.xpose.msra.mxu0 0.0
        %2494 = vmatprep.subr.mxu0 0.0
        %2495 = vmatpush1.xpose.msra.mxu0 0.0
        %2496 = vmatprep.subr.mxu0 0.0
        %2497 = vmatpush1.xpose.msra.mxu0 0.0
        %2498 = vmatprep.subr.mxu0 0.0
        %2499 = vmatpush1.xpose.msra.mxu0 0.0
        %2500 = vmatprep.subr.mxu0 0.0
        %2501 = vmatpush1.xpose.msra.mxu0 0.0
        %2502 = vmatprep.subr.mxu0 0.0
        %2503 = vmatpush1.xpose.msra.mxu0 0.0
        %2504 = vmatprep.subr.mxu0 0.0
        %2505 = vmatpush1.xpose.msra.mxu0 0.0
        %2506 = vmatprep.subr.mxu0 0.0
        %2507 = vmatpush1.xpose.msra.mxu0 0.0
        %2508 = vmatprep.subr.mxu0 0.0
        %2509 = vmatpush1.xpose.msra.mxu0 0.0
        %2510 = vmatprep.subr.mxu0 0.0
        %2511 = vmatpush1.xpose.msra.mxu0 0.0
        %2512 = vmatprep.subr.mxu0 0.0
        %2513 = vmatpush1.xpose.msra.mxu0 0.0
        %2514 = vmatprep.subr.mxu0 0.0
        %2515 = vmatpush1.xpose.msra.mxu0 0.0
        %2516 = vmatprep.subr.mxu0 0.0
        %2517 = vmatpush1.xpose.msra.mxu0 0.0
        %2518 = vmatprep.subr.mxu0 0.0
        %2519 = vmatpush1.xpose.msra.mxu0 0.0
        %2520 = vmatprep.subr.mxu0 0.0
        %2521 = vmatpush1.xpose.msra.mxu0 0.0
        %2522 = vmatprep.subr.mxu0 0.0
        %2523 = vmatpush1.xpose.msra.mxu0 0.0
        %2524 = vmatprep.subr.mxu0 0.0
        %2525 = vmatpush1.xpose.msra.mxu0 0.0
        %2526 = vmatprep.subr.mxu0 0.0
        %2527 = vmatpush1.xpose.msra.mxu0 0.0
        %2528 = vmatprep.subr.mxu0 0.0
        %2529 = vmatpush1.xpose.msra.mxu0 0.0
        %2530 = vmatprep.subr.mxu0 0.0
        %2531 = vmatpush1.xpose.msra.mxu0 0.0
        %2532 = vmatprep.subr.mxu0 0.0
        %2533 = vmatpush1.xpose.msra.mxu0 0.0
        %2534 = vmatprep.subr.mxu0 0.0
        %2535 = vmatpush1.xpose.msra.mxu0 0.0
        %2536 = vmatprep.subr.mxu0 0.0
        %2537 = vmatpush1.xpose.msra.mxu0 0.0
        %2538 = vmatprep.subr.mxu0 0.0
        %2539 = vmatpush1.xpose.msra.mxu0 0.0
        %2540 = vmatprep.mubr.f32.mxu0 0.0
        %2541 = vmatmul.mubr.f32.gmra.mrb[0].mxu0 %v2471
        %v2542 = vpop.f32.mrb[0].mxu0
        %v2543 = vadd.f32 0.0, %v2542
        %v2544 = vpop.f32.mrb[0].mxu0
        %2545 = vdwg.mxu0
        %v2547 = vsel %vm1460, %v2160, 0
        %v2550 = vsel %vm1460, %v2315, 0
        %2552 = vmatprep.subr.mxu0 0.0
        %2553 = vmatpush1.xpose.msra.mxu0 %v2550
        %2554 = vmatprep.subr.mxu0 0.0
        %2555 = vmatpush1.xpose.msra.mxu0 0.0
        %2556 = vmatprep.subr.mxu0 0.0
        %2557 = vmatpush1.xpose.msra.mxu0 0.0
        %2558 = vmatprep.subr.mxu0 0.0
        %2559 = vmatpush1.xpose.msra.mxu0 0.0
        %2560 = vmatprep.subr.mxu0 0.0
        %2561 = vmatpush1.xpose.msra.mxu0 0.0
        %2562 = vmatprep.subr.mxu0 0.0
        %2563 = vmatpush1.xpose.msra.mxu0 0.0
        %2564 = vmatprep.subr.mxu0 0.0
        %2565 = vmatpush1.xpose.msra.mxu0 0.0
        %2566 = vmatprep.subr.mxu0 0.0
        %2567 = vmatpush1.xpose.msra.mxu0 0.0
        %2568 = vmatprep.subr.mxu0 0.0
        %2569 = vmatpush1.xpose.msra.mxu0 0.0
        %2570 = vmatprep.subr.mxu0 0.0
        %2571 = vmatpush1.xpose.msra.mxu0 0.0
        %2572 = vmatprep.subr.mxu0 0.0
        %2573 = vmatpush1.xpose.msra.mxu0 0.0
        %2574 = vmatprep.subr.mxu0 0.0
        %2575 = vmatpush1.xpose.msra.mxu0 0.0
        %2576 = vmatprep.subr.mxu0 0.0
        %2577 = vmatpush1.xpose.msra.mxu0 0.0
        %2578 = vmatprep.subr.mxu0 0.0
        %2579 = vmatpush1.xpose.msra.mxu0 0.0
        %2580 = vmatprep.subr.mxu0 0.0
        %2581 = vmatpush1.xpose.msra.mxu0 0.0
        %2582 = vmatprep.subr.mxu0 0.0
        %2583 = vmatpush1.xpose.msra.mxu0 0.0
        %2584 = vmatprep.subr.mxu0 0.0
        %2585 = vmatpush1.xpose.msra.mxu0 0.0
        %2586 = vmatprep.subr.mxu0 0.0
        %2587 = vmatpush1.xpose.msra.mxu0 0.0
        %2588 = vmatprep.subr.mxu0 0.0
        %2589 = vmatpush1.xpose.msra.mxu0 0.0
        %2590 = vmatprep.subr.mxu0 0.0
        %2591 = vmatpush1.xpose.msra.mxu0 0.0
        %2592 = vmatprep.subr.mxu0 0.0
        %2593 = vmatpush1.xpose.msra.mxu0 0.0
        %2594 = vmatprep.subr.mxu0 0.0
        %2595 = vmatpush1.xpose.msra.mxu0 0.0
        %2596 = vmatprep.subr.mxu0 0.0
        %2597 = vmatpush1.xpose.msra.mxu0 0.0
        %2598 = vmatprep.subr.mxu0 0.0
        %2599 = vmatpush1.xpose.msra.mxu0 0.0
        %2600 = vmatprep.subr.mxu0 0.0
        %2601 = vmatpush1.xpose.msra.mxu0 0.0
        %2602 = vmatprep.subr.mxu0 0.0
        %2603 = vmatpush1.xpose.msra.mxu0 0.0
        %2604 = vmatprep.subr.mxu0 0.0
        %2605 = vmatpush1.xpose.msra.mxu0 0.0
        %2606 = vmatprep.subr.mxu0 0.0
        %2607 = vmatpush1.xpose.msra.mxu0 0.0
        %2608 = vmatprep.subr.mxu0 0.0
        %2609 = vmatpush1.xpose.msra.mxu0 0.0
        %2610 = vmatprep.subr.mxu0 0.0
        %2611 = vmatpush1.xpose.msra.mxu0 0.0
        %2612 = vmatprep.subr.mxu0 0.0
        %2613 = vmatpush1.xpose.msra.mxu0 0.0
        %2614 = vmatprep.subr.mxu0 0.0
        %2615 = vmatpush1.xpose.msra.mxu0 0.0
        %2616 = vmatprep.mubr.f32.mxu0 0.0
        %2617 = vmatmul.mubr.f32.gmra.mrb[0].mxu0 %v2547
        %v2618 = vpop.f32.mrb[0].mxu0
        %v2619 = vadd.f32 0.0, %v2618
        %v2620 = vpop.f32.mrb[0].mxu0
        %2621 = vdwg.mxu0
        %v2622 = vmul.f32 %v2543, 0.25
        %v2623 = vmul.f32 %v2619, 0.25
        %v2624 = vsel %vm1615, %v2622, -inf
        %2625 = vmax.xlane.f32.xlu0 %v2624
        %v2626 = vpop.xlane.xlu0 %2625
        %v2627 = vsel %vm1615, %v2623, -inf
        %2628 = vmax.xlane.f32.xlu0 %v2627
        %v2629 = vpop.xlane.xlu0 %2628
        %v2630 = vsub.f32 %v2622, %v2626
        %v2631 = vsub.f32 %v2623, %v2629
        %v2632 = vmul.f32 %v2630, 1.442695
        %v2633 = vpow.pop %v2632
        %v2634 = vmul.f32 %v2631, 1.442695
        %v2635 = vpow.pop %v2634
        %v2636 = vsel %vm1615, %v2633, 0.0
        %2637 = vadd.xlane.f32.xlu0 %v2636
        %v2638 = vpop.xlane.xlu0 %2637
        %v2639 = vsel %vm1615, %v2635, 0.0
        %2640 = vadd.xlane.f32.xlu0 %v2639
        %v2641 = vpop.xlane.xlu0 %2640
        %v2642 = vrcp.pop %v2638
        %v2643 = vrcp.pop %v2641
        %v2644 = vmul.f32 %v2633, %v2642
        %v2645 = vmul.f32 %v2635, %v2643
        %2646 = vst.msk [vmem:[%s952] sm:$0xff] %vm1615, %v2644
        %2647 = vst.msk [vmem:[%s952 + $0x8] sm:$0xff] %vm1615, %v2645
        %v2649 = vsel %vm1615, %v2644, 0
        %2651 = vmatprep.subr.mxu0 0.0
        %2652 = vmatpush1.msra.mxu0 %v2397
        %2653 = vmatprep.subr.mxu0 0.0
        %2654 = vmatpush1.msra.mxu0 0.0
        %2655 = vmatprep.subr.mxu0 0.0
        %2656 = vmatpush1.msra.mxu0 0.0
        %2657 = vmatprep.subr.mxu0 0.0
        %2658 = vmatpush1.msra.mxu0 0.0
        %2659 = vmatprep.subr.mxu0 0.0
        %2660 = vmatpush1.msra.mxu0 0.0
        %2661 = vmatprep.subr.mxu0 0.0
        %2662 = vmatpush1.msra.mxu0 0.0
        %2663 = vmatprep.subr.mxu0 0.0
        %2664 = vmatpush1.msra.mxu0 0.0
        %2665 = vmatprep.subr.mxu0 0.0
        %2666 = vmatpush1.msra.mxu0 0.0
        %2667 = vmatprep.subr.mxu0 0.0
        %2668 = vmatpush1.msra.mxu0 0.0
        %2669 = vmatprep.subr.mxu0 0.0
        %2670 = vmatpush1.msra.mxu0 0.0
        %2671 = vmatprep.subr.mxu0 0.0
        %2672 = vmatpush1.msra.mxu0 0.0
        %2673 = vmatprep.subr.mxu0 0.0
        %2674 = vmatpush1.msra.mxu0 0.0
        %2675 = vmatprep.subr.mxu0 0.0
        %2676 = vmatpush1.msra.mxu0 0.0
        %2677 = vmatprep.subr.mxu0 0.0
        %2678 = vmatpush1.msra.mxu0 0.0
        %2679 = vmatprep.subr.mxu0 0.0
        %2680 = vmatpush1.msra.mxu0 0.0
        %2681 = vmatprep.subr.mxu0 0.0
        %2682 = vmatpush1.msra.mxu0 0.0
        %2683 = vmatprep.subr.mxu0 0.0
        %2684 = vmatpush1.msra.mxu0 0.0
        %2685 = vmatprep.subr.mxu0 0.0
        %2686 = vmatpush1.msra.mxu0 0.0
        %2687 = vmatprep.subr.mxu0 0.0
        %2688 = vmatpush1.msra.mxu0 0.0
        %2689 = vmatprep.subr.mxu0 0.0
        %2690 = vmatpush1.msra.mxu0 0.0
        %2691 = vmatprep.subr.mxu0 0.0
        %2692 = vmatpush1.msra.mxu0 0.0
        %2693 = vmatprep.subr.mxu0 0.0
        %2694 = vmatpush1.msra.mxu0 0.0
        %2695 = vmatprep.subr.mxu0 0.0
        %2696 = vmatpush1.msra.mxu0 0.0
        %2697 = vmatprep.subr.mxu0 0.0
        %2698 = vmatpush1.msra.mxu0 0.0
        %2699 = vmatprep.subr.mxu0 0.0
        %2700 = vmatpush1.msra.mxu0 0.0
        %2701 = vmatprep.subr.mxu0 0.0
        %2702 = vmatpush1.msra.mxu0 0.0
        %2703 = vmatprep.subr.mxu0 0.0
        %2704 = vmatpush1.msra.mxu0 0.0
        %2705 = vmatprep.subr.mxu0 0.0
        %2706 = vmatpush1.msra.mxu0 0.0
        %2707 = vmatprep.subr.mxu0 0.0
        %2708 = vmatpush1.msra.mxu0 0.0
        %2709 = vmatprep.subr.mxu0 0.0
        %2710 = vmatpush1.msra.mxu0 0.0
        %2711 = vmatprep.subr.mxu0 0.0
        %2712 = vmatpush1.msra.mxu0 0.0
        %2713 = vmatprep.subr.mxu0 0.0
        %2714 = vmatpush1.msra.mxu0 0.0
        %2715 = vmatprep.mubr.f32.mxu0 0.0
        %2716 = vmatmul.mubr.f32.gmra.mrb[0].mxu0 %v2649
        %v2717 = vpop.f32.mrb[0].mxu0
        %v2718 = vadd.f32 0.0, %v2717
        %v2719 = vpop.f32.mrb[0].mxu0
        %2720 = vdwg.mxu0
        %v2722 = vsel %vm1615, %v2645, 0
        %2724 = vmatprep.subr.mxu0 0.0
        %2725 = vmatpush1.msra.mxu0 %v2467
        %2726 = vmatprep.subr.mxu0 0.0
        %2727 = vmatpush1.msra.mxu0 0.0
        %2728 = vmatprep.subr.mxu0 0.0
        %2729 = vmatpush1.msra.mxu0 0.0
        %2730 = vmatprep.subr.mxu0 0.0
        %2731 = vmatpush1.msra.mxu0 0.0
        %2732 = vmatprep.subr.mxu0 0.0
        %2733 = vmatpush1.msra.mxu0 0.0
        %2734 = vmatprep.subr.mxu0 0.0
        %2735 = vmatpush1.msra.mxu0 0.0
        %2736 = vmatprep.subr.mxu0 0.0
        %2737 = vmatpush1.msra.mxu0 0.0
        %2738 = vmatprep.subr.mxu0 0.0
        %2739 = vmatpush1.msra.mxu0 0.0
        %2740 = vmatprep.subr.mxu0 0.0
        %2741 = vmatpush1.msra.mxu0 0.0
        %2742 = vmatprep.subr.mxu0 0.0
        %2743 = vmatpush1.msra.mxu0 0.0
        %2744 = vmatprep.subr.mxu0 0.0
        %2745 = vmatpush1.msra.mxu0 0.0
        %2746 = vmatprep.subr.mxu0 0.0
        %2747 = vmatpush1.msra.mxu0 0.0
        %2748 = vmatprep.subr.mxu0 0.0
        %2749 = vmatpush1.msra.mxu0 0.0
        %2750 = vmatprep.subr.mxu0 0.0
        %2751 = vmatpush1.msra.mxu0 0.0
        %2752 = vmatprep.subr.mxu0 0.0
        %2753 = vmatpush1.msra.mxu0 0.0
        %2754 = vmatprep.subr.mxu0 0.0
        %2755 = vmatpush1.msra.mxu0 0.0
        %2756 = vmatprep.subr.mxu0 0.0
        %2757 = vmatpush1.msra.mxu0 0.0
        %2758 = vmatprep.subr.mxu0 0.0
        %2759 = vmatpush1.msra.mxu0 0.0
        %2760 = vmatprep.subr.mxu0 0.0
        %2761 = vmatpush1.msra.mxu0 0.0
        %2762 = vmatprep.subr.mxu0 0.0
        %2763 = vmatpush1.msra.mxu0 0.0
        %2764 = vmatprep.subr.mxu0 0.0
        %2765 = vmatpush1.msra.mxu0 0.0
        %2766 = vmatprep.subr.mxu0 0.0
        %2767 = vmatpush1.msra.mxu0 0.0
        %2768 = vmatprep.subr.mxu0 0.0
        %2769 = vmatpush1.msra.mxu0 0.0
        %2770 = vmatprep.subr.mxu0 0.0
        %2771 = vmatpush1.msra.mxu0 0.0
        %2772 = vmatprep.subr.mxu0 0.0
        %2773 = vmatpush1.msra.mxu0 0.0
        %2774 = vmatprep.subr.mxu0 0.0
        %2775 = vmatpush1.msra.mxu0 0.0
        %2776 = vmatprep.subr.mxu0 0.0
        %2777 = vmatpush1.msra.mxu0 0.0
        %2778 = vmatprep.subr.mxu0 0.0
        %2779 = vmatpush1.msra.mxu0 0.0
        %2780 = vmatprep.subr.mxu0 0.0
        %2781 = vmatpush1.msra.mxu0 0.0
        %2782 = vmatprep.subr.mxu0 0.0
        %2783 = vmatpush1.msra.mxu0 0.0
        %2784 = vmatprep.subr.mxu0 0.0
        %2785 = vmatpush1.msra.mxu0 0.0
        %2786 = vmatprep.subr.mxu0 0.0
        %2787 = vmatpush1.msra.mxu0 0.0
        %2788 = vmatprep.mubr.f32.mxu0 0.0
        %2789 = vmatmul.mubr.f32.gmra.mrb[0].mxu0 %v2722
        %v2790 = vpop.f32.mrb[0].mxu0
        %v2791 = vadd.f32 0.0, %v2790
        %v2792 = vpop.f32.mrb[0].mxu0
        %2793 = vdwg.mxu0
        %v2795 = vsel %vm1460, %v2718, 0
        %2797 = vmatprep.subr.mxu0 0.0
        %2798 = vmatpush1.msra.mxu0 %v2001
        %2799 = vmatprep.subr.mxu0 0.0
        %2800 = vmatpush1.msra.mxu0 %v2002
        %2801 = vmatprep.subr.mxu0 0.0
        %2802 = vmatpush1.msra.mxu0 0.0
        %2803 = vmatprep.subr.mxu0 0.0
        %2804 = vmatpush1.msra.mxu0 0.0
        %2805 = vmatprep.subr.mxu0 0.0
        %2806 = vmatpush1.msra.mxu0 0.0
        %2807 = vmatprep.subr.mxu0 0.0
        %2808 = vmatpush1.msra.mxu0 0.0
        %2809 = vmatprep.subr.mxu0 0.0
        %2810 = vmatpush1.msra.mxu0 0.0
        %2811 = vmatprep.subr.mxu0 0.0
        %2812 = vmatpush1.msra.mxu0 0.0
        %2813 = vmatprep.subr.mxu0 0.0
        %2814 = vmatpush1.msra.mxu0 0.0
        %2815 = vmatprep.subr.mxu0 0.0
        %2816 = vmatpush1.msra.mxu0 0.0
        %2817 = vmatprep.subr.mxu0 0.0
        %2818 = vmatpush1.msra.mxu0 0.0
        %2819 = vmatprep.subr.mxu0 0.0
        %2820 = vmatpush1.msra.mxu0 0.0
        %2821 = vmatprep.subr.mxu0 0.0
        %2822 = vmatpush1.msra.mxu0 0.0
        %2823 = vmatprep.subr.mxu0 0.0
        %2824 = vmatpush1.msra.mxu0 0.0
        %2825 = vmatprep.subr.mxu0 0.0
        %2826 = vmatpush1.msra.mxu0 0.0
        %2827 = vmatprep.subr.mxu0 0.0
        %2828 = vmatpush1.msra.mxu0 0.0
        %2829 = vmatprep.subr.mxu0 0.0
        %2830 = vmatpush1.msra.mxu0 0.0
        %2831 = vmatprep.subr.mxu0 0.0
        %2832 = vmatpush1.msra.mxu0 0.0
        %2833 = vmatprep.subr.mxu0 0.0
        %2834 = vmatpush1.msra.mxu0 0.0
        %2835 = vmatprep.subr.mxu0 0.0
        %2836 = vmatpush1.msra.mxu0 0.0
        %2837 = vmatprep.subr.mxu0 0.0
        %2838 = vmatpush1.msra.mxu0 0.0
        %2839 = vmatprep.subr.mxu0 0.0
        %2840 = vmatpush1.msra.mxu0 0.0
        %2841 = vmatprep.subr.mxu0 0.0
        %2842 = vmatpush1.msra.mxu0 0.0
        %2843 = vmatprep.subr.mxu0 0.0
        %2844 = vmatpush1.msra.mxu0 0.0
        %2845 = vmatprep.subr.mxu0 0.0
        %2846 = vmatpush1.msra.mxu0 0.0
        %2847 = vmatprep.subr.mxu0 0.0
        %2848 = vmatpush1.msra.mxu0 0.0
        %2849 = vmatprep.subr.mxu0 0.0
        %2850 = vmatpush1.msra.mxu0 0.0
        %2851 = vmatprep.subr.mxu0 0.0
        %2852 = vmatpush1.msra.mxu0 0.0
        %2853 = vmatprep.subr.mxu0 0.0
        %2854 = vmatpush1.msra.mxu0 0.0
        %2855 = vmatprep.subr.mxu0 0.0
        %2856 = vmatpush1.msra.mxu0 0.0
        %2857 = vmatprep.subr.mxu0 0.0
        %2858 = vmatpush1.msra.mxu0 0.0
        %2859 = vmatprep.subr.mxu0 0.0
        %2860 = vmatpush1.msra.mxu0 0.0
        %2861 = vmatprep.mubr.f32.mxu0 0.0
        %2862 = vmatmul.mubr.f32.gmra.mrb[0].mxu0 %v2795
        %v2863 = vpop.f32.mrb[0].mxu0
        %v2864 = vadd.f32 0.0, %v2863
        %v2865 = vpop.f32.mrb[0].mxu0
        %2866 = vdwg.mxu0
        %v2868 = vsel %vm1460, %v2791, 0
        %2870 = vmatprep.subr.mxu0 0.0
        %2871 = vmatpush1.msra.mxu0 %v2003
        %2872 = vmatprep.subr.mxu0 0.0
        %2873 = vmatpush1.msra.mxu0 %v2004
        %2874 = vmatprep.subr.mxu0 0.0
        %2875 = vmatpush1.msra.mxu0 0.0
        %2876 = vmatprep.subr.mxu0 0.0
        %2877 = vmatpush1.msra.mxu0 0.0
        %2878 = vmatprep.subr.mxu0 0.0
        %2879 = vmatpush1.msra.mxu0 0.0
        %2880 = vmatprep.subr.mxu0 0.0
        %2881 = vmatpush1.msra.mxu0 0.0
        %2882 = vmatprep.subr.mxu0 0.0
        %2883 = vmatpush1.msra.mxu0 0.0
        %2884 = vmatprep.subr.mxu0 0.0
        %2885 = vmatpush1.msra.mxu0 0.0
        %2886 = vmatprep.subr.mxu0 0.0
        %2887 = vmatpush1.msra.mxu0 0.0
        %2888 = vmatprep.subr.mxu0 0.0
        %2889 = vmatpush1.msra.mxu0 0.0
        %2890 = vmatprep.subr.mxu0 0.0
        %2891 = vmatpush1.msra.mxu0 0.0
        %2892 = vmatprep.subr.mxu0 0.0
        %2893 = vmatpush1.msra.mxu0 0.0
        %2894 = vmatprep.subr.mxu0 0.0
        %2895 = vmatpush1.msra.mxu0 0.0
        %2896 = vmatprep.subr.mxu0 0.0
        %2897 = vmatpush1.msra.mxu0 0.0
        %2898 = vmatprep.subr.mxu0 0.0
        %2899 = vmatpush1.msra.mxu0 0.0
        %2900 = vmatprep.subr.mxu0 0.0
        %2901 = vmatpush1.msra.mxu0 0.0
        %2902 = vmatprep.subr.mxu0 0.0
        %2903 = vmatpush1.msra.mxu0 0.0
        %2904 = vmatprep.subr.mxu0 0.0
        %2905 = vmatpush1.msra.mxu0 0.0
        %2906 = vmatprep.subr.mxu0 0.0
        %2907 = vmatpush1.msra.mxu0 0.0
        %2908 = vmatprep.subr.mxu0 0.0
        %2909 = vmatpush1.msra.mxu0 0.0
        %2910 = vmatprep.subr.mxu0 0.0
        %2911 = vmatpush1.msra.mxu0 0.0
        %2912 = vmatprep.subr.mxu0 0.0
        %2913 = vmatpush1.msra.mxu0 0.0
        %2914 = vmatprep.subr.mxu0 0.0
        %2915 = vmatpush1.msra.mxu0 0.0
        %2916 = vmatprep.subr.mxu0 0.0
        %2917 = vmatpush1.msra.mxu0 0.0
        %2918 = vmatprep.subr.mxu0 0.0
        %2919 = vmatpush1.msra.mxu0 0.0
        %2920 = vmatprep.subr.mxu0 0.0
        %2921 = vmatpush1.msra.mxu0 0.0
        %2922 = vmatprep.subr.mxu0 0.0
        %2923 = vmatpush1.msra.mxu0 0.0
        %2924 = vmatprep.subr.mxu0 0.0
        %2925 = vmatpush1.msra.mxu0 0.0
        %2926 = vmatprep.subr.mxu0 0.0
        %2927 = vmatpush1.msra.mxu0 0.0
        %2928 = vmatprep.subr.mxu0 0.0
        %2929 = vmatpush1.msra.mxu0 0.0
        %2930 = vmatprep.subr.mxu0 0.0
        %2931 = vmatpush1.msra.mxu0 0.0
        %2932 = vmatprep.subr.mxu0 0.0
        %2933 = vmatpush1.msra.mxu0 0.0
        %2934 = vmatprep.mubr.f32.mxu0 0.0
        %2935 = vmatmul.mubr.f32.gmra.mrb[0].mxu0 %v2868
        %v2936 = vpop.f32.mrb[0].mxu0
        %v2937 = vadd.f32 0.0, %v2936
        %v2938 = vpop.f32.mrb[0].mxu0
        %2939 = vdwg.mxu0
        %v2940 = vsel %vm1012, %v2864, 0.0
        %v2941 = vsel %vm1012, %v2937, 0.0
        %v2942 = vadd.f32 %v2940, %v2941
        %v2944 = vlaneseq
        %v2945 = vshrl.u32 %v2944, 7
        %v2946 = vsub.s32 0, %v2945
        %v2947 = vrot.slane %v2005, %v2946
        %v2949 = vadd.f32 %v2942, %v2947
        %v2950 = vadd.f32 %v2949, %v1970
        %v2951 = vsel %vm1012, %v2950, 0.0
        %2952 = vadd.xlane.f32.xlu0 %v2951
        %v2953 = vpop.xlane.xlu0 %2952
        %v2954 = vmul.f32 %v2953, %v1946
        %v2955 = vsub.f32 %v2950, %v2954
        %v2956 = vmul.f32 %v2955, %v2955
        %v2957 = vsel %vm1012, %v2956, 0.0
        %2958 = vadd.xlane.f32.xlu0 %v2957
        %v2959 = vpop.xlane.xlu0 %2958
        %v2960 = vmul.f32 %v2959, %v1946
        %v2961 = vadd.f32 %v2960, 1e-05
        %v2962 = vrsqrt.pop %v2961
        %v2963 = vmul.f32 %v2955, %v2962
        %v2965 = vlaneseq
        %v2966 = vshrl.u32 %v2965, 7
        %v2967 = vsub.s32 0, %v2966
        %v2968 = vrot.slane %v2006, %v2967
        %v2970 = vmul.f32 %v2963, %v2968
        %v2972 = vlaneseq
        %v2973 = vshrl.u32 %v2972, 7
        %v2974 = vsub.s32 0, %v2973
        %v2975 = vrot.slane %v2007, %v2974
        %v2977 = vadd.f32 %v2970, %v2975
        %v2978 = vld [vmem:[%s45] sm:$0xff]
        %v2979 = vld [vmem:[%s45 + $0x8] sm:$0xff]
        %v2980 = vld [vmem:[%s45 + $0x10] sm:$0xff]
        %v2981 = vld [vmem:[%s45 + $0x18] sm:$0xff]
        %v2982 = vld [vmem:[%s47] sm:$0x1]
        %v2984 = vlaneseq
        %v2985 = vshrl.u32 %v2984, 7
        %v2986 = vsub.s32 0, %v2985
        %v2987 = vrot.slane %v2982, %v2986
        %v2990 = vsel %vm1012, %v2977, 0
        %2992 = vmatprep.subr.mxu0 0.0
        %2993 = vmatpush1.msra.mxu0 %v2978
        %2994 = vmatprep.subr.mxu0 0.0
        %2995 = vmatpush1.msra.mxu0 %v2979
        %2996 = vmatprep.subr.mxu0 0.0
        %2997 = vmatpush1.msra.mxu0 %v2980
        %2998 = vmatprep.subr.mxu0 0.0
        %2999 = vmatpush1.msra.mxu0 %v2981
        %3000 = vmatprep.subr.mxu0 0.0
        %3001 = vmatpush1.msra.mxu0 0.0
        %3002 = vmatprep.subr.mxu0 0.0
        %3003 = vmatpush1.msra.mxu0 0.0
        %3004 = vmatprep.subr.mxu0 0.0
        %3005 = vmatpush1.msra.mxu0 0.0
        %3006 = vmatprep.subr.mxu0 0.0
        %3007 = vmatpush1.msra.mxu0 0.0
        %3008 = vmatprep.subr.mxu0 0.0
        %3009 = vmatpush1.msra.mxu0 0.0
        %3010 = vmatprep.subr.mxu0 0.0
        %3011 = vmatpush1.msra.mxu0 0.0
        %3012 = vmatprep.subr.mxu0 0.0
        %3013 = vmatpush1.msra.mxu0 0.0
        %3014 = vmatprep.subr.mxu0 0.0
        %3015 = vmatpush1.msra.mxu0 0.0
        %3016 = vmatprep.subr.mxu0 0.0
        %3017 = vmatpush1.msra.mxu0 0.0
        %3018 = vmatprep.subr.mxu0 0.0
        %3019 = vmatpush1.msra.mxu0 0.0
        %3020 = vmatprep.subr.mxu0 0.0
        %3021 = vmatpush1.msra.mxu0 0.0
        %3022 = vmatprep.subr.mxu0 0.0
        %3023 = vmatpush1.msra.mxu0 0.0
        %3024 = vmatprep.subr.mxu0 0.0
        %3025 = vmatpush1.msra.mxu0 0.0
        %3026 = vmatprep.subr.mxu0 0.0
        %3027 = vmatpush1.msra.mxu0 0.0
        %3028 = vmatprep.subr.mxu0 0.0
        %3029 = vmatpush1.msra.mxu0 0.0
        %3030 = vmatprep.subr.mxu0 0.0
        %3031 = vmatpush1.msra.mxu0 0.0
        %3032 = vmatprep.subr.mxu0 0.0
        %3033 = vmatpush1.msra.mxu0 0.0
        %3034 = vmatprep.subr.mxu0 0.0
        %3035 = vmatpush1.msra.mxu0 0.0
        %3036 = vmatprep.subr.mxu0 0.0
        %3037 = vmatpush1.msra.mxu0 0.0
        %3038 = vmatprep.subr.mxu0 0.0
        %3039 = vmatpush1.msra.mxu0 0.0
        %3040 = vmatprep.subr.mxu0 0.0
        %3041 = vmatpush1.msra.mxu0 0.0
        %3042 = vmatprep.subr.mxu0 0.0
        %3043 = vmatpush1.msra.mxu0 0.0
        %3044 = vmatprep.subr.mxu0 0.0
        %3045 = vmatpush1.msra.mxu0 0.0
        %3046 = vmatprep.subr.mxu0 0.0
        %3047 = vmatpush1.msra.mxu0 0.0
        %3048 = vmatprep.subr.mxu0 0.0
        %3049 = vmatpush1.msra.mxu0 0.0
        %3050 = vmatprep.subr.mxu0 0.0
        %3051 = vmatpush1.msra.mxu0 0.0
        %3052 = vmatprep.subr.mxu0 0.0
        %3053 = vmatpush1.msra.mxu0 0.0
        %3054 = vmatprep.subr.mxu0 0.0
        %3055 = vmatpush1.msra.mxu0 0.0
        %3056 = vmatprep.mubr.f32.mxu0 0.0
        %3057 = vmatmul.mubr.f32.gmra.mrb[0].mxu0 %v2990
        %v3058 = vpop.f32.mrb[0].mxu0
        %v3059 = vadd.f32 %v2987, %v3058
        %v3060 = vpop.f32.mrb[0].mxu0
        %3061 = vdwg.mxu0
        %v3062 = vmax.f32 %v3059, 0.0
        %v3063 = vld [vmem:[%s49] sm:$0xff]
        %v3064 = vld [vmem:[%s49 + $0x8] sm:$0xff]
        %v3065 = vld [vmem:[%s49 + $0x10] sm:$0xff]
        %v3066 = vld [vmem:[%s49 + $0x18] sm:$0xff]
        %v3067 = vld [vmem:[%s49 + $0x20] sm:$0xff]
        %v3068 = vld [vmem:[%s49 + $0x28] sm:$0xff]
        %v3069 = vld [vmem:[%s49 + $0x30] sm:$0xff]
        %v3070 = vld [vmem:[%s49 + $0x38] sm:$0xff]
        %v3071 = vld [vmem:[%s51] sm:$0x1]
        %v3073 = vlaneseq
        %v3074 = vshrl.u32 %v3073, 7
        %v3075 = vsub.s32 0, %v3074
        %v3076 = vrot.slane %v3071, %v3075
        %vm3078 = vcmask 523264
        %v3080 = vsel %vm3078, %v3062, 0
        %3082 = vmatprep.subr.mxu0 0.0
        %3083 = vmatpush1.msra.mxu0 %v3063
        %3084 = vmatprep.subr.mxu0 0.0
        %3085 = vmatpush1.msra.mxu0 %v3064
        %3086 = vmatprep.subr.mxu0 0.0
        %3087 = vmatpush1.msra.mxu0 %v3065
        %3088 = vmatprep.subr.mxu0 0.0
        %3089 = vmatpush1.msra.mxu0 %v3066
        %3090 = vmatprep.subr.mxu0 0.0
        %3091 = vmatpush1.msra.mxu0 %v3067
        %3092 = vmatprep.subr.mxu0 0.0
        %3093 = vmatpush1.msra.mxu0 %v3068
        %3094 = vmatprep.subr.mxu0 0.0
        %3095 = vmatpush1.msra.mxu0 %v3069
        %3096 = vmatprep.subr.mxu0 0.0
        %3097 = vmatpush1.msra.mxu0 %v3070
        %3098 = vmatprep.subr.mxu0 0.0
        %3099 = vmatpush1.msra.mxu0 0.0
        %3100 = vmatprep.subr.mxu0 0.0
        %3101 = vmatpush1.msra.mxu0 0.0
        %3102 = vmatprep.subr.mxu0 0.0
        %3103 = vmatpush1.msra.mxu0 0.0
        %3104 = vmatprep.subr.mxu0 0.0
        %3105 = vmatpush1.msra.mxu0 0.0
        %3106 = vmatprep.subr.mxu0 0.0
        %3107 = vmatpush1.msra.mxu0 0.0
        %3108 = vmatprep.subr.mxu0 0.0
        %3109 = vmatpush1.msra.mxu0 0.0
        %3110 = vmatprep.subr.mxu0 0.0
        %3111 = vmatpush1.msra.mxu0 0.0
        %3112 = vmatprep.subr.mxu0 0.0
        %3113 = vmatpush1.msra.mxu0 0.0
        %3114 = vmatprep.subr.mxu0 0.0
        %3115 = vmatpush1.msra.mxu0 0.0
        %3116 = vmatprep.subr.mxu0 0.0
        %3117 = vmatpush1.msra.mxu0 0.0
        %3118 = vmatprep.subr.mxu0 0.0
        %3119 = vmatpush1.msra.mxu0 0.0
        %3120 = vmatprep.subr.mxu0 0.0
        %3121 = vmatpush1.msra.mxu0 0.0
        %3122 = vmatprep.subr.mxu0 0.0
        %3123 = vmatpush1.msra.mxu0 0.0
        %3124 = vmatprep.subr.mxu0 0.0
        %3125 = vmatpush1.msra.mxu0 0.0
        %3126 = vmatprep.subr.mxu0 0.0
        %3127 = vmatpush1.msra.mxu0 0.0
        %3128 = vmatprep.subr.mxu0 0.0
        %3129 = vmatpush1.msra.mxu0 0.0
        %3130 = vmatprep.subr.mxu0 0.0
        %3131 = vmatpush1.msra.mxu0 0.0
        %3132 = vmatprep.subr.mxu0 0.0
        %3133 = vmatpush1.msra.mxu0 0.0
        %3134 = vmatprep.subr.mxu0 0.0
        %3135 = vmatpush1.msra.mxu0 0.0
        %3136 = vmatprep.subr.mxu0 0.0
        %3137 = vmatpush1.msra.mxu0 0.0
        %3138 = vmatprep.subr.mxu0 0.0
        %3139 = vmatpush1.msra.mxu0 0.0
        %3140 = vmatprep.subr.mxu0 0.0
        %3141 = vmatpush1.msra.mxu0 0.0
        %3142 = vmatprep.subr.mxu0 0.0
        %3143 = vmatpush1.msra.mxu0 0.0
        %3144 = vmatprep.subr.mxu0 0.0
        %3145 = vmatpush1.msra.mxu0 0.0
        %3146 = vmatprep.mubr.f32.mxu0 0.0
        %3147 = vmatmul.mubr.f32.gmra.mrb[0].mxu0 %v3080
        %v3148 = vpop.f32.mrb[0].mxu0
        %v3149 = vadd.f32 %v3076, %v3148
        %v3150 = vpop.f32.mrb[0].mxu0
        %3151 = vdwg.mxu0
        %v3152 = vadd.f32 %v3149, %v2977
        %v3153 = vld [vmem:[%s53] sm:$0x1]
        %v3154 = vld [vmem:[%s55] sm:$0x1]
        %v3155 = vsel %vm1012, %v3152, 0.0
        %3156 = vadd.xlane.f32.xlu0 %v3155
        %v3157 = vpop.xlane.xlu0 %3156
        %v3158 = vmul.f32 %v3157, %v1946
        %v3159 = vsub.f32 %v3152, %v3158
        %v3160 = vmul.f32 %v3159, %v3159
        %v3161 = vsel %vm1012, %v3160, 0.0
        %3162 = vadd.xlane.f32.xlu0 %v3161
        %v3163 = vpop.xlane.xlu0 %3162
        %v3164 = vmul.f32 %v3163, %v1946
        %v3165 = vadd.f32 %v3164, 1e-05
        %v3166 = vrsqrt.pop %v3165
        %v3167 = vmul.f32 %v3159, %v3166
        %v3169 = vlaneseq
        %v3170 = vshrl.u32 %v3169, 7
        %v3171 = vsub.s32 0, %v3170
        %v3172 = vrot.slane %v3153, %v3171
        %v3174 = vmul.f32 %v3167, %v3172
        %v3176 = vlaneseq
        %v3177 = vshrl.u32 %v3176, 7
        %v3178 = vsub.s32 0, %v3177
        %v3179 = vrot.slane %v3154, %v3178
        %v3181 = vadd.f32 %v3174, %v3179
        %3182 = vst.msk [vmem:[%s938] sm:$0xff] %vm1012, %v3181
        %s3183 = sand.u32 %s685, 1
        %s3184 = scalar_lea.sflag [#allocation3], %s3183
        %s3185 = sand.u32 %s685, 1
        %s3186 = smul.addr %s3185, 8
        %s3187 = scalar_lea.vmem [#allocation2], %s3186
        %s3188 = sand.u32 %s79, 1
        %s3189 = scalar_lea.sflag [#allocation5], %s3188
        %s3190 = sand.u32 %s711, 1
        %s3191 = smul.addr %s3190, 16
        %s3192 = scalar_lea.vmem [#allocation4], %s3191
        %s3193 = sand.u32 %s79, 1
        %s3194 = scalar_lea.sflag [#allocation5], %s3193
        %s3195 = sand.u32 %s737, 1
        %s3196 = smul.addr %s3195, 16
        %s3197 = scalar_lea.vmem [#allocation6], %s3196
        // Predicated region
        $region133: #{tpu_custom_call.1} parent=131 // pred_check
          %p3198 = pneg %p695
        $region134: #{tpu_custom_call.1} parent=131 // pred_check_branch
          %3200 = sbr.rel (%p3198) target = $region136
        $region135: #{tpu_custom_call.1} parent=131 // pred_region
          %s3202 = ssub.s32 128, 128
          %3203 = vsyncadd %s3184, %s3202
          %s3204 = smul.addr %s79, 128
          %s3205 = scalar_lea.hbm %s57, %s3204
          %s3207 = sshll.u32 %s3187, 4
          %s3208 = int_to_ptr.vmem [resolvable:$true] %s3207
          %3210 = dma.vmem_to_hbm [thread:$0]  %s3208, 128, %s3205, %s3184
        $region136: #{tpu_custom_call.1} parent=131 // pred_fallthru
          _
        // Predicated region
        $region137: #{tpu_custom_call.1} parent=131 // pred_check
          %p3211 = pneg %p721
        $region138: #{tpu_custom_call.1} parent=131 // pred_check_branch
          %3213 = sbr.rel (%p3211) target = $region140
        $region139: #{tpu_custom_call.1} parent=131 // pred_region
          %s3215 = ssub.s32 256, 256
          %3216 = vsyncadd %s3189, %s3215
          %s3217 = smul.addr %s79, 128
          %s3218 = scalar_lea.hbm %s59, %s3217
          %s3219 = sshll.u32 %s3192, 4
          %s3220 = int_to_ptr.vmem [resolvable:$true] %s3219
          %3225 = dma.vmem_to_hbm [thread:$0]  %s3220, 256, %s3218, %s3189, 128, 256, 8
        $region140: #{tpu_custom_call.1} parent=131 // pred_fallthru
          _
        // Predicated region
        $region141: #{tpu_custom_call.1} parent=131 // pred_check
          %p3226 = pneg %p747
        $region142: #{tpu_custom_call.1} parent=131 // pred_check_branch
          %3228 = sbr.rel (%p3226) target = $region144
        $region143: #{tpu_custom_call.1} parent=131 // pred_region
          %s3230 = ssub.s32 256, 256
          %3231 = vsyncadd %s3194, %s3230
          %s3232 = smul.addr %s79, 128
          %s3233 = scalar_lea.hbm %s61, %s3232
          %s3234 = sshll.u32 %s3197, 4
          %s3235 = int_to_ptr.vmem [resolvable:$true] %s3234
          %3240 = dma.vmem_to_hbm [thread:$0]  %s3235, 256, %s3233, %s3194, 128, 256, 8
        $region144: #{tpu_custom_call.1} parent=131 // pred_fallthru
          _
      $region132: #{tpu_custom_call.1} parent=5 // pred_fallthru
        _
      %p3241 = scmp.le.s32.totalorder 2, %s74
      // Predicated region
      $region145: #{tpu_custom_call.1} parent=5 // pred_check
        %p3242 = pneg %p3241
      $region146: #{tpu_custom_call.1} parent=5 // pred_check_branch
        %3244 = sbr.rel (%p3242) target = $region148
      $region147: #{tpu_custom_call.1} parent=5 // pred_region
        %s3245 = ssub.s32 %s74, 2
        // Predicated region
        $region149: #{tpu_custom_call.1} parent=147 // pred_check
          %p3246 = pneg %p701
        $region150: #{tpu_custom_call.1} parent=147 // pred_check_branch
          %3248 = sbr.rel (%p3246) target = $region152
        $region151: #{tpu_custom_call.1} parent=147 // pred_region
          %s3249 = sand.u32 %s686, 1
          %s3250 = scalar_lea.sflag [#allocation3], %s3249
          %s3251 = sand.u32 %s686, 1
          %s3252 = smul.addr %s3251, 8
          %s3253 = scalar_lea.vmem [#allocation2], %s3252
          %3254 = dma.done %s3250, 128
        $region152: #{tpu_custom_call.1} parent=147 // pred_fallthru
          _
        // Predicated region
        $region153: #{tpu_custom_call.1} parent=147 // pred_check
          %p3255 = pneg %p727
        $region154: #{tpu_custom_call.1} parent=147 // pred_check_branch
          %3257 = sbr.rel (%p3255) target = $region156
        $region155: #{tpu_custom_call.1} parent=147 // pred_region
          %s3258 = sand.u32 %s80, 1
          %s3259 = scalar_lea.sflag [#allocation5], %s3258
          %s3260 = sand.u32 %s712, 1
          %s3261 = smul.addr %s3260, 16
          %s3262 = scalar_lea.vmem [#allocation4], %s3261
          %3263 = dma.done %s3259, 256
        $region156: #{tpu_custom_call.1} parent=147 // pred_fallthru
          _
        // Predicated region
        $region157: #{tpu_custom_call.1} parent=147 // pred_check
          %p3264 = pneg %p753
        $region158: #{tpu_custom_call.1} parent=147 // pred_check_branch
          %3266 = sbr.rel (%p3264) target = $region160
        $region159: #{tpu_custom_call.1} parent=147 // pred_region
          %s3267 = sand.u32 %s80, 1
          %s3268 = scalar_lea.sflag [#allocation5], %s3267
          %s3269 = sand.u32 %s738, 1
          %s3270 = smul.addr %s3269, 16
          %s3271 = scalar_lea.vmem [#allocation6], %s3270
          %3272 = dma.done %s3268, 256
        $region160: #{tpu_custom_call.1} parent=147 // pred_fallthru
          _
      $region148: #{tpu_custom_call.1} parent=5 // pred_fallthru
        _
    $region6: #{tpu_custom_call.1} parent=1 // loop_footer
      %s78 = sadd.s32 1, %s74
    $region7: #{tpu_custom_call.1} parent=1 // loop_footer_branch
      %73 = sbr.rel target = $region3
    $region8: #{tpu_custom_call.1} parent=1 // loop_exit
      _
    %3273 = vsyncpa [#allocation3], 1
    %s3274 = scalar_lea.sflag [#allocation3], 1
    %3275 = vsyncpa %s3274, 1
    %3276 = vsyncpa [#allocation5], 1
    %s3277 = scalar_lea.sflag [#allocation5], 1
    %3278 = vsyncpa %s3277, 1

</llo_original>
